<compile_context>
chip_gen: v5e
topology: v5e:2x2
jax: 0.10.0
libtpu: 0.0.40
codegen_flags: <defaults>
</compile_context>

<pallas_src>
import functools

import jax
import jax.numpy as jnp
from jax.experimental import pallas as pl
from jax.experimental.pallas import tpu as pltpu


# ---------------------------------------------------------------------------
# Fused forward kernel: one batch tile per grid step, everything in VMEM.
# ---------------------------------------------------------------------------
def fused_simplenet_kernel(xp_ref, w1_ref, b1_ref, w2_ref, b2_ref,
                           fc1w_ref, fc1b_ref, fc2w_ref, fc2b_ref,
                           o_ref, y1_s, xp2_s, y2_s):
    bt = xp_ref.shape[0]
    H = xp_ref.shape[1] - 2
    W = xp_ref.shape[2] - 2
    Cin = xp_ref.shape[3]
    C1 = w1_ref.shape[2]
    C2 = w2_ref.shape[2]
    H2, W2 = H // 2, W // 2
    H4, W4 = H2 // 2, W2 // 2
    fh, fw = H4 // 4, W4 // 4          # adaptive-avg-pool window (divisible case)

    # ----------------- conv1 (3x3, padding=1) + bias + ReLU ------------------
    # batch folded into the matmul M dimension: M1 = bt*H*W, K = Cin per tap.
    M1 = bt * H * W
    acc1 = jnp.zeros((M1, C1), jnp.float32)
    for kh in range(3):
        for kw in range(3):
            patch = xp_ref[:, kh:kh + H, kw:kw + W, :].reshape(M1, Cin)
            acc1 = acc1 + jnp.dot(patch, w1_ref[kh * 3 + kw],
                                  preferred_element_type=jnp.float32)
    y1 = jnp.maximum(acc1 + b1_ref[...], 0.0)
    y1_s[...] = y1.reshape(bt, H, W, C1)

    # ------- 2x2 max-pool #1, written into the zero-padded conv2 input -------
    p00 = y1_s[:, pl.ds(0, H2, stride=2), pl.ds(0, W2, stride=2), :]
    p01 = y1_s[:, pl.ds(0, H2, stride=2), pl.ds(1, W2, stride=2), :]
    p10 = y1_s[:, pl.ds(1, H2, stride=2), pl.ds(0, W2, stride=2), :]
    p11 = y1_s[:, pl.ds(1, H2, stride=2), pl.ds(1, W2, stride=2), :]
    pooled1 = jnp.maximum(jnp.maximum(p00, p01), jnp.maximum(p10, p11))
    xp2_s[...] = jnp.zeros_like(xp2_s)               # zero ring == padding=1
    xp2_s[:, 1:H2 + 1, 1:W2 + 1, :] = pooled1

    # ----------------- conv2 (3x3, padding=1) + bias + ReLU ------------------
    M2 = bt * H2 * W2
    acc2 = jnp.zeros((M2, C2), jnp.float32)
    for kh in range(3):
        for kw in range(3):
            patch = xp2_s[:, kh:kh + H2, kw:kw + W2, :].reshape(M2, C1)
            acc2 = acc2 + jnp.dot(patch, w2_ref[kh * 3 + kw],
                                  preferred_element_type=jnp.float32)
    y2 = jnp.maximum(acc2 + b2_ref[...], 0.0)
    y2_s[...] = y2.reshape(bt, H2, W2, C2)

    # --- 2x2 max-pool #2 + adaptive avg-pool(4x4) + NCHW flatten + fc1, fused ---
    # fc1w_ref is (16, C2, Dh); slice s = h4*4 + w4 already encodes PyTorch's
    # NCHW flatten (feature index c*16 + s), so NHWC features are consumed directly.
    Dh = fc1w_ref.shape[2]
    inv = 1.0 / float(fh * fw)
    acc3 = jnp.zeros((bt, Dh), jnp.float32)
    for s in range(16):
        oh, ow = s // 4, s % 4
        cell = jnp.zeros((bt, C2), jnp.float32)
        for a in range(fh):
            for b in range(fw):
                i2 = 2 * (oh * fh + a)
                j2 = 2 * (ow * fw + b)
                m = jnp.maximum(
                    jnp.maximum(y2_s[:, i2, j2, :], y2_s[:, i2, j2 + 1, :]),
                    jnp.maximum(y2_s[:, i2 + 1, j2, :], y2_s[:, i2 + 1, j2 + 1, :]))
                cell = cell + m
        feat = cell * inv
        acc3 = acc3 + jnp.dot(feat, fc1w_ref[s], preferred_element_type=jnp.float32)
    h1 = jnp.maximum(acc3 + fc1b_ref[...], 0.0)

    # dropout: identity in eval mode

    # ----------- fc2 (output lanes zero-padded to 128 -> dense store) ---------
    logits = jnp.dot(h1, fc2w_ref[...], preferred_element_type=jnp.float32) + fc2b_ref[...]
    o_ref[0] = logits


# ---------------------------------------------------------------------------
# Wrappers / parameter preparation
# ---------------------------------------------------------------------------
def _pick_batch_tile(n):
    """Largest tile (<=8) that divides n while keeping >= 2 grid steps (v7x: 2 TCs)."""
    for bt in (8, 4, 2, 1):
        if n % bt == 0 and n // bt >= 2:
            return bt
    return n


def init_params(key, num_classes=10):
    ks = jax.random.split(key, 8)
    p = {}
    # PyTorch conventions: conv weights OIHW, linear weights (out, in)
    p["conv1_w"] = jax.random.normal(ks[0], (32, 3, 3, 3), jnp.float32) * 0.1
    p["conv1_b"] = jax.random.normal(ks[1], (32,), jnp.float32) * 0.1
    p["conv2_w"] = jax.random.normal(ks[2], (64, 32, 3, 3), jnp.float32) * 0.05
    p["conv2_b"] = jax.random.normal(ks[3], (64,), jnp.float32) * 0.05
    p["fc1_w"] = jax.random.normal(ks[4], (128, 64 * 4 * 4), jnp.float32) * 0.05
    p["fc1_b"] = jax.random.normal(ks[5], (128,), jnp.float32) * 0.05
    p["fc2_w"] = jax.random.normal(ks[6], (num_classes, 128), jnp.float32) * 0.05
    p["fc2_b"] = jax.random.normal(ks[7], (num_classes,), jnp.float32) * 0.05
    return p


def prepare_params(params, num_classes=10):
    """One-time PyTorch-layout -> kernel-layout weight transforms."""
    c1 = params["conv1_w"].shape[0]
    c2 = params["conv2_w"].shape[0]
    dh = params["fc1_w"].shape[0]
    out_pad = ((num_classes + 127) // 128) * 128      # lane-dense logits width

    # conv weights: OIHW -> HWIO -> (9, Cin, Cout), indexed by kh*3+kw
    w1 = jnp.transpose(params["conv1_w"], (2, 3, 1, 0)).reshape(9, -1, c1)
    w2 = jnp.transpose(params["conv2_w"], (2, 3, 1, 0)).reshape(9, c1, c2)

    # fc1: (Dh, C2*4*4) with PyTorch NCHW flatten (f = c*16 + h4*4 + w4)
    #   -> (16, C2, Dh) indexed by s = h4*4 + w4 (flatten permutation folded in).
    fc1 = jnp.transpose(params["fc1_w"].reshape(dh, c2, 16), (2, 1, 0))

    # fc2: (num_classes, Dh) -> (Dh, out_pad), zero-padded extra columns.
    fc2 = jnp.zeros((dh, out_pad), jnp.float32).at[:, :num_classes].set(params["fc2_w"].T)
    fc2b = jnp.zeros((1, out_pad), jnp.float32).at[0, :num_classes].set(params["fc2_b"])

    return {
        "conv1_w": w1, "conv1_b": params["conv1_b"].reshape(1, c1),
        "conv2_w": w2, "conv2_b": params["conv2_b"].reshape(1, c2),
        "fc1_w": fc1, "fc1_b": params["fc1_b"].reshape(1, dh),
        "fc2_w": fc2, "fc2_b": fc2b,
    }


@functools.partial(jax.jit, static_argnames=("num_classes",))
def simple_net_forward(x_nchw, prep, num_classes=10):
    N, Cin, H, W = x_nchw.shape
    if H % 16 != 0 or W % 16 != 0:
        raise ValueError("fused kernel assumes H, W divisible by 16 "
                         "(two 2x2 max-pools + exact 4x4 adaptive avg-pool)")
    C1 = prep["conv1_w"].shape[2]
    C2 = prep["conv2_w"].shape[2]
    OUTP = prep["fc2_w"].shape[1]

    # NCHW (PyTorch) -> NHWC + zero pad for padding=1 (single fused XLA prologue).
    x = jnp.transpose(x_nchw, (0, 2, 3, 1)).astype(jnp.float32)
    xp = jnp.pad(x, ((0, 0), (1, 1), (1, 1), (0, 0)))

    bt = _pick_batch_tile(N)
    grid = (N // bt,)
    H2, W2 = H // 2, W // 2

    out = pl.pallas_call(
        fused_simplenet_kernel,
        out_shape=jax.ShapeDtypeStruct((N // bt, bt, OUTP), jnp.float32),
        grid=grid,
        in_specs=[
            pl.BlockSpec((bt, H + 2, W + 2, Cin), lambda n: (n, 0, 0, 0)),
            pl.BlockSpec(prep["conv1_w"].shape, lambda n: (0, 0, 0)),
            pl.BlockSpec(prep["conv1_b"].shape, lambda n: (0, 0)),
            pl.BlockSpec(prep["conv2_w"].shape, lambda n: (0, 0, 0)),
            pl.BlockSpec(prep["conv2_b"].shape, lambda n: (0, 0)),
            pl.BlockSpec(prep["fc1_w"].shape, lambda n: (0, 0, 0)),
            pl.BlockSpec(prep["fc1_b"].shape, lambda n: (0, 0)),
            pl.BlockSpec(prep["fc2_w"].shape, lambda n: (0, 0)),
            pl.BlockSpec(prep["fc2_b"].shape, lambda n: (0, 0)),
        ],
        out_specs=pl.BlockSpec((1, bt, OUTP), lambda n: (n, 0, 0)),
        scratch_shapes=[
            pltpu.VMEM((bt, H, W, C1), jnp.float32),            # conv1 pre-pool act
            pltpu.VMEM((bt, H2 + 2, W2 + 2, C1), jnp.float32),  # padded conv2 input
            pltpu.VMEM((bt, H2, W2, C2), jnp.float32),          # conv2 pre-pool act
        ],
        compiler_params=pltpu.CompilerParams(
            dimension_semantics=("parallel",)),
    )(xp, prep["conv1_w"], prep["conv1_b"], prep["conv2_w"], prep["conv2_b"],
      prep["fc1_w"], prep["fc1_b"], prep["fc2_w"], prep["fc2_b"])

    return out.reshape(N, OUTP)[:, :num_classes]


if __name__ == "__main__":
    key = jax.random.PRNGKey(0)
    k_param, k_x = jax.random.split(key)

    params = init_params(k_param, num_classes=10)
    prep = prepare_params(params, num_classes=10)   # one-time weight prep

    # small example input consistent with the module: NCHW, 3 input channels
    x = jax.random.normal(k_x, (2, 3, 16, 16), jnp.float32)

    out = simple_net_forward(x, prep, num_classes=10)
    out = jax.block_until_ready(out)

    assert out.shape == (2, 10)
    assert bool(jnp.all(jnp.isfinite(out)))
    print("KERNEL_OK")
</pallas_src>

<mosaic_0001>
module attributes {stable_mosaic.version = 11 : i64} {
  func.func @fused_simplenet_kernel(%arg0: i32, %arg1: memref<1x18x18x3xf32, #tpu.memory_space<vmem>>, %arg2: memref<9x3x32xf32, #tpu.memory_space<vmem>>, %arg3: memref<1x32xf32, #tpu.memory_space<vmem>>, %arg4: memref<9x32x64xf32, #tpu.memory_space<vmem>>, %arg5: memref<1x64xf32, #tpu.memory_space<vmem>>, %arg6: memref<16x64x128xf32, #tpu.memory_space<vmem>>, %arg7: memref<1x128xf32, #tpu.memory_space<vmem>>, %arg8: memref<128x128xf32, #tpu.memory_space<vmem>>, %arg9: memref<1x128xf32, #tpu.memory_space<vmem>>, %arg10: memref<1x1x128xf32, #tpu.memory_space<vmem>>, %arg11: memref<1x16x16x32xf32, #tpu.memory_space<vmem>>, %arg12: memref<1x10x10x32xf32, #tpu.memory_space<vmem>>, %arg13: memref<1x8x8x64xf32, #tpu.memory_space<vmem>>) attributes {dimension_semantics = [#tpu.dimension_semantics<parallel>], iteration_bounds = array<i64: 2>, scalar_prefetch = 0 : i64, scratch_operands = 3 : i64, tpu.core_type = #tpu.core_type<tc>, window_params = [{transform_indices = @transform_0, window_bounds = array<i64: 1, 18, 18, 3>}, {pipeline_mode = #tpu.pipeline_mode<synchronous>, transform_indices = @transform_1, window_bounds = array<i64: 9, 3, 32>}, {pipeline_mode = #tpu.pipeline_mode<synchronous>, transform_indices = @transform_2, window_bounds = array<i64: 1, 32>}, {pipeline_mode = #tpu.pipeline_mode<synchronous>, transform_indices = @transform_3, window_bounds = array<i64: 9, 32, 64>}, {pipeline_mode = #tpu.pipeline_mode<synchronous>, transform_indices = @transform_4, window_bounds = array<i64: 1, 64>}, {pipeline_mode = #tpu.pipeline_mode<synchronous>, transform_indices = @transform_5, window_bounds = array<i64: 16, 64, 128>}, {pipeline_mode = #tpu.pipeline_mode<synchronous>, transform_indices = @transform_6, window_bounds = array<i64: 1, 128>}, {pipeline_mode = #tpu.pipeline_mode<synchronous>, transform_indices = @transform_7, window_bounds = array<i64: 128, 128>}, {pipeline_mode = #tpu.pipeline_mode<synchronous>, transform_indices = @transform_8, window_bounds = array<i64: 1, 128>}, {transform_indices = @transform_9, window_bounds = array<i64: 1, 1, 128>}]} {
    %cst = arith.constant 0.000000e+00 : f32
    %0 = vector.broadcast %cst : f32 to vector<256x32xf32>
    %c0 = arith.constant 0 : index
    %c0_0 = arith.constant 0 : index
    %c0_1 = arith.constant 0 : index
    %c0_2 = arith.constant 0 : index
    %1 = vector.load %arg1[%c0, %c0_0, %c0_1, %c0_2] : memref<1x18x18x3xf32, #tpu.memory_space<vmem>>, vector<1x16x16x3xf32>
    %2 = vector.shape_cast %1 : vector<1x16x16x3xf32> to vector<256x3xf32>
    %c0_3 = arith.constant 0 : index
    %c0_4 = arith.constant 0 : index
    %c0_5 = arith.constant 0 : index
    %3 = vector.load %arg2[%c0_3, %c0_4, %c0_5] : memref<9x3x32xf32, #tpu.memory_space<vmem>>, vector<1x3x32xf32>
    %4 = vector.shape_cast %3 : vector<1x3x32xf32> to vector<3x32xf32>
    %cst_6 = arith.constant dense<0.000000e+00> : vector<256x32xf32>
    %5 = tpu.matmul %2, %4, %cst_6 {dimension_numbers = #tpu.dot_dimension_numbers<[1], [0], [0], [1], [0, 0, 1, 1], [], []>} : vector<256x3xf32>, vector<3x32xf32>, vector<256x32xf32> -> vector<256x32xf32>
    %6 = arith.addf %0, %5 : vector<256x32xf32>
    %c0_7 = arith.constant 0 : index
    %c0_8 = arith.constant 0 : index
    %c1 = arith.constant 1 : index
    %c0_9 = arith.constant 0 : index
    %7 = vector.load %arg1[%c0_7, %c0_8, %c1, %c0_9] : memref<1x18x18x3xf32, #tpu.memory_space<vmem>>, vector<1x16x16x3xf32>
    %8 = vector.shape_cast %7 : vector<1x16x16x3xf32> to vector<256x3xf32>
    %c1_10 = arith.constant 1 : index
    %c0_11 = arith.constant 0 : index
    %c0_12 = arith.constant 0 : index
    %9 = vector.load %arg2[%c1_10, %c0_11, %c0_12] : memref<9x3x32xf32, #tpu.memory_space<vmem>>, vector<1x3x32xf32>
    %10 = vector.shape_cast %9 : vector<1x3x32xf32> to vector<3x32xf32>
    %cst_13 = arith.constant dense<0.000000e+00> : vector<256x32xf32>
    %11 = tpu.matmul %8, %10, %cst_13 {dimension_numbers = #tpu.dot_dimension_numbers<[1], [0], [0], [1], [0, 0, 1, 1], [], []>} : vector<256x3xf32>, vector<3x32xf32>, vector<256x32xf32> -> vector<256x32xf32>
    %12 = arith.addf %6, %11 : vector<256x32xf32>
    %c0_14 = arith.constant 0 : index
    %c0_15 = arith.constant 0 : index
    %c2 = arith.constant 2 : index
    %c0_16 = arith.constant 0 : index
    %13 = vector.load %arg1[%c0_14, %c0_15, %c2, %c0_16] : memref<1x18x18x3xf32, #tpu.memory_space<vmem>>, vector<1x16x16x3xf32>
    %14 = vector.shape_cast %13 : vector<1x16x16x3xf32> to vector<256x3xf32>
    %c2_17 = arith.constant 2 : index
    %c0_18 = arith.constant 0 : index
    %c0_19 = arith.constant 0 : index
    %15 = vector.load %arg2[%c2_17, %c0_18, %c0_19] : memref<9x3x32xf32, #tpu.memory_space<vmem>>, vector<1x3x32xf32>
    %16 = vector.shape_cast %15 : vector<1x3x32xf32> to vector<3x32xf32>
    %cst_20 = arith.constant dense<0.000000e+00> : vector<256x32xf32>
    %17 = tpu.matmul %14, %16, %cst_20 {dimension_numbers = #tpu.dot_dimension_numbers<[1], [0], [0], [1], [0, 0, 1, 1], [], []>} : vector<256x3xf32>, vector<3x32xf32>, vector<256x32xf32> -> vector<256x32xf32>
    %18 = arith.addf %12, %17 : vector<256x32xf32>
    %c0_21 = arith.constant 0 : index
    %c1_22 = arith.constant 1 : index
    %c0_23 = arith.constant 0 : index
    %c0_24 = arith.constant 0 : index
    %19 = vector.load %arg1[%c0_21, %c1_22, %c0_23, %c0_24] : memref<1x18x18x3xf32, #tpu.memory_space<vmem>>, vector<1x16x16x3xf32>
    %20 = vector.shape_cast %19 : vector<1x16x16x3xf32> to vector<256x3xf32>
    %c3 = arith.constant 3 : index
    %c0_25 = arith.constant 0 : index
    %c0_26 = arith.constant 0 : index
    %21 = vector.load %arg2[%c3, %c0_25, %c0_26] : memref<9x3x32xf32, #tpu.memory_space<vmem>>, vector<1x3x32xf32>
    %22 = vector.shape_cast %21 : vector<1x3x32xf32> to vector<3x32xf32>
    %cst_27 = arith.constant dense<0.000000e+00> : vector<256x32xf32>
    %23 = tpu.matmul %20, %22, %cst_27 {dimension_numbers = #tpu.dot_dimension_numbers<[1], [0], [0], [1], [0, 0, 1, 1], [], []>} : vector<256x3xf32>, vector<3x32xf32>, vector<256x32xf32> -> vector<256x32xf32>
    %24 = arith.addf %18, %23 : vector<256x32xf32>
    %c0_28 = arith.constant 0 : index
    %c1_29 = arith.constant 1 : index
    %c1_30 = arith.constant 1 : index
    %c0_31 = arith.constant 0 : index
    %25 = vector.load %arg1[%c0_28, %c1_29, %c1_30, %c0_31] : memref<1x18x18x3xf32, #tpu.memory_space<vmem>>, vector<1x16x16x3xf32>
    %26 = vector.shape_cast %25 : vector<1x16x16x3xf32> to vector<256x3xf32>
    %c4 = arith.constant 4 : index
    %c0_32 = arith.constant 0 : index
    %c0_33 = arith.constant 0 : index
    %27 = vector.load %arg2[%c4, %c0_32, %c0_33] : memref<9x3x32xf32, #tpu.memory_space<vmem>>, vector<1x3x32xf32>
    %28 = vector.shape_cast %27 : vector<1x3x32xf32> to vector<3x32xf32>
    %cst_34 = arith.constant dense<0.000000e+00> : vector<256x32xf32>
    %29 = tpu.matmul %26, %28, %cst_34 {dimension_numbers = #tpu.dot_dimension_numbers<[1], [0], [0], [1], [0, 0, 1, 1], [], []>} : vector<256x3xf32>, vector<3x32xf32>, vector<256x32xf32> -> vector<256x32xf32>
    %30 = arith.addf %24, %29 : vector<256x32xf32>
    %c0_35 = arith.constant 0 : index
    %c1_36 = arith.constant 1 : index
    %c2_37 = arith.constant 2 : index
    %c0_38 = arith.constant 0 : index
    %31 = vector.load %arg1[%c0_35, %c1_36, %c2_37, %c0_38] : memref<1x18x18x3xf32, #tpu.memory_space<vmem>>, vector<1x16x16x3xf32>
    %32 = vector.shape_cast %31 : vector<1x16x16x3xf32> to vector<256x3xf32>
    %c5 = arith.constant 5 : index
    %c0_39 = arith.constant 0 : index
    %c0_40 = arith.constant 0 : index
    %33 = vector.load %arg2[%c5, %c0_39, %c0_40] : memref<9x3x32xf32, #tpu.memory_space<vmem>>, vector<1x3x32xf32>
    %34 = vector.shape_cast %33 : vector<1x3x32xf32> to vector<3x32xf32>
    %cst_41 = arith.constant dense<0.000000e+00> : vector<256x32xf32>
    %35 = tpu.matmul %32, %34, %cst_41 {dimension_numbers = #tpu.dot_dimension_numbers<[1], [0], [0], [1], [0, 0, 1, 1], [], []>} : vector<256x3xf32>, vector<3x32xf32>, vector<256x32xf32> -> vector<256x32xf32>
    %36 = arith.addf %30, %35 : vector<256x32xf32>
    %c0_42 = arith.constant 0 : index
    %c2_43 = arith.constant 2 : index
    %c0_44 = arith.constant 0 : index
    %c0_45 = arith.constant 0 : index
    %37 = vector.load %arg1[%c0_42, %c2_43, %c0_44, %c0_45] : memref<1x18x18x3xf32, #tpu.memory_space<vmem>>, vector<1x16x16x3xf32>
    %38 = vector.shape_cast %37 : vector<1x16x16x3xf32> to vector<256x3xf32>
    %c6 = arith.constant 6 : index
    %c0_46 = arith.constant 0 : index
    %c0_47 = arith.constant 0 : index
    %39 = vector.load %arg2[%c6, %c0_46, %c0_47] : memref<9x3x32xf32, #tpu.memory_space<vmem>>, vector<1x3x32xf32>
    %40 = vector.shape_cast %39 : vector<1x3x32xf32> to vector<3x32xf32>
    %cst_48 = arith.constant dense<0.000000e+00> : vector<256x32xf32>
    %41 = tpu.matmul %38, %40, %cst_48 {dimension_numbers = #tpu.dot_dimension_numbers<[1], [0], [0], [1], [0, 0, 1, 1], [], []>} : vector<256x3xf32>, vector<3x32xf32>, vector<256x32xf32> -> vector<256x32xf32>
    %42 = arith.addf %36, %41 : vector<256x32xf32>
    %c0_49 = arith.constant 0 : index
    %c2_50 = arith.constant 2 : index
    %c1_51 = arith.constant 1 : index
    %c0_52 = arith.constant 0 : index
    %43 = vector.load %arg1[%c0_49, %c2_50, %c1_51, %c0_52] : memref<1x18x18x3xf32, #tpu.memory_space<vmem>>, vector<1x16x16x3xf32>
    %44 = vector.shape_cast %43 : vector<1x16x16x3xf32> to vector<256x3xf32>
    %c7 = arith.constant 7 : index
    %c0_53 = arith.constant 0 : index
    %c0_54 = arith.constant 0 : index
    %45 = vector.load %arg2[%c7, %c0_53, %c0_54] : memref<9x3x32xf32, #tpu.memory_space<vmem>>, vector<1x3x32xf32>
    %46 = vector.shape_cast %45 : vector<1x3x32xf32> to vector<3x32xf32>
    %cst_55 = arith.constant dense<0.000000e+00> : vector<256x32xf32>
    %47 = tpu.matmul %44, %46, %cst_55 {dimension_numbers = #tpu.dot_dimension_numbers<[1], [0], [0], [1], [0, 0, 1, 1], [], []>} : vector<256x3xf32>, vector<3x32xf32>, vector<256x32xf32> -> vector<256x32xf32>
    %48 = arith.addf %42, %47 : vector<256x32xf32>
    %c0_56 = arith.constant 0 : index
    %c2_57 = arith.constant 2 : index
    %c2_58 = arith.constant 2 : index
    %c0_59 = arith.constant 0 : index
    %49 = vector.load %arg1[%c0_56, %c2_57, %c2_58, %c0_59] : memref<1x18x18x3xf32, #tpu.memory_space<vmem>>, vector<1x16x16x3xf32>
    %50 = vector.shape_cast %49 : vector<1x16x16x3xf32> to vector<256x3xf32>
    %c8 = arith.constant 8 : index
    %c0_60 = arith.constant 0 : index
    %c0_61 = arith.constant 0 : index
    %51 = vector.load %arg2[%c8, %c0_60, %c0_61] : memref<9x3x32xf32, #tpu.memory_space<vmem>>, vector<1x3x32xf32>
    %52 = vector.shape_cast %51 : vector<1x3x32xf32> to vector<3x32xf32>
    %cst_62 = arith.constant dense<0.000000e+00> : vector<256x32xf32>
    %53 = tpu.matmul %50, %52, %cst_62 {dimension_numbers = #tpu.dot_dimension_numbers<[1], [0], [0], [1], [0, 0, 1, 1], [], []>} : vector<256x3xf32>, vector<3x32xf32>, vector<256x32xf32> -> vector<256x32xf32>
    %54 = arith.addf %48, %53 : vector<256x32xf32>
    %c0_63 = arith.constant 0 : index
    %c0_64 = arith.constant 0 : index
    %55 = vector.load %arg3[%c0_63, %c0_64] : memref<1x32xf32, #tpu.memory_space<vmem>>, vector<1x32xf32>
    %56 = vector.broadcast %55 : vector<1x32xf32> to vector<256x32xf32>
    %57 = arith.addf %54, %56 : vector<256x32xf32>
    %cst_65 = arith.constant 0.000000e+00 : f32
    %58 = vector.broadcast %cst_65 : f32 to vector<256x32xf32>
    %59 = arith.maximumf %57, %58 : vector<256x32xf32>
    %60 = vector.shape_cast %59 : vector<256x32xf32> to vector<1x16x16x32xf32>
    %c0_66 = arith.constant 0 : index
    %c0_67 = arith.constant 0 : index
    %c0_68 = arith.constant 0 : index
    %c0_69 = arith.constant 0 : index
    %61 = vector.load %arg11[%c0_66, %c0_67, %c0_68, %c0_69] : memref<1x16x16x32xf32, #tpu.memory_space<vmem>>, vector<1x16x16x32xf32>
    tpu.vector_store %arg11[%c0_66, %c0_67, %c0_68, %c0_69], %60 {strides = array<i32>} : memref<1x16x16x32xf32, #tpu.memory_space<vmem>>, vector<1x16x16x32xf32>,
    %c0_70 = arith.constant 0 : index
    %c0_71 = arith.constant 0 : index
    %c0_72 = arith.constant 0 : index
    %c0_73 = arith.constant 0 : index
    %62 = tpu.strided_load %arg11[%c0_70, %c0_71, %c0_72, %c0_73] {strides = array<i32: 1, 2, 2, 1>} : memref<1x16x16x32xf32, #tpu.memory_space<vmem>>, vector<1x8x8x32xf32>
    %c0_74 = arith.constant 0 : index
    %c0_75 = arith.constant 0 : index
    %c1_76 = arith.constant 1 : index
    %c0_77 = arith.constant 0 : index
    %63 = tpu.strided_load %arg11[%c0_74, %c0_75, %c1_76, %c0_77] {strides = array<i32: 1, 2, 2, 1>} : memref<1x16x16x32xf32, #tpu.memory_space<vmem>>, vector<1x8x8x32xf32>
    %c0_78 = arith.constant 0 : index
    %c1_79 = arith.constant 1 : index
    %c0_80 = arith.constant 0 : index
    %c0_81 = arith.constant 0 : index
    %64 = tpu.strided_load %arg11[%c0_78, %c1_79, %c0_80, %c0_81] {strides = array<i32: 1, 2, 2, 1>} : memref<1x16x16x32xf32, #tpu.memory_space<vmem>>, vector<1x8x8x32xf32>
    %c0_82 = arith.constant 0 : index
    %c1_83 = arith.constant 1 : index
    %c1_84 = arith.constant 1 : index
    %c0_85 = arith.constant 0 : index
    %65 = tpu.strided_load %arg11[%c0_82, %c1_83, %c1_84, %c0_85] {strides = array<i32: 1, 2, 2, 1>} : memref<1x16x16x32xf32, #tpu.memory_space<vmem>>, vector<1x8x8x32xf32>
    %66 = arith.maximumf %62, %63 : vector<1x8x8x32xf32>
    %67 = arith.maximumf %64, %65 : vector<1x8x8x32xf32>
    %68 = arith.maximumf %66, %67 : vector<1x8x8x32xf32>
    %cst_86 = arith.constant 0.000000e+00 : f32
    %69 = vector.broadcast %cst_86 : f32 to vector<1x10x10x32xf32>
    %c0_87 = arith.constant 0 : index
    %c0_88 = arith.constant 0 : index
    %c0_89 = arith.constant 0 : index
    %c0_90 = arith.constant 0 : index
    %70 = vector.load %arg12[%c0_87, %c0_88, %c0_89, %c0_90] : memref<1x10x10x32xf32, #tpu.memory_space<vmem>>, vector<1x10x10x32xf32>
    tpu.vector_store %arg12[%c0_87, %c0_88, %c0_89, %c0_90], %69 {strides = array<i32>} : memref<1x10x10x32xf32, #tpu.memory_space<vmem>>, vector<1x10x10x32xf32>,
    %c0_91 = arith.constant 0 : index
    %c1_92 = arith.constant 1 : index
    %c1_93 = arith.constant 1 : index
    %c0_94 = arith.constant 0 : index
    %71 = vector.load %arg12[%c0_91, %c1_92, %c1_93, %c0_94] : memref<1x10x10x32xf32, #tpu.memory_space<vmem>>, vector<1x8x8x32xf32>
    tpu.vector_store %arg12[%c0_91, %c1_92, %c1_93, %c0_94], %68 {strides = array<i32>} : memref<1x10x10x32xf32, #tpu.memory_space<vmem>>, vector<1x8x8x32xf32>,
    %cst_95 = arith.constant 0.000000e+00 : f32
    %72 = vector.broadcast %cst_95 : f32 to vector<64x64xf32>
    %c0_96 = arith.constant 0 : index
    %c0_97 = arith.constant 0 : index
    %c0_98 = arith.constant 0 : index
    %c0_99 = arith.constant 0 : index
    %73 = vector.load %arg12[%c0_96, %c0_97, %c0_98, %c0_99] : memref<1x10x10x32xf32, #tpu.memory_space<vmem>>, vector<1x8x8x32xf32>
    %74 = vector.shape_cast %73 : vector<1x8x8x32xf32> to vector<64x32xf32>
    %c0_100 = arith.constant 0 : index
    %c0_101 = arith.constant 0 : index
    %c0_102 = arith.constant 0 : index
    %75 = vector.load %arg4[%c0_100, %c0_101, %c0_102] : memref<9x32x64xf32, #tpu.memory_space<vmem>>, vector<1x32x64xf32>
    %76 = vector.shape_cast %75 : vector<1x32x64xf32> to vector<32x64xf32>
    %cst_103 = arith.constant dense<0.000000e+00> : vector<64x64xf32>
    %77 = tpu.matmul %74, %76, %cst_103 {dimension_numbers = #tpu.dot_dimension_numbers<[1], [0], [0], [1], [0, 0, 1, 1], [], []>} : vector<64x32xf32>, vector<32x64xf32>, vector<64x64xf32> -> vector<64x64xf32>
    %78 = arith.addf %72, %77 : vector<64x64xf32>
    %c0_104 = arith.constant 0 : index
    %c0_105 = arith.constant 0 : index
    %c1_106 = arith.constant 1 : index
    %c0_107 = arith.constant 0 : index
    %79 = vector.load %arg12[%c0_104, %c0_105, %c1_106, %c0_107] : memref<1x10x10x32xf32, #tpu.memory_space<vmem>>, vector<1x8x8x32xf32>
    %80 = vector.shape_cast %79 : vector<1x8x8x32xf32> to vector<64x32xf32>
    %c1_108 = arith.constant 1 : index
    %c0_109 = arith.constant 0 : index
    %c0_110 = arith.constant 0 : index
    %81 = vector.load %arg4[%c1_108, %c0_109, %c0_110] : memref<9x32x64xf32, #tpu.memory_space<vmem>>, vector<1x32x64xf32>
    %82 = vector.shape_cast %81 : vector<1x32x64xf32> to vector<32x64xf32>
    %cst_111 = arith.constant dense<0.000000e+00> : vector<64x64xf32>
    %83 = tpu.matmul %80, %82, %cst_111 {dimension_numbers = #tpu.dot_dimension_numbers<[1], [0], [0], [1], [0, 0, 1, 1], [], []>} : vector<64x32xf32>, vector<32x64xf32>, vector<64x64xf32> -> vector<64x64xf32>
    %84 = arith.addf %78, %83 : vector<64x64xf32>
    %c0_112 = arith.constant 0 : index
    %c0_113 = arith.constant 0 : index
    %c2_114 = arith.constant 2 : index
    %c0_115 = arith.constant 0 : index
    %85 = vector.load %arg12[%c0_112, %c0_113, %c2_114, %c0_115] : memref<1x10x10x32xf32, #tpu.memory_space<vmem>>, vector<1x8x8x32xf32>
    %86 = vector.shape_cast %85 : vector<1x8x8x32xf32> to vector<64x32xf32>
    %c2_116 = arith.constant 2 : index
    %c0_117 = arith.constant 0 : index
    %c0_118 = arith.constant 0 : index
    %87 = vector.load %arg4[%c2_116, %c0_117, %c0_118] : memref<9x32x64xf32, #tpu.memory_space<vmem>>, vector<1x32x64xf32>
    %88 = vector.shape_cast %87 : vector<1x32x64xf32> to vector<32x64xf32>
    %cst_119 = arith.constant dense<0.000000e+00> : vector<64x64xf32>
    %89 = tpu.matmul %86, %88, %cst_119 {dimension_numbers = #tpu.dot_dimension_numbers<[1], [0], [0], [1], [0, 0, 1, 1], [], []>} : vector<64x32xf32>, vector<32x64xf32>, vector<64x64xf32> -> vector<64x64xf32>
    %90 = arith.addf %84, %89 : vector<64x64xf32>
    %c0_120 = arith.constant 0 : index
    %c1_121 = arith.constant 1 : index
    %c0_122 = arith.constant 0 : index
    %c0_123 = arith.constant 0 : index
    %91 = vector.load %arg12[%c0_120, %c1_121, %c0_122, %c0_123] : memref<1x10x10x32xf32, #tpu.memory_space<vmem>>, vector<1x8x8x32xf32>
    %92 = vector.shape_cast %91 : vector<1x8x8x32xf32> to vector<64x32xf32>
    %c3_124 = arith.constant 3 : index
    %c0_125 = arith.constant 0 : index
    %c0_126 = arith.constant 0 : index
    %93 = vector.load %arg4[%c3_124, %c0_125, %c0_126] : memref<9x32x64xf32, #tpu.memory_space<vmem>>, vector<1x32x64xf32>
    %94 = vector.shape_cast %93 : vector<1x32x64xf32> to vector<32x64xf32>
    %cst_127 = arith.constant dense<0.000000e+00> : vector<64x64xf32>
    %95 = tpu.matmul %92, %94, %cst_127 {dimension_numbers = #tpu.dot_dimension_numbers<[1], [0], [0], [1], [0, 0, 1, 1], [], []>} : vector<64x32xf32>, vector<32x64xf32>, vector<64x64xf32> -> vector<64x64xf32>
    %96 = arith.addf %90, %95 : vector<64x64xf32>
    %c0_128 = arith.constant 0 : index
    %c1_129 = arith.constant 1 : index
    %c1_130 = arith.constant 1 : index
    %c0_131 = arith.constant 0 : index
    %97 = vector.load %arg12[%c0_128, %c1_129, %c1_130, %c0_131] : memref<1x10x10x32xf32, #tpu.memory_space<vmem>>, vector<1x8x8x32xf32>
    %98 = vector.shape_cast %97 : vector<1x8x8x32xf32> to vector<64x32xf32>
    %c4_132 = arith.constant 4 : index
    %c0_133 = arith.constant 0 : index
    %c0_134 = arith.constant 0 : index
    %99 = vector.load %arg4[%c4_132, %c0_133, %c0_134] : memref<9x32x64xf32, #tpu.memory_space<vmem>>, vector<1x32x64xf32>
    %100 = vector.shape_cast %99 : vector<1x32x64xf32> to vector<32x64xf32>
    %cst_135 = arith.constant dense<0.000000e+00> : vector<64x64xf32>
    %101 = tpu.matmul %98, %100, %cst_135 {dimension_numbers = #tpu.dot_dimension_numbers<[1], [0], [0], [1], [0, 0, 1, 1], [], []>} : vector<64x32xf32>, vector<32x64xf32>, vector<64x64xf32> -> vector<64x64xf32>
    %102 = arith.addf %96, %101 : vector<64x64xf32>
    %c0_136 = arith.constant 0 : index
    %c1_137 = arith.constant 1 : index
    %c2_138 = arith.constant 2 : index
    %c0_139 = arith.constant 0 : index
    %103 = vector.load %arg12[%c0_136, %c1_137, %c2_138, %c0_139] : memref<1x10x10x32xf32, #tpu.memory_space<vmem>>, vector<1x8x8x32xf32>
    %104 = vector.shape_cast %103 : vector<1x8x8x32xf32> to vector<64x32xf32>
    %c5_140 = arith.constant 5 : index
    %c0_141 = arith.constant 0 : index
    %c0_142 = arith.constant 0 : index
    %105 = vector.load %arg4[%c5_140, %c0_141, %c0_142] : memref<9x32x64xf32, #tpu.memory_space<vmem>>, vector<1x32x64xf32>
    %106 = vector.shape_cast %105 : vector<1x32x64xf32> to vector<32x64xf32>
    %cst_143 = arith.constant dense<0.000000e+00> : vector<64x64xf32>
    %107 = tpu.matmul %104, %106, %cst_143 {dimension_numbers = #tpu.dot_dimension_numbers<[1], [0], [0], [1], [0, 0, 1, 1], [], []>} : vector<64x32xf32>, vector<32x64xf32>, vector<64x64xf32> -> vector<64x64xf32>
    %108 = arith.addf %102, %107 : vector<64x64xf32>
    %c0_144 = arith.constant 0 : index
    %c2_145 = arith.constant 2 : index
    %c0_146 = arith.constant 0 : index
    %c0_147 = arith.constant 0 : index
    %109 = vector.load %arg12[%c0_144, %c2_145, %c0_146, %c0_147] : memref<1x10x10x32xf32, #tpu.memory_space<vmem>>, vector<1x8x8x32xf32>
    %110 = vector.shape_cast %109 : vector<1x8x8x32xf32> to vector<64x32xf32>
    %c6_148 = arith.constant 6 : index
    %c0_149 = arith.constant 0 : index
    %c0_150 = arith.constant 0 : index
    %111 = vector.load %arg4[%c6_148, %c0_149, %c0_150] : memref<9x32x64xf32, #tpu.memory_space<vmem>>, vector<1x32x64xf32>
    %112 = vector.shape_cast %111 : vector<1x32x64xf32> to vector<32x64xf32>
    %cst_151 = arith.constant dense<0.000000e+00> : vector<64x64xf32>
    %113 = tpu.matmul %110, %112, %cst_151 {dimension_numbers = #tpu.dot_dimension_numbers<[1], [0], [0], [1], [0, 0, 1, 1], [], []>} : vector<64x32xf32>, vector<32x64xf32>, vector<64x64xf32> -> vector<64x64xf32>
    %114 = arith.addf %108, %113 : vector<64x64xf32>
    %c0_152 = arith.constant 0 : index
    %c2_153 = arith.constant 2 : index
    %c1_154 = arith.constant 1 : index
    %c0_155 = arith.constant 0 : index
    %115 = vector.load %arg12[%c0_152, %c2_153, %c1_154, %c0_155] : memref<1x10x10x32xf32, #tpu.memory_space<vmem>>, vector<1x8x8x32xf32>
    %116 = vector.shape_cast %115 : vector<1x8x8x32xf32> to vector<64x32xf32>
    %c7_156 = arith.constant 7 : index
    %c0_157 = arith.constant 0 : index
    %c0_158 = arith.constant 0 : index
    %117 = vector.load %arg4[%c7_156, %c0_157, %c0_158] : memref<9x32x64xf32, #tpu.memory_space<vmem>>, vector<1x32x64xf32>
    %118 = vector.shape_cast %117 : vector<1x32x64xf32> to vector<32x64xf32>
    %cst_159 = arith.constant dense<0.000000e+00> : vector<64x64xf32>
    %119 = tpu.matmul %116, %118, %cst_159 {dimension_numbers = #tpu.dot_dimension_numbers<[1], [0], [0], [1], [0, 0, 1, 1], [], []>} : vector<64x32xf32>, vector<32x64xf32>, vector<64x64xf32> -> vector<64x64xf32>
    %120 = arith.addf %114, %119 : vector<64x64xf32>
    %c0_160 = arith.constant 0 : index
    %c2_161 = arith.constant 2 : index
    %c2_162 = arith.constant 2 : index
    %c0_163 = arith.constant 0 : index
    %121 = vector.load %arg12[%c0_160, %c2_161, %c2_162, %c0_163] : memref<1x10x10x32xf32, #tpu.memory_space<vmem>>, vector<1x8x8x32xf32>
    %122 = vector.shape_cast %121 : vector<1x8x8x32xf32> to vector<64x32xf32>
    %c8_164 = arith.constant 8 : index
    %c0_165 = arith.constant 0 : index
    %c0_166 = arith.constant 0 : index
    %123 = vector.load %arg4[%c8_164, %c0_165, %c0_166] : memref<9x32x64xf32, #tpu.memory_space<vmem>>, vector<1x32x64xf32>
    %124 = vector.shape_cast %123 : vector<1x32x64xf32> to vector<32x64xf32>
    %cst_167 = arith.constant dense<0.000000e+00> : vector<64x64xf32>
    %125 = tpu.matmul %122, %124, %cst_167 {dimension_numbers = #tpu.dot_dimension_numbers<[1], [0], [0], [1], [0, 0, 1, 1], [], []>} : vector<64x32xf32>, vector<32x64xf32>, vector<64x64xf32> -> vector<64x64xf32>
    %126 = arith.addf %120, %125 : vector<64x64xf32>
    %c0_168 = arith.constant 0 : index
    %c0_169 = arith.constant 0 : index
    %127 = vector.load %arg5[%c0_168, %c0_169] : memref<1x64xf32, #tpu.memory_space<vmem>>, vector<1x64xf32>
    %128 = vector.broadcast %127 : vector<1x64xf32> to vector<64x64xf32>
    %129 = arith.addf %126, %128 : vector<64x64xf32>
    %cst_170 = arith.constant 0.000000e+00 : f32
    %130 = vector.broadcast %cst_170 : f32 to vector<64x64xf32>
    %131 = arith.maximumf %129, %130 : vector<64x64xf32>
    %132 = vector.shape_cast %131 : vector<64x64xf32> to vector<1x8x8x64xf32>
    %c0_171 = arith.constant 0 : index
    %c0_172 = arith.constant 0 : index
    %c0_173 = arith.constant 0 : index
    %c0_174 = arith.constant 0 : index
    %133 = vector.load %arg13[%c0_171, %c0_172, %c0_173, %c0_174] : memref<1x8x8x64xf32, #tpu.memory_space<vmem>>, vector<1x8x8x64xf32>
    tpu.vector_store %arg13[%c0_171, %c0_172, %c0_173, %c0_174], %132 {strides = array<i32>} : memref<1x8x8x64xf32, #tpu.memory_space<vmem>>, vector<1x8x8x64xf32>,
    %cst_175 = arith.constant 0.000000e+00 : f32
    %134 = vector.broadcast %cst_175 : f32 to vector<1x128xf32>
    %cst_176 = arith.constant 0.000000e+00 : f32
    %135 = vector.broadcast %cst_176 : f32 to vector<1x64xf32>
    %c0_177 = arith.constant 0 : index
    %c0_178 = arith.constant 0 : index
    %c0_179 = arith.constant 0 : index
    %c0_180 = arith.constant 0 : index
    %136 = vector.load %arg13[%c0_177, %c0_178, %c0_179, %c0_180] : memref<1x8x8x64xf32, #tpu.memory_space<vmem>>, vector<1x1x1x64xf32>
    %137 = vector.shape_cast %136 : vector<1x1x1x64xf32> to vector<1x64xf32>
    %c0_181 = arith.constant 0 : index
    %c0_182 = arith.constant 0 : index
    %c1_183 = arith.constant 1 : index
    %c0_184 = arith.constant 0 : index
    %138 = vector.load %arg13[%c0_181, %c0_182, %c1_183, %c0_184] : memref<1x8x8x64xf32, #tpu.memory_space<vmem>>, vector<1x1x1x64xf32>
    %139 = vector.shape_cast %138 : vector<1x1x1x64xf32> to vector<1x64xf32>
    %140 = arith.maximumf %137, %139 : vector<1x64xf32>
    %c0_185 = arith.constant 0 : index
    %c1_186 = arith.constant 1 : index
    %c0_187 = arith.constant 0 : index
    %c0_188 = arith.constant 0 : index
    %141 = vector.load %arg13[%c0_185, %c1_186, %c0_187, %c0_188] : memref<1x8x8x64xf32, #tpu.memory_space<vmem>>, vector<1x1x1x64xf32>
    %142 = vector.shape_cast %141 : vector<1x1x1x64xf32> to vector<1x64xf32>
    %c0_189 = arith.constant 0 : index
    %c1_190 = arith.constant 1 : index
    %c1_191 = arith.constant 1 : index
    %c0_192 = arith.constant 0 : index
    %143 = vector.load %arg13[%c0_189, %c1_190, %c1_191, %c0_192] : memref<1x8x8x64xf32, #tpu.memory_space<vmem>>, vector<1x1x1x64xf32>
    %144 = vector.shape_cast %143 : vector<1x1x1x64xf32> to vector<1x64xf32>
    %145 = arith.maximumf %142, %144 : vector<1x64xf32>
    %146 = arith.maximumf %140, %145 : vector<1x64xf32>
    %147 = arith.addf %135, %146 : vector<1x64xf32>
    %cst_193 = arith.constant 1.000000e+00 : f32
    %148 = vector.broadcast %cst_193 : f32 to vector<1x64xf32>
    %149 = arith.mulf %147, %148 : vector<1x64xf32>
    %c0_194 = arith.constant 0 : index
    %c0_195 = arith.constant 0 : index
    %c0_196 = arith.constant 0 : index
    %150 = vector.load %arg6[%c0_194, %c0_195, %c0_196] : memref<16x64x128xf32, #tpu.memory_space<vmem>>, vector<1x64x128xf32>
    %151 = vector.shape_cast %150 : vector<1x64x128xf32> to vector<64x128xf32>
    %cst_197 = arith.constant dense<0.000000e+00> : vector<1x128xf32>
    %152 = tpu.matmul %149, %151, %cst_197 {dimension_numbers = #tpu.dot_dimension_numbers<[1], [0], [0], [1], [0, 0, 1, 1], [], []>} : vector<1x64xf32>, vector<64x128xf32>, vector<1x128xf32> -> vector<1x128xf32>
    %153 = arith.addf %134, %152 : vector<1x128xf32>
    %cst_198 = arith.constant 0.000000e+00 : f32
    %154 = vector.broadcast %cst_198 : f32 to vector<1x64xf32>
    %c0_199 = arith.constant 0 : index
    %c0_200 = arith.constant 0 : index
    %c2_201 = arith.constant 2 : index
    %c0_202 = arith.constant 0 : index
    %155 = vector.load %arg13[%c0_199, %c0_200, %c2_201, %c0_202] : memref<1x8x8x64xf32, #tpu.memory_space<vmem>>, vector<1x1x1x64xf32>
    %156 = vector.shape_cast %155 : vector<1x1x1x64xf32> to vector<1x64xf32>
    %c0_203 = arith.constant 0 : index
    %c0_204 = arith.constant 0 : index
    %c3_205 = arith.constant 3 : index
    %c0_206 = arith.constant 0 : index
    %157 = vector.load %arg13[%c0_203, %c0_204, %c3_205, %c0_206] : memref<1x8x8x64xf32, #tpu.memory_space<vmem>>, vector<1x1x1x64xf32>
    %158 = vector.shape_cast %157 : vector<1x1x1x64xf32> to vector<1x64xf32>
    %159 = arith.maximumf %156, %158 : vector<1x64xf32>
    %c0_207 = arith.constant 0 : index
    %c1_208 = arith.constant 1 : index
    %c2_209 = arith.constant 2 : index
    %c0_210 = arith.constant 0 : index
    %160 = vector.load %arg13[%c0_207, %c1_208, %c2_209, %c0_210] : memref<1x8x8x64xf32, #tpu.memory_space<vmem>>, vector<1x1x1x64xf32>
    %161 = vector.shape_cast %160 : vector<1x1x1x64xf32> to vector<1x64xf32>
    %c0_211 = arith.constant 0 : index
    %c1_212 = arith.constant 1 : index
    %c3_213 = arith.constant 3 : index
    %c0_214 = arith.constant 0 : index
    %162 = vector.load %arg13[%c0_211, %c1_212, %c3_213, %c0_214] : memref<1x8x8x64xf32, #tpu.memory_space<vmem>>, vector<1x1x1x64xf32>
    %163 = vector.shape_cast %162 : vector<1x1x1x64xf32> to vector<1x64xf32>
    %164 = arith.maximumf %161, %163 : vector<1x64xf32>
    %165 = arith.maximumf %159, %164 : vector<1x64xf32>
    %166 = arith.addf %154, %165 : vector<1x64xf32>
    %cst_215 = arith.constant 1.000000e+00 : f32
    %167 = vector.broadcast %cst_215 : f32 to vector<1x64xf32>
    %168 = arith.mulf %166, %167 : vector<1x64xf32>
    %c1_216 = arith.constant 1 : index
    %c0_217 = arith.constant 0 : index
    %c0_218 = arith.constant 0 : index
    %169 = vector.load %arg6[%c1_216, %c0_217, %c0_218] : memref<16x64x128xf32, #tpu.memory_space<vmem>>, vector<1x64x128xf32>
    %170 = vector.shape_cast %169 : vector<1x64x128xf32> to vector<64x128xf32>
    %cst_219 = arith.constant dense<0.000000e+00> : vector<1x128xf32>
    %171 = tpu.matmul %168, %170, %cst_219 {dimension_numbers = #tpu.dot_dimension_numbers<[1], [0], [0], [1], [0, 0, 1, 1], [], []>} : vector<1x64xf32>, vector<64x128xf32>, vector<1x128xf32> -> vector<1x128xf32>
    %172 = arith.addf %153, %171 : vector<1x128xf32>
    %cst_220 = arith.constant 0.000000e+00 : f32
    %173 = vector.broadcast %cst_220 : f32 to vector<1x64xf32>
    %c0_221 = arith.constant 0 : index
    %c0_222 = arith.constant 0 : index
    %c4_223 = arith.constant 4 : index
    %c0_224 = arith.constant 0 : index
    %174 = vector.load %arg13[%c0_221, %c0_222, %c4_223, %c0_224] : memref<1x8x8x64xf32, #tpu.memory_space<vmem>>, vector<1x1x1x64xf32>
    %175 = vector.shape_cast %174 : vector<1x1x1x64xf32> to vector<1x64xf32>
    %c0_225 = arith.constant 0 : index
    %c0_226 = arith.constant 0 : index
    %c5_227 = arith.constant 5 : index
    %c0_228 = arith.constant 0 : index
    %176 = vector.load %arg13[%c0_225, %c0_226, %c5_227, %c0_228] : memref<1x8x8x64xf32, #tpu.memory_space<vmem>>, vector<1x1x1x64xf32>
    %177 = vector.shape_cast %176 : vector<1x1x1x64xf32> to vector<1x64xf32>
    %178 = arith.maximumf %175, %177 : vector<1x64xf32>
    %c0_229 = arith.constant 0 : index
    %c1_230 = arith.constant 1 : index
    %c4_231 = arith.constant 4 : index
    %c0_232 = arith.constant 0 : index
    %179 = vector.load %arg13[%c0_229, %c1_230, %c4_231, %c0_232] : memref<1x8x8x64xf32, #tpu.memory_space<vmem>>, vector<1x1x1x64xf32>
    %180 = vector.shape_cast %179 : vector<1x1x1x64xf32> to vector<1x64xf32>
    %c0_233 = arith.constant 0 : index
    %c1_234 = arith.constant 1 : index
    %c5_235 = arith.constant 5 : index
    %c0_236 = arith.constant 0 : index
    %181 = vector.load %arg13[%c0_233, %c1_234, %c5_235, %c0_236] : memref<1x8x8x64xf32, #tpu.memory_space<vmem>>, vector<1x1x1x64xf32>
    %182 = vector.shape_cast %181 : vector<1x1x1x64xf32> to vector<1x64xf32>
    %183 = arith.maximumf %180, %182 : vector<1x64xf32>
    %184 = arith.maximumf %178, %183 : vector<1x64xf32>
    %185 = arith.addf %173, %184 : vector<1x64xf32>
    %cst_237 = arith.constant 1.000000e+00 : f32
    %186 = vector.broadcast %cst_237 : f32 to vector<1x64xf32>
    %187 = arith.mulf %185, %186 : vector<1x64xf32>
    %c2_238 = arith.constant 2 : index
    %c0_239 = arith.constant 0 : index
    %c0_240 = arith.constant 0 : index
    %188 = vector.load %arg6[%c2_238, %c0_239, %c0_240] : memref<16x64x128xf32, #tpu.memory_space<vmem>>, vector<1x64x128xf32>
    %189 = vector.shape_cast %188 : vector<1x64x128xf32> to vector<64x128xf32>
    %cst_241 = arith.constant dense<0.000000e+00> : vector<1x128xf32>
    %190 = tpu.matmul %187, %189, %cst_241 {dimension_numbers = #tpu.dot_dimension_numbers<[1], [0], [0], [1], [0, 0, 1, 1], [], []>} : vector<1x64xf32>, vector<64x128xf32>, vector<1x128xf32> -> vector<1x128xf32>
    %191 = arith.addf %172, %190 : vector<1x128xf32>
    %cst_242 = arith.constant 0.000000e+00 : f32
    %192 = vector.broadcast %cst_242 : f32 to vector<1x64xf32>
    %c0_243 = arith.constant 0 : index
    %c0_244 = arith.constant 0 : index
    %c6_245 = arith.constant 6 : index
    %c0_246 = arith.constant 0 : index
    %193 = vector.load %arg13[%c0_243, %c0_244, %c6_245, %c0_246] : memref<1x8x8x64xf32, #tpu.memory_space<vmem>>, vector<1x1x1x64xf32>
    %194 = vector.shape_cast %193 : vector<1x1x1x64xf32> to vector<1x64xf32>
    %c0_247 = arith.constant 0 : index
    %c0_248 = arith.constant 0 : index
    %c7_249 = arith.constant 7 : index
    %c0_250 = arith.constant 0 : index
    %195 = vector.load %arg13[%c0_247, %c0_248, %c7_249, %c0_250] : memref<1x8x8x64xf32, #tpu.memory_space<vmem>>, vector<1x1x1x64xf32>
    %196 = vector.shape_cast %195 : vector<1x1x1x64xf32> to vector<1x64xf32>
    %197 = arith.maximumf %194, %196 : vector<1x64xf32>
    %c0_251 = arith.constant 0 : index
    %c1_252 = arith.constant 1 : index
    %c6_253 = arith.constant 6 : index
    %c0_254 = arith.constant 0 : index
    %198 = vector.load %arg13[%c0_251, %c1_252, %c6_253, %c0_254] : memref<1x8x8x64xf32, #tpu.memory_space<vmem>>, vector<1x1x1x64xf32>
    %199 = vector.shape_cast %198 : vector<1x1x1x64xf32> to vector<1x64xf32>
    %c0_255 = arith.constant 0 : index
    %c1_256 = arith.constant 1 : index
    %c7_257 = arith.constant 7 : index
    %c0_258 = arith.constant 0 : index
    %200 = vector.load %arg13[%c0_255, %c1_256, %c7_257, %c0_258] : memref<1x8x8x64xf32, #tpu.memory_space<vmem>>, vector<1x1x1x64xf32>
    %201 = vector.shape_cast %200 : vector<1x1x1x64xf32> to vector<1x64xf32>
    %202 = arith.maximumf %199, %201 : vector<1x64xf32>
    %203 = arith.maximumf %197, %202 : vector<1x64xf32>
    %204 = arith.addf %192, %203 : vector<1x64xf32>
    %cst_259 = arith.constant 1.000000e+00 : f32
    %205 = vector.broadcast %cst_259 : f32 to vector<1x64xf32>
    %206 = arith.mulf %204, %205 : vector<1x64xf32>
    %c3_260 = arith.constant 3 : index
    %c0_261 = arith.constant 0 : index
    %c0_262 = arith.constant 0 : index
    %207 = vector.load %arg6[%c3_260, %c0_261, %c0_262] : memref<16x64x128xf32, #tpu.memory_space<vmem>>, vector<1x64x128xf32>
    %208 = vector.shape_cast %207 : vector<1x64x128xf32> to vector<64x128xf32>
    %cst_263 = arith.constant dense<0.000000e+00> : vector<1x128xf32>
    %209 = tpu.matmul %206, %208, %cst_263 {dimension_numbers = #tpu.dot_dimension_numbers<[1], [0], [0], [1], [0, 0, 1, 1], [], []>} : vector<1x64xf32>, vector<64x128xf32>, vector<1x128xf32> -> vector<1x128xf32>
    %210 = arith.addf %191, %209 : vector<1x128xf32>
    %cst_264 = arith.constant 0.000000e+00 : f32
    %211 = vector.broadcast %cst_264 : f32 to vector<1x64xf32>
    %c0_265 = arith.constant 0 : index
    %c2_266 = arith.constant 2 : index
    %c0_267 = arith.constant 0 : index
    %c0_268 = arith.constant 0 : index
    %212 = vector.load %arg13[%c0_265, %c2_266, %c0_267, %c0_268] : memref<1x8x8x64xf32, #tpu.memory_space<vmem>>, vector<1x1x1x64xf32>
    %213 = vector.shape_cast %212 : vector<1x1x1x64xf32> to vector<1x64xf32>
    %c0_269 = arith.constant 0 : index
    %c2_270 = arith.constant 2 : index
    %c1_271 = arith.constant 1 : index
    %c0_272 = arith.constant 0 : index
    %214 = vector.load %arg13[%c0_269, %c2_270, %c1_271, %c0_272] : memref<1x8x8x64xf32, #tpu.memory_space<vmem>>, vector<1x1x1x64xf32>
    %215 = vector.shape_cast %214 : vector<1x1x1x64xf32> to vector<1x64xf32>
    %216 = arith.maximumf %213, %215 : vector<1x64xf32>
    %c0_273 = arith.constant 0 : index
    %c3_274 = arith.constant 3 : index
    %c0_275 = arith.constant 0 : index
    %c0_276 = arith.constant 0 : index
    %217 = vector.load %arg13[%c0_273, %c3_274, %c0_275, %c0_276] : memref<1x8x8x64xf32, #tpu.memory_space<vmem>>, vector<1x1x1x64xf32>
    %218 = vector.shape_cast %217 : vector<1x1x1x64xf32> to vector<1x64xf32>
    %c0_277 = arith.constant 0 : index
    %c3_278 = arith.constant 3 : index
    %c1_279 = arith.constant 1 : index
    %c0_280 = arith.constant 0 : index
    %219 = vector.load %arg13[%c0_277, %c3_278, %c1_279, %c0_280] : memref<1x8x8x64xf32, #tpu.memory_space<vmem>>, vector<1x1x1x64xf32>
    %220 = vector.shape_cast %219 : vector<1x1x1x64xf32> to vector<1x64xf32>
    %221 = arith.maximumf %218, %220 : vector<1x64xf32>
    %222 = arith.maximumf %216, %221 : vector<1x64xf32>
    %223 = arith.addf %211, %222 : vector<1x64xf32>
    %cst_281 = arith.constant 1.000000e+00 : f32
    %224 = vector.broadcast %cst_281 : f32 to vector<1x64xf32>
    %225 = arith.mulf %223, %224 : vector<1x64xf32>
    %c4_282 = arith.constant 4 : index
    %c0_283 = arith.constant 0 : index
    %c0_284 = arith.constant 0 : index
    %226 = vector.load %arg6[%c4_282, %c0_283, %c0_284] : memref<16x64x128xf32, #tpu.memory_space<vmem>>, vector<1x64x128xf32>
    %227 = vector.shape_cast %226 : vector<1x64x128xf32> to vector<64x128xf32>
    %cst_285 = arith.constant dense<0.000000e+00> : vector<1x128xf32>
    %228 = tpu.matmul %225, %227, %cst_285 {dimension_numbers = #tpu.dot_dimension_numbers<[1], [0], [0], [1], [0, 0, 1, 1], [], []>} : vector<1x64xf32>, vector<64x128xf32>, vector<1x128xf32> -> vector<1x128xf32>
    %229 = arith.addf %210, %228 : vector<1x128xf32>
    %cst_286 = arith.constant 0.000000e+00 : f32
    %230 = vector.broadcast %cst_286 : f32 to vector<1x64xf32>
    %c0_287 = arith.constant 0 : index
    %c2_288 = arith.constant 2 : index
    %c2_289 = arith.constant 2 : index
    %c0_290 = arith.constant 0 : index
    %231 = vector.load %arg13[%c0_287, %c2_288, %c2_289, %c0_290] : memref<1x8x8x64xf32, #tpu.memory_space<vmem>>, vector<1x1x1x64xf32>
    %232 = vector.shape_cast %231 : vector<1x1x1x64xf32> to vector<1x64xf32>
    %c0_291 = arith.constant 0 : index
    %c2_292 = arith.constant 2 : index
    %c3_293 = arith.constant 3 : index
    %c0_294 = arith.constant 0 : index
    %233 = vector.load %arg13[%c0_291, %c2_292, %c3_293, %c0_294] : memref<1x8x8x64xf32, #tpu.memory_space<vmem>>, vector<1x1x1x64xf32>
    %234 = vector.shape_cast %233 : vector<1x1x1x64xf32> to vector<1x64xf32>
    %235 = arith.maximumf %232, %234 : vector<1x64xf32>
    %c0_295 = arith.constant 0 : index
    %c3_296 = arith.constant 3 : index
    %c2_297 = arith.constant 2 : index
    %c0_298 = arith.constant 0 : index
    %236 = vector.load %arg13[%c0_295, %c3_296, %c2_297, %c0_298] : memref<1x8x8x64xf32, #tpu.memory_space<vmem>>, vector<1x1x1x64xf32>
    %237 = vector.shape_cast %236 : vector<1x1x1x64xf32> to vector<1x64xf32>
    %c0_299 = arith.constant 0 : index
    %c3_300 = arith.constant 3 : index
    %c3_301 = arith.constant 3 : index
    %c0_302 = arith.constant 0 : index
    %238 = vector.load %arg13[%c0_299, %c3_300, %c3_301, %c0_302] : memref<1x8x8x64xf32, #tpu.memory_space<vmem>>, vector<1x1x1x64xf32>
    %239 = vector.shape_cast %238 : vector<1x1x1x64xf32> to vector<1x64xf32>
    %240 = arith.maximumf %237, %239 : vector<1x64xf32>
    %241 = arith.maximumf %235, %240 : vector<1x64xf32>
    %242 = arith.addf %230, %241 : vector<1x64xf32>
    %cst_303 = arith.constant 1.000000e+00 : f32
    %243 = vector.broadcast %cst_303 : f32 to vector<1x64xf32>
    %244 = arith.mulf %242, %243 : vector<1x64xf32>
    %c5_304 = arith.constant 5 : index
    %c0_305 = arith.constant 0 : index
    %c0_306 = arith.constant 0 : index
    %245 = vector.load %arg6[%c5_304, %c0_305, %c0_306] : memref<16x64x128xf32, #tpu.memory_space<vmem>>, vector<1x64x128xf32>
    %246 = vector.shape_cast %245 : vector<1x64x128xf32> to vector<64x128xf32>
    %cst_307 = arith.constant dense<0.000000e+00> : vector<1x128xf32>
    %247 = tpu.matmul %244, %246, %cst_307 {dimension_numbers = #tpu.dot_dimension_numbers<[1], [0], [0], [1], [0, 0, 1, 1], [], []>} : vector<1x64xf32>, vector<64x128xf32>, vector<1x128xf32> -> vector<1x128xf32>
    %248 = arith.addf %229, %247 : vector<1x128xf32>
    %cst_308 = arith.constant 0.000000e+00 : f32
    %249 = vector.broadcast %cst_308 : f32 to vector<1x64xf32>
    %c0_309 = arith.constant 0 : index
    %c2_310 = arith.constant 2 : index
    %c4_311 = arith.constant 4 : index
    %c0_312 = arith.constant 0 : index
    %250 = vector.load %arg13[%c0_309, %c2_310, %c4_311, %c0_312] : memref<1x8x8x64xf32, #tpu.memory_space<vmem>>, vector<1x1x1x64xf32>
    %251 = vector.shape_cast %250 : vector<1x1x1x64xf32> to vector<1x64xf32>
    %c0_313 = arith.constant 0 : index
    %c2_314 = arith.constant 2 : index
    %c5_315 = arith.constant 5 : index
    %c0_316 = arith.constant 0 : index
    %252 = vector.load %arg13[%c0_313, %c2_314, %c5_315, %c0_316] : memref<1x8x8x64xf32, #tpu.memory_space<vmem>>, vector<1x1x1x64xf32>
    %253 = vector.shape_cast %252 : vector<1x1x1x64xf32> to vector<1x64xf32>
    %254 = arith.maximumf %251, %253 : vector<1x64xf32>
    %c0_317 = arith.constant 0 : index
    %c3_318 = arith.constant 3 : index
    %c4_319 = arith.constant 4 : index
    %c0_320 = arith.constant 0 : index
    %255 = vector.load %arg13[%c0_317, %c3_318, %c4_319, %c0_320] : memref<1x8x8x64xf32, #tpu.memory_space<vmem>>, vector<1x1x1x64xf32>
    %256 = vector.shape_cast %255 : vector<1x1x1x64xf32> to vector<1x64xf32>
    %c0_321 = arith.constant 0 : index
    %c3_322 = arith.constant 3 : index
    %c5_323 = arith.constant 5 : index
    %c0_324 = arith.constant 0 : index
    %257 = vector.load %arg13[%c0_321, %c3_322, %c5_323, %c0_324] : memref<1x8x8x64xf32, #tpu.memory_space<vmem>>, vector<1x1x1x64xf32>
    %258 = vector.shape_cast %257 : vector<1x1x1x64xf32> to vector<1x64xf32>
    %259 = arith.maximumf %256, %258 : vector<1x64xf32>
    %260 = arith.maximumf %254, %259 : vector<1x64xf32>
    %261 = arith.addf %249, %260 : vector<1x64xf32>
    %cst_325 = arith.constant 1.000000e+00 : f32
    %262 = vector.broadcast %cst_325 : f32 to vector<1x64xf32>
    %263 = arith.mulf %261, %262 : vector<1x64xf32>
    %c6_326 = arith.constant 6 : index
    %c0_327 = arith.constant 0 : index
    %c0_328 = arith.constant 0 : index
    %264 = vector.load %arg6[%c6_326, %c0_327, %c0_328] : memref<16x64x128xf32, #tpu.memory_space<vmem>>, vector<1x64x128xf32>
    %265 = vector.shape_cast %264 : vector<1x64x128xf32> to vector<64x128xf32>
    %cst_329 = arith.constant dense<0.000000e+00> : vector<1x128xf32>
    %266 = tpu.matmul %263, %265, %cst_329 {dimension_numbers = #tpu.dot_dimension_numbers<[1], [0], [0], [1], [0, 0, 1, 1], [], []>} : vector<1x64xf32>, vector<64x128xf32>, vector<1x128xf32> -> vector<1x128xf32>
    %267 = arith.addf %248, %266 : vector<1x128xf32>
    %cst_330 = arith.constant 0.000000e+00 : f32
    %268 = vector.broadcast %cst_330 : f32 to vector<1x64xf32>
    %c0_331 = arith.constant 0 : index
    %c2_332 = arith.constant 2 : index
    %c6_333 = arith.constant 6 : index
    %c0_334 = arith.constant 0 : index
    %269 = vector.load %arg13[%c0_331, %c2_332, %c6_333, %c0_334] : memref<1x8x8x64xf32, #tpu.memory_space<vmem>>, vector<1x1x1x64xf32>
    %270 = vector.shape_cast %269 : vector<1x1x1x64xf32> to vector<1x64xf32>
    %c0_335 = arith.constant 0 : index
    %c2_336 = arith.constant 2 : index
    %c7_337 = arith.constant 7 : index
    %c0_338 = arith.constant 0 : index
    %271 = vector.load %arg13[%c0_335, %c2_336, %c7_337, %c0_338] : memref<1x8x8x64xf32, #tpu.memory_space<vmem>>, vector<1x1x1x64xf32>
    %272 = vector.shape_cast %271 : vector<1x1x1x64xf32> to vector<1x64xf32>
    %273 = arith.maximumf %270, %272 : vector<1x64xf32>
    %c0_339 = arith.constant 0 : index
    %c3_340 = arith.constant 3 : index
    %c6_341 = arith.constant 6 : index
    %c0_342 = arith.constant 0 : index
    %274 = vector.load %arg13[%c0_339, %c3_340, %c6_341, %c0_342] : memref<1x8x8x64xf32, #tpu.memory_space<vmem>>, vector<1x1x1x64xf32>
    %275 = vector.shape_cast %274 : vector<1x1x1x64xf32> to vector<1x64xf32>
    %c0_343 = arith.constant 0 : index
    %c3_344 = arith.constant 3 : index
    %c7_345 = arith.constant 7 : index
    %c0_346 = arith.constant 0 : index
    %276 = vector.load %arg13[%c0_343, %c3_344, %c7_345, %c0_346] : memref<1x8x8x64xf32, #tpu.memory_space<vmem>>, vector<1x1x1x64xf32>
    %277 = vector.shape_cast %276 : vector<1x1x1x64xf32> to vector<1x64xf32>
    %278 = arith.maximumf %275, %277 : vector<1x64xf32>
    %279 = arith.maximumf %273, %278 : vector<1x64xf32>
    %280 = arith.addf %268, %279 : vector<1x64xf32>
    %cst_347 = arith.constant 1.000000e+00 : f32
    %281 = vector.broadcast %cst_347 : f32 to vector<1x64xf32>
    %282 = arith.mulf %280, %281 : vector<1x64xf32>
    %c7_348 = arith.constant 7 : index
    %c0_349 = arith.constant 0 : index
    %c0_350 = arith.constant 0 : index
    %283 = vector.load %arg6[%c7_348, %c0_349, %c0_350] : memref<16x64x128xf32, #tpu.memory_space<vmem>>, vector<1x64x128xf32>
    %284 = vector.shape_cast %283 : vector<1x64x128xf32> to vector<64x128xf32>
    %cst_351 = arith.constant dense<0.000000e+00> : vector<1x128xf32>
    %285 = tpu.matmul %282, %284, %cst_351 {dimension_numbers = #tpu.dot_dimension_numbers<[1], [0], [0], [1], [0, 0, 1, 1], [], []>} : vector<1x64xf32>, vector<64x128xf32>, vector<1x128xf32> -> vector<1x128xf32>
    %286 = arith.addf %267, %285 : vector<1x128xf32>
    %cst_352 = arith.constant 0.000000e+00 : f32
    %287 = vector.broadcast %cst_352 : f32 to vector<1x64xf32>
    %c0_353 = arith.constant 0 : index
    %c4_354 = arith.constant 4 : index
    %c0_355 = arith.constant 0 : index
    %c0_356 = arith.constant 0 : index
    %288 = vector.load %arg13[%c0_353, %c4_354, %c0_355, %c0_356] : memref<1x8x8x64xf32, #tpu.memory_space<vmem>>, vector<1x1x1x64xf32>
    %289 = vector.shape_cast %288 : vector<1x1x1x64xf32> to vector<1x64xf32>
    %c0_357 = arith.constant 0 : index
    %c4_358 = arith.constant 4 : index
    %c1_359 = arith.constant 1 : index
    %c0_360 = arith.constant 0 : index
    %290 = vector.load %arg13[%c0_357, %c4_358, %c1_359, %c0_360] : memref<1x8x8x64xf32, #tpu.memory_space<vmem>>, vector<1x1x1x64xf32>
    %291 = vector.shape_cast %290 : vector<1x1x1x64xf32> to vector<1x64xf32>
    %292 = arith.maximumf %289, %291 : vector<1x64xf32>
    %c0_361 = arith.constant 0 : index
    %c5_362 = arith.constant 5 : index
    %c0_363 = arith.constant 0 : index
    %c0_364 = arith.constant 0 : index
    %293 = vector.load %arg13[%c0_361, %c5_362, %c0_363, %c0_364] : memref<1x8x8x64xf32, #tpu.memory_space<vmem>>, vector<1x1x1x64xf32>
    %294 = vector.shape_cast %293 : vector<1x1x1x64xf32> to vector<1x64xf32>
    %c0_365 = arith.constant 0 : index
    %c5_366 = arith.constant 5 : index
    %c1_367 = arith.constant 1 : index
    %c0_368 = arith.constant 0 : index
    %295 = vector.load %arg13[%c0_365, %c5_366, %c1_367, %c0_368] : memref<1x8x8x64xf32, #tpu.memory_space<vmem>>, vector<1x1x1x64xf32>
    %296 = vector.shape_cast %295 : vector<1x1x1x64xf32> to vector<1x64xf32>
    %297 = arith.maximumf %294, %296 : vector<1x64xf32>
    %298 = arith.maximumf %292, %297 : vector<1x64xf32>
    %299 = arith.addf %287, %298 : vector<1x64xf32>
    %cst_369 = arith.constant 1.000000e+00 : f32
    %300 = vector.broadcast %cst_369 : f32 to vector<1x64xf32>
    %301 = arith.mulf %299, %300 : vector<1x64xf32>
    %c8_370 = arith.constant 8 : index
    %c0_371 = arith.constant 0 : index
    %c0_372 = arith.constant 0 : index
    %302 = vector.load %arg6[%c8_370, %c0_371, %c0_372] : memref<16x64x128xf32, #tpu.memory_space<vmem>>, vector<1x64x128xf32>
    %303 = vector.shape_cast %302 : vector<1x64x128xf32> to vector<64x128xf32>
    %cst_373 = arith.constant dense<0.000000e+00> : vector<1x128xf32>
    %304 = tpu.matmul %301, %303, %cst_373 {dimension_numbers = #tpu.dot_dimension_numbers<[1], [0], [0], [1], [0, 0, 1, 1], [], []>} : vector<1x64xf32>, vector<64x128xf32>, vector<1x128xf32> -> vector<1x128xf32>
    %305 = arith.addf %286, %304 : vector<1x128xf32>
    %cst_374 = arith.constant 0.000000e+00 : f32
    %306 = vector.broadcast %cst_374 : f32 to vector<1x64xf32>
    %c0_375 = arith.constant 0 : index
    %c4_376 = arith.constant 4 : index
    %c2_377 = arith.constant 2 : index
    %c0_378 = arith.constant 0 : index
    %307 = vector.load %arg13[%c0_375, %c4_376, %c2_377, %c0_378] : memref<1x8x8x64xf32, #tpu.memory_space<vmem>>, vector<1x1x1x64xf32>
    %308 = vector.shape_cast %307 : vector<1x1x1x64xf32> to vector<1x64xf32>
    %c0_379 = arith.constant 0 : index
    %c4_380 = arith.constant 4 : index
    %c3_381 = arith.constant 3 : index
    %c0_382 = arith.constant 0 : index
    %309 = vector.load %arg13[%c0_379, %c4_380, %c3_381, %c0_382] : memref<1x8x8x64xf32, #tpu.memory_space<vmem>>, vector<1x1x1x64xf32>
    %310 = vector.shape_cast %309 : vector<1x1x1x64xf32> to vector<1x64xf32>
    %311 = arith.maximumf %308, %310 : vector<1x64xf32>
    %c0_383 = arith.constant 0 : index
    %c5_384 = arith.constant 5 : index
    %c2_385 = arith.constant 2 : index
    %c0_386 = arith.constant 0 : index
    %312 = vector.load %arg13[%c0_383, %c5_384, %c2_385, %c0_386] : memref<1x8x8x64xf32, #tpu.memory_space<vmem>>, vector<1x1x1x64xf32>
    %313 = vector.shape_cast %312 : vector<1x1x1x64xf32> to vector<1x64xf32>
    %c0_387 = arith.constant 0 : index
    %c5_388 = arith.constant 5 : index
    %c3_389 = arith.constant 3 : index
    %c0_390 = arith.constant 0 : index
    %314 = vector.load %arg13[%c0_387, %c5_388, %c3_389, %c0_390] : memref<1x8x8x64xf32, #tpu.memory_space<vmem>>, vector<1x1x1x64xf32>
    %315 = vector.shape_cast %314 : vector<1x1x1x64xf32> to vector<1x64xf32>
    %316 = arith.maximumf %313, %315 : vector<1x64xf32>
    %317 = arith.maximumf %311, %316 : vector<1x64xf32>
    %318 = arith.addf %306, %317 : vector<1x64xf32>
    %cst_391 = arith.constant 1.000000e+00 : f32
    %319 = vector.broadcast %cst_391 : f32 to vector<1x64xf32>
    %320 = arith.mulf %318, %319 : vector<1x64xf32>
    %c9 = arith.constant 9 : index
    %c0_392 = arith.constant 0 : index
    %c0_393 = arith.constant 0 : index
    %321 = vector.load %arg6[%c9, %c0_392, %c0_393] : memref<16x64x128xf32, #tpu.memory_space<vmem>>, vector<1x64x128xf32>
    %322 = vector.shape_cast %321 : vector<1x64x128xf32> to vector<64x128xf32>
    %cst_394 = arith.constant dense<0.000000e+00> : vector<1x128xf32>
    %323 = tpu.matmul %320, %322, %cst_394 {dimension_numbers = #tpu.dot_dimension_numbers<[1], [0], [0], [1], [0, 0, 1, 1], [], []>} : vector<1x64xf32>, vector<64x128xf32>, vector<1x128xf32> -> vector<1x128xf32>
    %324 = arith.addf %305, %323 : vector<1x128xf32>
    %cst_395 = arith.constant 0.000000e+00 : f32
    %325 = vector.broadcast %cst_395 : f32 to vector<1x64xf32>
    %c0_396 = arith.constant 0 : index
    %c4_397 = arith.constant 4 : index
    %c4_398 = arith.constant 4 : index
    %c0_399 = arith.constant 0 : index
    %326 = vector.load %arg13[%c0_396, %c4_397, %c4_398, %c0_399] : memref<1x8x8x64xf32, #tpu.memory_space<vmem>>, vector<1x1x1x64xf32>
    %327 = vector.shape_cast %326 : vector<1x1x1x64xf32> to vector<1x64xf32>
    %c0_400 = arith.constant 0 : index
    %c4_401 = arith.constant 4 : index
    %c5_402 = arith.constant 5 : index
    %c0_403 = arith.constant 0 : index
    %328 = vector.load %arg13[%c0_400, %c4_401, %c5_402, %c0_403] : memref<1x8x8x64xf32, #tpu.memory_space<vmem>>, vector<1x1x1x64xf32>
    %329 = vector.shape_cast %328 : vector<1x1x1x64xf32> to vector<1x64xf32>
    %330 = arith.maximumf %327, %329 : vector<1x64xf32>
    %c0_404 = arith.constant 0 : index
    %c5_405 = arith.constant 5 : index
    %c4_406 = arith.constant 4 : index
    %c0_407 = arith.constant 0 : index
    %331 = vector.load %arg13[%c0_404, %c5_405, %c4_406, %c0_407] : memref<1x8x8x64xf32, #tpu.memory_space<vmem>>, vector<1x1x1x64xf32>
    %332 = vector.shape_cast %331 : vector<1x1x1x64xf32> to vector<1x64xf32>
    %c0_408 = arith.constant 0 : index
    %c5_409 = arith.constant 5 : index
    %c5_410 = arith.constant 5 : index
    %c0_411 = arith.constant 0 : index
    %333 = vector.load %arg13[%c0_408, %c5_409, %c5_410, %c0_411] : memref<1x8x8x64xf32, #tpu.memory_space<vmem>>, vector<1x1x1x64xf32>
    %334 = vector.shape_cast %333 : vector<1x1x1x64xf32> to vector<1x64xf32>
    %335 = arith.maximumf %332, %334 : vector<1x64xf32>
    %336 = arith.maximumf %330, %335 : vector<1x64xf32>
    %337 = arith.addf %325, %336 : vector<1x64xf32>
    %cst_412 = arith.constant 1.000000e+00 : f32
    %338 = vector.broadcast %cst_412 : f32 to vector<1x64xf32>
    %339 = arith.mulf %337, %338 : vector<1x64xf32>
    %c10 = arith.constant 10 : index
    %c0_413 = arith.constant 0 : index
    %c0_414 = arith.constant 0 : index
    %340 = vector.load %arg6[%c10, %c0_413, %c0_414] : memref<16x64x128xf32, #tpu.memory_space<vmem>>, vector<1x64x128xf32>
    %341 = vector.shape_cast %340 : vector<1x64x128xf32> to vector<64x128xf32>
    %cst_415 = arith.constant dense<0.000000e+00> : vector<1x128xf32>
    %342 = tpu.matmul %339, %341, %cst_415 {dimension_numbers = #tpu.dot_dimension_numbers<[1], [0], [0], [1], [0, 0, 1, 1], [], []>} : vector<1x64xf32>, vector<64x128xf32>, vector<1x128xf32> -> vector<1x128xf32>
    %343 = arith.addf %324, %342 : vector<1x128xf32>
    %cst_416 = arith.constant 0.000000e+00 : f32
    %344 = vector.broadcast %cst_416 : f32 to vector<1x64xf32>
    %c0_417 = arith.constant 0 : index
    %c4_418 = arith.constant 4 : index
    %c6_419 = arith.constant 6 : index
    %c0_420 = arith.constant 0 : index
    %345 = vector.load %arg13[%c0_417, %c4_418, %c6_419, %c0_420] : memref<1x8x8x64xf32, #tpu.memory_space<vmem>>, vector<1x1x1x64xf32>
    %346 = vector.shape_cast %345 : vector<1x1x1x64xf32> to vector<1x64xf32>
    %c0_421 = arith.constant 0 : index
    %c4_422 = arith.constant 4 : index
    %c7_423 = arith.constant 7 : index
    %c0_424 = arith.constant 0 : index
    %347 = vector.load %arg13[%c0_421, %c4_422, %c7_423, %c0_424] : memref<1x8x8x64xf32, #tpu.memory_space<vmem>>, vector<1x1x1x64xf32>
    %348 = vector.shape_cast %347 : vector<1x1x1x64xf32> to vector<1x64xf32>
    %349 = arith.maximumf %346, %348 : vector<1x64xf32>
    %c0_425 = arith.constant 0 : index
    %c5_426 = arith.constant 5 : index
    %c6_427 = arith.constant 6 : index
    %c0_428 = arith.constant 0 : index
    %350 = vector.load %arg13[%c0_425, %c5_426, %c6_427, %c0_428] : memref<1x8x8x64xf32, #tpu.memory_space<vmem>>, vector<1x1x1x64xf32>
    %351 = vector.shape_cast %350 : vector<1x1x1x64xf32> to vector<1x64xf32>
    %c0_429 = arith.constant 0 : index
    %c5_430 = arith.constant 5 : index
    %c7_431 = arith.constant 7 : index
    %c0_432 = arith.constant 0 : index
    %352 = vector.load %arg13[%c0_429, %c5_430, %c7_431, %c0_432] : memref<1x8x8x64xf32, #tpu.memory_space<vmem>>, vector<1x1x1x64xf32>
    %353 = vector.shape_cast %352 : vector<1x1x1x64xf32> to vector<1x64xf32>
    %354 = arith.maximumf %351, %353 : vector<1x64xf32>
    %355 = arith.maximumf %349, %354 : vector<1x64xf32>
    %356 = arith.addf %344, %355 : vector<1x64xf32>
    %cst_433 = arith.constant 1.000000e+00 : f32
    %357 = vector.broadcast %cst_433 : f32 to vector<1x64xf32>
    %358 = arith.mulf %356, %357 : vector<1x64xf32>
    %c11 = arith.constant 11 : index
    %c0_434 = arith.constant 0 : index
    %c0_435 = arith.constant 0 : index
    %359 = vector.load %arg6[%c11, %c0_434, %c0_435] : memref<16x64x128xf32, #tpu.memory_space<vmem>>, vector<1x64x128xf32>
    %360 = vector.shape_cast %359 : vector<1x64x128xf32> to vector<64x128xf32>
    %cst_436 = arith.constant dense<0.000000e+00> : vector<1x128xf32>
    %361 = tpu.matmul %358, %360, %cst_436 {dimension_numbers = #tpu.dot_dimension_numbers<[1], [0], [0], [1], [0, 0, 1, 1], [], []>} : vector<1x64xf32>, vector<64x128xf32>, vector<1x128xf32> -> vector<1x128xf32>
    %362 = arith.addf %343, %361 : vector<1x128xf32>
    %cst_437 = arith.constant 0.000000e+00 : f32
    %363 = vector.broadcast %cst_437 : f32 to vector<1x64xf32>
    %c0_438 = arith.constant 0 : index
    %c6_439 = arith.constant 6 : index
    %c0_440 = arith.constant 0 : index
    %c0_441 = arith.constant 0 : index
    %364 = vector.load %arg13[%c0_438, %c6_439, %c0_440, %c0_441] : memref<1x8x8x64xf32, #tpu.memory_space<vmem>>, vector<1x1x1x64xf32>
    %365 = vector.shape_cast %364 : vector<1x1x1x64xf32> to vector<1x64xf32>
    %c0_442 = arith.constant 0 : index
    %c6_443 = arith.constant 6 : index
    %c1_444 = arith.constant 1 : index
    %c0_445 = arith.constant 0 : index
    %366 = vector.load %arg13[%c0_442, %c6_443, %c1_444, %c0_445] : memref<1x8x8x64xf32, #tpu.memory_space<vmem>>, vector<1x1x1x64xf32>
    %367 = vector.shape_cast %366 : vector<1x1x1x64xf32> to vector<1x64xf32>
    %368 = arith.maximumf %365, %367 : vector<1x64xf32>
    %c0_446 = arith.constant 0 : index
    %c7_447 = arith.constant 7 : index
    %c0_448 = arith.constant 0 : index
    %c0_449 = arith.constant 0 : index
    %369 = vector.load %arg13[%c0_446, %c7_447, %c0_448, %c0_449] : memref<1x8x8x64xf32, #tpu.memory_space<vmem>>, vector<1x1x1x64xf32>
    %370 = vector.shape_cast %369 : vector<1x1x1x64xf32> to vector<1x64xf32>
    %c0_450 = arith.constant 0 : index
    %c7_451 = arith.constant 7 : index
    %c1_452 = arith.constant 1 : index
    %c0_453 = arith.constant 0 : index
    %371 = vector.load %arg13[%c0_450, %c7_451, %c1_452, %c0_453] : memref<1x8x8x64xf32, #tpu.memory_space<vmem>>, vector<1x1x1x64xf32>
    %372 = vector.shape_cast %371 : vector<1x1x1x64xf32> to vector<1x64xf32>
    %373 = arith.maximumf %370, %372 : vector<1x64xf32>
    %374 = arith.maximumf %368, %373 : vector<1x64xf32>
    %375 = arith.addf %363, %374 : vector<1x64xf32>
    %cst_454 = arith.constant 1.000000e+00 : f32
    %376 = vector.broadcast %cst_454 : f32 to vector<1x64xf32>
    %377 = arith.mulf %375, %376 : vector<1x64xf32>
    %c12 = arith.constant 12 : index
    %c0_455 = arith.constant 0 : index
    %c0_456 = arith.constant 0 : index
    %378 = vector.load %arg6[%c12, %c0_455, %c0_456] : memref<16x64x128xf32, #tpu.memory_space<vmem>>, vector<1x64x128xf32>
    %379 = vector.shape_cast %378 : vector<1x64x128xf32> to vector<64x128xf32>
    %cst_457 = arith.constant dense<0.000000e+00> : vector<1x128xf32>
    %380 = tpu.matmul %377, %379, %cst_457 {dimension_numbers = #tpu.dot_dimension_numbers<[1], [0], [0], [1], [0, 0, 1, 1], [], []>} : vector<1x64xf32>, vector<64x128xf32>, vector<1x128xf32> -> vector<1x128xf32>
    %381 = arith.addf %362, %380 : vector<1x128xf32>
    %cst_458 = arith.constant 0.000000e+00 : f32
    %382 = vector.broadcast %cst_458 : f32 to vector<1x64xf32>
    %c0_459 = arith.constant 0 : index
    %c6_460 = arith.constant 6 : index
    %c2_461 = arith.constant 2 : index
    %c0_462 = arith.constant 0 : index
    %383 = vector.load %arg13[%c0_459, %c6_460, %c2_461, %c0_462] : memref<1x8x8x64xf32, #tpu.memory_space<vmem>>, vector<1x1x1x64xf32>
    %384 = vector.shape_cast %383 : vector<1x1x1x64xf32> to vector<1x64xf32>
    %c0_463 = arith.constant 0 : index
    %c6_464 = arith.constant 6 : index
    %c3_465 = arith.constant 3 : index
    %c0_466 = arith.constant 0 : index
    %385 = vector.load %arg13[%c0_463, %c6_464, %c3_465, %c0_466] : memref<1x8x8x64xf32, #tpu.memory_space<vmem>>, vector<1x1x1x64xf32>
    %386 = vector.shape_cast %385 : vector<1x1x1x64xf32> to vector<1x64xf32>
    %387 = arith.maximumf %384, %386 : vector<1x64xf32>
    %c0_467 = arith.constant 0 : index
    %c7_468 = arith.constant 7 : index
    %c2_469 = arith.constant 2 : index
    %c0_470 = arith.constant 0 : index
    %388 = vector.load %arg13[%c0_467, %c7_468, %c2_469, %c0_470] : memref<1x8x8x64xf32, #tpu.memory_space<vmem>>, vector<1x1x1x64xf32>
    %389 = vector.shape_cast %388 : vector<1x1x1x64xf32> to vector<1x64xf32>
    %c0_471 = arith.constant 0 : index
    %c7_472 = arith.constant 7 : index
    %c3_473 = arith.constant 3 : index
    %c0_474 = arith.constant 0 : index
    %390 = vector.load %arg13[%c0_471, %c7_472, %c3_473, %c0_474] : memref<1x8x8x64xf32, #tpu.memory_space<vmem>>, vector<1x1x1x64xf32>
    %391 = vector.shape_cast %390 : vector<1x1x1x64xf32> to vector<1x64xf32>
    %392 = arith.maximumf %389, %391 : vector<1x64xf32>
    %393 = arith.maximumf %387, %392 : vector<1x64xf32>
    %394 = arith.addf %382, %393 : vector<1x64xf32>
    %cst_475 = arith.constant 1.000000e+00 : f32
    %395 = vector.broadcast %cst_475 : f32 to vector<1x64xf32>
    %396 = arith.mulf %394, %395 : vector<1x64xf32>
    %c13 = arith.constant 13 : index
    %c0_476 = arith.constant 0 : index
    %c0_477 = arith.constant 0 : index
    %397 = vector.load %arg6[%c13, %c0_476, %c0_477] : memref<16x64x128xf32, #tpu.memory_space<vmem>>, vector<1x64x128xf32>
    %398 = vector.shape_cast %397 : vector<1x64x128xf32> to vector<64x128xf32>
    %cst_478 = arith.constant dense<0.000000e+00> : vector<1x128xf32>
    %399 = tpu.matmul %396, %398, %cst_478 {dimension_numbers = #tpu.dot_dimension_numbers<[1], [0], [0], [1], [0, 0, 1, 1], [], []>} : vector<1x64xf32>, vector<64x128xf32>, vector<1x128xf32> -> vector<1x128xf32>
    %400 = arith.addf %381, %399 : vector<1x128xf32>
    %cst_479 = arith.constant 0.000000e+00 : f32
    %401 = vector.broadcast %cst_479 : f32 to vector<1x64xf32>
    %c0_480 = arith.constant 0 : index
    %c6_481 = arith.constant 6 : index
    %c4_482 = arith.constant 4 : index
    %c0_483 = arith.constant 0 : index
    %402 = vector.load %arg13[%c0_480, %c6_481, %c4_482, %c0_483] : memref<1x8x8x64xf32, #tpu.memory_space<vmem>>, vector<1x1x1x64xf32>
    %403 = vector.shape_cast %402 : vector<1x1x1x64xf32> to vector<1x64xf32>
    %c0_484 = arith.constant 0 : index
    %c6_485 = arith.constant 6 : index
    %c5_486 = arith.constant 5 : index
    %c0_487 = arith.constant 0 : index
    %404 = vector.load %arg13[%c0_484, %c6_485, %c5_486, %c0_487] : memref<1x8x8x64xf32, #tpu.memory_space<vmem>>, vector<1x1x1x64xf32>
    %405 = vector.shape_cast %404 : vector<1x1x1x64xf32> to vector<1x64xf32>
    %406 = arith.maximumf %403, %405 : vector<1x64xf32>
    %c0_488 = arith.constant 0 : index
    %c7_489 = arith.constant 7 : index
    %c4_490 = arith.constant 4 : index
    %c0_491 = arith.constant 0 : index
    %407 = vector.load %arg13[%c0_488, %c7_489, %c4_490, %c0_491] : memref<1x8x8x64xf32, #tpu.memory_space<vmem>>, vector<1x1x1x64xf32>
    %408 = vector.shape_cast %407 : vector<1x1x1x64xf32> to vector<1x64xf32>
    %c0_492 = arith.constant 0 : index
    %c7_493 = arith.constant 7 : index
    %c5_494 = arith.constant 5 : index
    %c0_495 = arith.constant 0 : index
    %409 = vector.load %arg13[%c0_492, %c7_493, %c5_494, %c0_495] : memref<1x8x8x64xf32, #tpu.memory_space<vmem>>, vector<1x1x1x64xf32>
    %410 = vector.shape_cast %409 : vector<1x1x1x64xf32> to vector<1x64xf32>
    %411 = arith.maximumf %408, %410 : vector<1x64xf32>
    %412 = arith.maximumf %406, %411 : vector<1x64xf32>
    %413 = arith.addf %401, %412 : vector<1x64xf32>
    %cst_496 = arith.constant 1.000000e+00 : f32
    %414 = vector.broadcast %cst_496 : f32 to vector<1x64xf32>
    %415 = arith.mulf %413, %414 : vector<1x64xf32>
    %c14 = arith.constant 14 : index
    %c0_497 = arith.constant 0 : index
    %c0_498 = arith.constant 0 : index
    %416 = vector.load %arg6[%c14, %c0_497, %c0_498] : memref<16x64x128xf32, #tpu.memory_space<vmem>>, vector<1x64x128xf32>
    %417 = vector.shape_cast %416 : vector<1x64x128xf32> to vector<64x128xf32>
    %cst_499 = arith.constant dense<0.000000e+00> : vector<1x128xf32>
    %418 = tpu.matmul %415, %417, %cst_499 {dimension_numbers = #tpu.dot_dimension_numbers<[1], [0], [0], [1], [0, 0, 1, 1], [], []>} : vector<1x64xf32>, vector<64x128xf32>, vector<1x128xf32> -> vector<1x128xf32>
    %419 = arith.addf %400, %418 : vector<1x128xf32>
    %cst_500 = arith.constant 0.000000e+00 : f32
    %420 = vector.broadcast %cst_500 : f32 to vector<1x64xf32>
    %c0_501 = arith.constant 0 : index
    %c6_502 = arith.constant 6 : index
    %c6_503 = arith.constant 6 : index
    %c0_504 = arith.constant 0 : index
    %421 = vector.load %arg13[%c0_501, %c6_502, %c6_503, %c0_504] : memref<1x8x8x64xf32, #tpu.memory_space<vmem>>, vector<1x1x1x64xf32>
    %422 = vector.shape_cast %421 : vector<1x1x1x64xf32> to vector<1x64xf32>
    %c0_505 = arith.constant 0 : index
    %c6_506 = arith.constant 6 : index
    %c7_507 = arith.constant 7 : index
    %c0_508 = arith.constant 0 : index
    %423 = vector.load %arg13[%c0_505, %c6_506, %c7_507, %c0_508] : memref<1x8x8x64xf32, #tpu.memory_space<vmem>>, vector<1x1x1x64xf32>
    %424 = vector.shape_cast %423 : vector<1x1x1x64xf32> to vector<1x64xf32>
    %425 = arith.maximumf %422, %424 : vector<1x64xf32>
    %c0_509 = arith.constant 0 : index
    %c7_510 = arith.constant 7 : index
    %c6_511 = arith.constant 6 : index
    %c0_512 = arith.constant 0 : index
    %426 = vector.load %arg13[%c0_509, %c7_510, %c6_511, %c0_512] : memref<1x8x8x64xf32, #tpu.memory_space<vmem>>, vector<1x1x1x64xf32>
    %427 = vector.shape_cast %426 : vector<1x1x1x64xf32> to vector<1x64xf32>
    %c0_513 = arith.constant 0 : index
    %c7_514 = arith.constant 7 : index
    %c7_515 = arith.constant 7 : index
    %c0_516 = arith.constant 0 : index
    %428 = vector.load %arg13[%c0_513, %c7_514, %c7_515, %c0_516] : memref<1x8x8x64xf32, #tpu.memory_space<vmem>>, vector<1x1x1x64xf32>
    %429 = vector.shape_cast %428 : vector<1x1x1x64xf32> to vector<1x64xf32>
    %430 = arith.maximumf %427, %429 : vector<1x64xf32>
    %431 = arith.maximumf %425, %430 : vector<1x64xf32>
    %432 = arith.addf %420, %431 : vector<1x64xf32>
    %cst_517 = arith.constant 1.000000e+00 : f32
    %433 = vector.broadcast %cst_517 : f32 to vector<1x64xf32>
    %434 = arith.mulf %432, %433 : vector<1x64xf32>
    %c15 = arith.constant 15 : index
    %c0_518 = arith.constant 0 : index
    %c0_519 = arith.constant 0 : index
    %435 = vector.load %arg6[%c15, %c0_518, %c0_519] : memref<16x64x128xf32, #tpu.memory_space<vmem>>, vector<1x64x128xf32>
    %436 = vector.shape_cast %435 : vector<1x64x128xf32> to vector<64x128xf32>
    %cst_520 = arith.constant dense<0.000000e+00> : vector<1x128xf32>
    %437 = tpu.matmul %434, %436, %cst_520 {dimension_numbers = #tpu.dot_dimension_numbers<[1], [0], [0], [1], [0, 0, 1, 1], [], []>} : vector<1x64xf32>, vector<64x128xf32>, vector<1x128xf32> -> vector<1x128xf32>
    %438 = arith.addf %419, %437 : vector<1x128xf32>
    %c0_521 = arith.constant 0 : index
    %c0_522 = arith.constant 0 : index
    %439 = vector.load %arg7[%c0_521, %c0_522] : memref<1x128xf32, #tpu.memory_space<vmem>>, vector<1x128xf32>
    %440 = arith.addf %438, %439 : vector<1x128xf32>
    %cst_523 = arith.constant 0.000000e+00 : f32
    %441 = vector.broadcast %cst_523 : f32 to vector<1x128xf32>
    %442 = arith.maximumf %440, %441 : vector<1x128xf32>
    %c0_524 = arith.constant 0 : index
    %c0_525 = arith.constant 0 : index
    %443 = vector.load %arg8[%c0_524, %c0_525] : memref<128x128xf32, #tpu.memory_space<vmem>>, vector<128x128xf32>
    %cst_526 = arith.constant dense<0.000000e+00> : vector<1x128xf32>
    %444 = tpu.matmul %442, %443, %cst_526 {dimension_numbers = #tpu.dot_dimension_numbers<[1], [0], [0], [1], [0, 0, 1, 1], [], []>} : vector<1x128xf32>, vector<128x128xf32>, vector<1x128xf32> -> vector<1x128xf32>
    %c0_527 = arith.constant 0 : index
    %c0_528 = arith.constant 0 : index
    %445 = vector.load %arg9[%c0_527, %c0_528] : memref<1x128xf32, #tpu.memory_space<vmem>>, vector<1x128xf32>
    %446 = arith.addf %444, %445 : vector<1x128xf32>
    %c0_529 = arith.constant 0 : index
    %c0_530 = arith.constant 0 : index
    %c0_531 = arith.constant 0 : index
    %447 = vector.load %arg10[%c0_529, %c0_530, %c0_531] : memref<1x1x128xf32, #tpu.memory_space<vmem>>, vector<1x1x128xf32>
    %448 = vector.shape_cast %447 : vector<1x1x128xf32> to vector<1x128xf32>
    %449 = vector.shape_cast %446 : vector<1x128xf32> to vector<1x1x128xf32>
    tpu.vector_store %arg10[%c0_529, %c0_530, %c0_531], %449 {strides = array<i32>} : memref<1x1x128xf32, #tpu.memory_space<vmem>>, vector<1x1x128xf32>,
    return
  }
  func.func @transform_0(%arg0: i32) -> (i32, i32, i32, i32) {
    %c0_i32 = arith.constant 0 : i32
    %c0_i32_0 = arith.constant 0 : i32
    %c0_i32_1 = arith.constant 0 : i32
    %c0_i32_2 = arith.constant 0 : i32
    return %arg0, %c0_i32, %c0_i32_0, %c0_i32_1 : i32, i32, i32, i32
  }
  func.func @transform_1(%arg0: i32) -> (i32, i32, i32) {
    %c0_i32 = arith.constant 0 : i32
    %c0_i32_0 = arith.constant 0 : i32
    %c0_i32_1 = arith.constant 0 : i32
    %c0_i32_2 = arith.constant 0 : i32
    return %c0_i32, %c0_i32_0, %c0_i32_1 : i32, i32, i32
  }
  func.func @transform_2(%arg0: i32) -> (i32, i32) {
    %c0_i32 = arith.constant 0 : i32
    %c0_i32_0 = arith.constant 0 : i32
    %c0_i32_1 = arith.constant 0 : i32
    return %c0_i32, %c0_i32_0 : i32, i32
  }
  func.func @transform_3(%arg0: i32) -> (i32, i32, i32) {
    %c0_i32 = arith.constant 0 : i32
    %c0_i32_0 = arith.constant 0 : i32
    %c0_i32_1 = arith.constant 0 : i32
    %c0_i32_2 = arith.constant 0 : i32
    return %c0_i32, %c0_i32_0, %c0_i32_1 : i32, i32, i32
  }
  func.func @transform_4(%arg0: i32) -> (i32, i32) {
    %c0_i32 = arith.constant 0 : i32
    %c0_i32_0 = arith.constant 0 : i32
    %c0_i32_1 = arith.constant 0 : i32
    return %c0_i32, %c0_i32_0 : i32, i32
  }
  func.func @transform_5(%arg0: i32) -> (i32, i32, i32) {
    %c0_i32 = arith.constant 0 : i32
    %c0_i32_0 = arith.constant 0 : i32
    %c0_i32_1 = arith.constant 0 : i32
    %c0_i32_2 = arith.constant 0 : i32
    return %c0_i32, %c0_i32_0, %c0_i32_1 : i32, i32, i32
  }
  func.func @transform_6(%arg0: i32) -> (i32, i32) {
    %c0_i32 = arith.constant 0 : i32
    %c0_i32_0 = arith.constant 0 : i32
    %c0_i32_1 = arith.constant 0 : i32
    return %c0_i32, %c0_i32_0 : i32, i32
  }
  func.func @transform_7(%arg0: i32) -> (i32, i32) {
    %c0_i32 = arith.constant 0 : i32
    %c0_i32_0 = arith.constant 0 : i32
    %c0_i32_1 = arith.constant 0 : i32
    return %c0_i32, %c0_i32_0 : i32, i32
  }
  func.func @transform_8(%arg0: i32) -> (i32, i32) {
    %c0_i32 = arith.constant 0 : i32
    %c0_i32_0 = arith.constant 0 : i32
    %c0_i32_1 = arith.constant 0 : i32
    return %c0_i32, %c0_i32_0 : i32, i32
  }
  func.func @transform_9(%arg0: i32) -> (i32, i32, i32) {
    %c0_i32 = arith.constant 0 : i32
    %c0_i32_0 = arith.constant 0 : i32
    %c0_i32_1 = arith.constant 0 : i32
    return %arg0, %c0_i32, %c0_i32_0 : i32, i32, i32
  }
}

</mosaic_0001>

<llo_original>
// kernel: simple_net_forward.1
$region0: #{simple_net_forward.1}
  #allocation0 [shape = 'u32[]', space=smem, size = 0x4, offset = 0x4, fixed_abs, tag = 'smem constant byte address 0x4 - core index']
  #allocation1 [shape = 'u32[72,128]{1,0:T(1,128)}', space=vmem, size = 0x9000, scoped, tag = 'internal scratch']
  #allocation2 [shape = 'f32[1,16,16,32]{3,2,1,0:T(8,128)}', space=vmem, size = 0x20000, scoped, tag = 'scratch operand']
  #allocation3 [shape = 'f32[1,10,10,32]{3,2,1,0:T(8,128)}', space=vmem, size = 0x14000, scoped, tag = 'scratch operand']
  #allocation4 [shape = 'f32[1,8,8,64]{3,2,1,0:T(8,128)}', space=vmem, size = 0x8000, scoped, tag = 'scratch operand']
  %s0 = inlined_call_operand.vmem [shape: f32[2,18,18,3], index: 0, kind: input, shape index: {}]
  %s1 = inlined_call_operand.vmem [shape: f32[9,3,32], index: 1, kind: input, shape index: {}]
  %s2 = inlined_call_operand.vmem [shape: f32[1,32], index: 2, kind: input, shape index: {}]
  %s3 = inlined_call_operand.vmem [shape: f32[9,32,64], index: 3, kind: input, shape index: {}]
  %s4 = inlined_call_operand.vmem [shape: f32[1,64], index: 4, kind: input, shape index: {}]
  %s5 = inlined_call_operand.vmem [shape: f32[16,64,128], index: 5, kind: input, shape index: {}]
  %s6 = inlined_call_operand.vmem [shape: f32[1,128], index: 6, kind: input, shape index: {}]
  %s7 = inlined_call_operand.vmem [shape: f32[128,128], index: 7, kind: input, shape index: {}]
  %s8 = inlined_call_operand.vmem [shape: f32[1,128], index: 8, kind: input, shape index: {}]
  %s9 = inlined_call_operand.hbm [shape: f32[2,1,128], index: 9, kind: output, shape index: {}]
  %s10 = sld [smem:[#allocation0]]
  $region69: #{simple_net_forward.1} parent=0
    _
  %s12 = ssub.s32 1, %s10
  %s13 = scalar_select 0, %s12, %s10
  $region1: #{simple_net_forward.1} parent=0
    #allocation5 [shape = 'u8[1024]{0}', space=vmem, size = 0x400, scoped, tag = 'output window, operand 0']
    #allocation6 [shape = 's32[2]{0}', space=sflag, size = 0x8, scoped, tag = 'scoped memory for simple_net_forward.1']
    %14 = vsyncpa [#allocation6], 0
    %s15 = scalar_lea.sflag [#allocation6], 1
    %16 = vsyncpa %s15, 0
    loop: start=0, step=1, limit=4
    $region2: #{simple_net_forward.1} parent=1 // loop_pre_header
      _
    $region3: #{simple_net_forward.1} parent=1 // loop_header
      %s18 = sphi 0, %s22
      %p19 = scmp.ge.s32.totalorder %s18, 4
      %s28 = sphi 0, %s30
      %s31 = sphi 0, %s28
      %s32 = sphi 0, %s31
      %s48 = sphi 0, %s32
      %s52 = sphi 0, %s52
      %s54 = sphi 0, %s52
      %s55 = sphi 0, %s54
      %s69 = sphi 0, %s55
      %s73 = sphi 0, %s73
      %s75 = sphi 0, %s73
      %s76 = sphi 0, %s75
      %s90 = sphi 0, %s76
      %s94 = sphi 0, %s94
      %s96 = sphi 0, %s94
      %s97 = sphi 0, %s96
      %s111 = sphi 0, %s97
      %s115 = sphi 0, %s115
      %s117 = sphi 0, %s115
      %s118 = sphi 0, %s117
      %s132 = sphi 0, %s118
      %s136 = sphi 0, %s136
      %s138 = sphi 0, %s136
      %s139 = sphi 0, %s138
      %s153 = sphi 0, %s139
      %s157 = sphi 0, %s157
      %s159 = sphi 0, %s157
      %s160 = sphi 0, %s159
      %s174 = sphi 0, %s160
      %s178 = sphi 0, %s178
      %s180 = sphi 0, %s178
      %s181 = sphi 0, %s180
      %s195 = sphi 0, %s181
      %s199 = sphi 0, %s199
      %s201 = sphi 0, %s199
      %s202 = sphi 0, %s201
      %s216 = sphi 0, %s202
      %s222 = sphi 0, %s224
      %s225 = sphi 0, %s222
      %s226 = sphi 0, %s225
      %s242 = sphi 0, %s226
    $region4: #{simple_net_forward.1} parent=1 // loop_header_branch
      %21 = sbr.rel (%p19) target = $region8
    $region5: #{simple_net_forward.1} parent=1 // loop_body
      %s23 = ssub.s32 %s18, 1
      %s24 = ssub.s32 %s18, 2
      %s25 = sadd.s32 %s18, 1
      %s26 = ssub.s32 %s18, %s25
      %p27 = scmp.eq.s32.totalorder %s26, 0
      %s29 = sadd.s32 %s28, 1
      %s30 = scalar_select %p27, %s28, %s29
      %p33 = pneg %p27
      %p34 = scmp.eq.s32.totalorder %s18, 1
      %p35 = por %p33, %p34
      %p36 = scmp.ne.s32.totalorder %s28, %s31
      %p37 = scmp.eq.s32.totalorder %s18, 0
      %p38 = por %p36, %p37
      %p39 = scmp.ne.s32.totalorder %s28, %s31
      %p40 = scmp.eq.s32.totalorder %s23, 1
      %p41 = por %p39, %p40
      %p42 = scmp.ne.s32.totalorder %s31, %s32
      %p43 = scmp.eq.s32.totalorder %s23, 0
      %p44 = por %p42, %p43
      %p45 = scmp.ne.s32.totalorder %s31, %s32
      %p46 = scmp.eq.s32.totalorder %s24, 1
      %p47 = por %p45, %p46
      %p49 = scmp.ne.s32.totalorder %s32, %s48
      %p50 = scmp.eq.s32.totalorder %s24, 0
      %p51 = por %p49, %p50
      %s53 = sadd.s32 %s52, 1
      %p56 = scmp.eq.s32.totalorder %s18, 1
      %p57 = scmp.ne.s32.totalorder %s52, %s54
      %p58 = scmp.eq.s32.totalorder %s18, 0
      %p59 = por %p57, %p58
      %p60 = scmp.ne.s32.totalorder %s52, %s54
      %p61 = scmp.eq.s32.totalorder %s23, 1
      %p62 = por %p60, %p61
      %p63 = scmp.ne.s32.totalorder %s54, %s55
      %p64 = scmp.eq.s32.totalorder %s23, 0
      %p65 = por %p63, %p64
      %p66 = scmp.ne.s32.totalorder %s54, %s55
      %p67 = scmp.eq.s32.totalorder %s24, 1
      %p68 = por %p66, %p67
      %p70 = scmp.ne.s32.totalorder %s55, %s69
      %p71 = scmp.eq.s32.totalorder %s24, 0
      %p72 = por %p70, %p71
      %s74 = sadd.s32 %s73, 1
      %p77 = scmp.eq.s32.totalorder %s18, 1
      %p78 = scmp.ne.s32.totalorder %s73, %s75
      %p79 = scmp.eq.s32.totalorder %s18, 0
      %p80 = por %p78, %p79
      %p81 = scmp.ne.s32.totalorder %s73, %s75
      %p82 = scmp.eq.s32.totalorder %s23, 1
      %p83 = por %p81, %p82
      %p84 = scmp.ne.s32.totalorder %s75, %s76
      %p85 = scmp.eq.s32.totalorder %s23, 0
      %p86 = por %p84, %p85
      %p87 = scmp.ne.s32.totalorder %s75, %s76
      %p88 = scmp.eq.s32.totalorder %s24, 1
      %p89 = por %p87, %p88
      %p91 = scmp.ne.s32.totalorder %s76, %s90
      %p92 = scmp.eq.s32.totalorder %s24, 0
      %p93 = por %p91, %p92
      %s95 = sadd.s32 %s94, 1
      %p98 = scmp.eq.s32.totalorder %s18, 1
      %p99 = scmp.ne.s32.totalorder %s94, %s96
      %p100 = scmp.eq.s32.totalorder %s18, 0
      %p101 = por %p99, %p100
      %p102 = scmp.ne.s32.totalorder %s94, %s96
      %p103 = scmp.eq.s32.totalorder %s23, 1
      %p104 = por %p102, %p103
      %p105 = scmp.ne.s32.totalorder %s96, %s97
      %p106 = scmp.eq.s32.totalorder %s23, 0
      %p107 = por %p105, %p106
      %p108 = scmp.ne.s32.totalorder %s96, %s97
      %p109 = scmp.eq.s32.totalorder %s24, 1
      %p110 = por %p108, %p109
      %p112 = scmp.ne.s32.totalorder %s97, %s111
      %p113 = scmp.eq.s32.totalorder %s24, 0
      %p114 = por %p112, %p113
      %s116 = sadd.s32 %s115, 1
      %p119 = scmp.eq.s32.totalorder %s18, 1
      %p120 = scmp.ne.s32.totalorder %s115, %s117
      %p121 = scmp.eq.s32.totalorder %s18, 0
      %p122 = por %p120, %p121
      %p123 = scmp.ne.s32.totalorder %s115, %s117
      %p124 = scmp.eq.s32.totalorder %s23, 1
      %p125 = por %p123, %p124
      %p126 = scmp.ne.s32.totalorder %s117, %s118
      %p127 = scmp.eq.s32.totalorder %s23, 0
      %p128 = por %p126, %p127
      %p129 = scmp.ne.s32.totalorder %s117, %s118
      %p130 = scmp.eq.s32.totalorder %s24, 1
      %p131 = por %p129, %p130
      %p133 = scmp.ne.s32.totalorder %s118, %s132
      %p134 = scmp.eq.s32.totalorder %s24, 0
      %p135 = por %p133, %p134
      %s137 = sadd.s32 %s136, 1
      %p140 = scmp.eq.s32.totalorder %s18, 1
      %p141 = scmp.ne.s32.totalorder %s136, %s138
      %p142 = scmp.eq.s32.totalorder %s18, 0
      %p143 = por %p141, %p142
      %p144 = scmp.ne.s32.totalorder %s136, %s138
      %p145 = scmp.eq.s32.totalorder %s23, 1
      %p146 = por %p144, %p145
      %p147 = scmp.ne.s32.totalorder %s138, %s139
      %p148 = scmp.eq.s32.totalorder %s23, 0
      %p149 = por %p147, %p148
      %p150 = scmp.ne.s32.totalorder %s138, %s139
      %p151 = scmp.eq.s32.totalorder %s24, 1
      %p152 = por %p150, %p151
      %p154 = scmp.ne.s32.totalorder %s139, %s153
      %p155 = scmp.eq.s32.totalorder %s24, 0
      %p156 = por %p154, %p155
      %s158 = sadd.s32 %s157, 1
      %p161 = scmp.eq.s32.totalorder %s18, 1
      %p162 = scmp.ne.s32.totalorder %s157, %s159
      %p163 = scmp.eq.s32.totalorder %s18, 0
      %p164 = por %p162, %p163
      %p165 = scmp.ne.s32.totalorder %s157, %s159
      %p166 = scmp.eq.s32.totalorder %s23, 1
      %p167 = por %p165, %p166
      %p168 = scmp.ne.s32.totalorder %s159, %s160
      %p169 = scmp.eq.s32.totalorder %s23, 0
      %p170 = por %p168, %p169
      %p171 = scmp.ne.s32.totalorder %s159, %s160
      %p172 = scmp.eq.s32.totalorder %s24, 1
      %p173 = por %p171, %p172
      %p175 = scmp.ne.s32.totalorder %s160, %s174
      %p176 = scmp.eq.s32.totalorder %s24, 0
      %p177 = por %p175, %p176
      %s179 = sadd.s32 %s178, 1
      %p182 = scmp.eq.s32.totalorder %s18, 1
      %p183 = scmp.ne.s32.totalorder %s178, %s180
      %p184 = scmp.eq.s32.totalorder %s18, 0
      %p185 = por %p183, %p184
      %p186 = scmp.ne.s32.totalorder %s178, %s180
      %p187 = scmp.eq.s32.totalorder %s23, 1
      %p188 = por %p186, %p187
      %p189 = scmp.ne.s32.totalorder %s180, %s181
      %p190 = scmp.eq.s32.totalorder %s23, 0
      %p191 = por %p189, %p190
      %p192 = scmp.ne.s32.totalorder %s180, %s181
      %p193 = scmp.eq.s32.totalorder %s24, 1
      %p194 = por %p192, %p193
      %p196 = scmp.ne.s32.totalorder %s181, %s195
      %p197 = scmp.eq.s32.totalorder %s24, 0
      %p198 = por %p196, %p197
      %s200 = sadd.s32 %s199, 1
      %p203 = scmp.eq.s32.totalorder %s18, 1
      %p204 = scmp.ne.s32.totalorder %s199, %s201
      %p205 = scmp.eq.s32.totalorder %s18, 0
      %p206 = por %p204, %p205
      %p207 = scmp.ne.s32.totalorder %s199, %s201
      %p208 = scmp.eq.s32.totalorder %s23, 1
      %p209 = por %p207, %p208
      %p210 = scmp.ne.s32.totalorder %s201, %s202
      %p211 = scmp.eq.s32.totalorder %s23, 0
      %p212 = por %p210, %p211
      %p213 = scmp.ne.s32.totalorder %s201, %s202
      %p214 = scmp.eq.s32.totalorder %s24, 1
      %p215 = por %p213, %p214
      %p217 = scmp.ne.s32.totalorder %s202, %s216
      %p218 = scmp.eq.s32.totalorder %s24, 0
      %p219 = por %p217, %p218
      %s220 = ssub.s32 %s18, %s25
      %p221 = scmp.eq.s32.totalorder %s220, 0
      %s223 = sadd.s32 %s222, 1
      %s224 = scalar_select %p221, %s222, %s223
      %p227 = pneg %p221
      %p228 = scmp.eq.s32.totalorder %s18, 1
      %p229 = por %p227, %p228
      %p230 = scmp.ne.s32.totalorder %s222, %s225
      %p231 = scmp.eq.s32.totalorder %s18, 0
      %p232 = por %p230, %p231
      %p233 = scmp.ne.s32.totalorder %s222, %s225
      %p234 = scmp.eq.s32.totalorder %s23, 1
      %p235 = por %p233, %p234
      %p236 = scmp.ne.s32.totalorder %s225, %s226
      %p237 = scmp.eq.s32.totalorder %s23, 0
      %p238 = por %p236, %p237
      %p239 = scmp.ne.s32.totalorder %s225, %s226
      %p240 = scmp.eq.s32.totalorder %s24, 1
      %p241 = por %p239, %p240
      %p243 = scmp.ne.s32.totalorder %s226, %s242
      %p244 = scmp.eq.s32.totalorder %s24, 0
      %p245 = por %p243, %p244
      %p246 = scmp.le.s32.totalorder 1, %s18
      %p247 = scmp.lt.s32.totalorder %s18, 3
      %p248 = pnand %p246, %p247
      %p249 = pneg %p248
      // Predicated region
      $region9: #{simple_net_forward.1} parent=5 // pred_check
        _
      $region10: #{simple_net_forward.1} parent=5 // pred_check_branch
        %251 = sbr.rel (%p248) target = $region12
      $region11: #{simple_net_forward.1} parent=5 // pred_region
        %s252 = ssub.s32 %s18, 1
        // Predicated region
        $region13: #{simple_net_forward.1} parent=11 // pred_check
          %p253 = pneg %p65
        $region14: #{simple_net_forward.1} parent=11 // pred_check_branch
          %255 = sbr.rel (%p253) target = $region16
        $region15: #{simple_net_forward.1} parent=11 // pred_region
          _
        $region16: #{simple_net_forward.1} parent=11 // pred_fallthru
          _
        // Predicated region
        $region17: #{simple_net_forward.1} parent=11 // pred_check
          %p256 = pneg %p86
        $region18: #{simple_net_forward.1} parent=11 // pred_check_branch
          %258 = sbr.rel (%p256) target = $region20
        $region19: #{simple_net_forward.1} parent=11 // pred_region
          _
        $region20: #{simple_net_forward.1} parent=11 // pred_fallthru
          _
        // Predicated region
        $region21: #{simple_net_forward.1} parent=11 // pred_check
          %p259 = pneg %p107
        $region22: #{simple_net_forward.1} parent=11 // pred_check_branch
          %261 = sbr.rel (%p259) target = $region24
        $region23: #{simple_net_forward.1} parent=11 // pred_region
          _
        $region24: #{simple_net_forward.1} parent=11 // pred_fallthru
          _
        // Predicated region
        $region25: #{simple_net_forward.1} parent=11 // pred_check
          %p262 = pneg %p128
        $region26: #{simple_net_forward.1} parent=11 // pred_check_branch
          %264 = sbr.rel (%p262) target = $region28
        $region27: #{simple_net_forward.1} parent=11 // pred_region
          _
        $region28: #{simple_net_forward.1} parent=11 // pred_fallthru
          _
        // Predicated region
        $region29: #{simple_net_forward.1} parent=11 // pred_check
          %p265 = pneg %p149
        $region30: #{simple_net_forward.1} parent=11 // pred_check_branch
          %267 = sbr.rel (%p265) target = $region32
        $region31: #{simple_net_forward.1} parent=11 // pred_region
          _
        $region32: #{simple_net_forward.1} parent=11 // pred_fallthru
          _
        // Predicated region
        $region33: #{simple_net_forward.1} parent=11 // pred_check
          %p268 = pneg %p170
        $region34: #{simple_net_forward.1} parent=11 // pred_check_branch
          %270 = sbr.rel (%p268) target = $region36
        $region35: #{simple_net_forward.1} parent=11 // pred_region
          _
        $region36: #{simple_net_forward.1} parent=11 // pred_fallthru
          _
        // Predicated region
        $region37: #{simple_net_forward.1} parent=11 // pred_check
          %p271 = pneg %p191
        $region38: #{simple_net_forward.1} parent=11 // pred_check_branch
          %273 = sbr.rel (%p271) target = $region40
        $region39: #{simple_net_forward.1} parent=11 // pred_region
          _
        $region40: #{simple_net_forward.1} parent=11 // pred_fallthru
          _
        // Predicated region
        $region41: #{simple_net_forward.1} parent=11 // pred_check
          %p274 = pneg %p212
        $region42: #{simple_net_forward.1} parent=11 // pred_check_branch
          %276 = sbr.rel (%p274) target = $region44
        $region43: #{simple_net_forward.1} parent=11 // pred_region
          _
        $region44: #{simple_net_forward.1} parent=11 // pred_fallthru
          _
      $region12: #{simple_net_forward.1} parent=5 // pred_fallthru
        _
      %p277 = scmp.lt.s32.totalorder %s18, 2
      // Predicated region
      $region45: #{simple_net_forward.1} parent=5 // pred_check
        %p278 = pneg %p277
      $region46: #{simple_net_forward.1} parent=5 // pred_check_branch
        %280 = sbr.rel (%p278) target = $region48
      $region47: #{simple_net_forward.1} parent=5 // pred_region
        // Predicated region
        $region49: #{simple_net_forward.1} parent=47 // pred_check
          %p281 = pneg %p38
        $region50: #{simple_net_forward.1} parent=47 // pred_check_branch
          %283 = sbr.rel (%p281) target = $region52
        $region51: #{simple_net_forward.1} parent=47 // pred_region
          %p284 = scmp.lt.s32.totalorder %s18, 1
          %s285 = scalar_select %p284, %s18, 1
          %s286 = smul.addr %s285, 54
          %s287 = smul.addr %s286, 8
          %s288 = scalar_lea.vmem %s0, %s287
        $region52: #{simple_net_forward.1} parent=47 // pred_fallthru
          _
      $region48: #{simple_net_forward.1} parent=5 // pred_fallthru
        _
      %p289 = scmp.le.s32.totalorder 1, %s18
      %p290 = scmp.lt.s32.totalorder %s18, 3
      %p291 = pnand %p289, %p290
      %p292 = pneg %p291
      // Predicated region
      $region53: #{simple_net_forward.1} parent=5 // pred_check
        _
      $region54: #{simple_net_forward.1} parent=5 // pred_check_branch
        %294 = sbr.rel (%p291) target = $region56
      $region55: #{simple_net_forward.1} parent=5 // pred_region
        %s295 = ssub.s32 %s18, 1
        %p296 = scmp.lt.s32.totalorder %s23, 1
        %s297 = scalar_select %p296, %s23, 1
        %s298 = smul.addr %s297, 54
        %s299 = smul.addr %s298, 8
        %s300 = scalar_lea.vmem %s0, %s299
        %p301 = pneg %p44
        %p302 = pneg %p41
        %p303 = pneg %p65
        %p304 = pneg %p62
        %p305 = pneg %p86
        %p306 = pneg %p83
        %p307 = pneg %p107
        %p308 = pneg %p104
        %p309 = pneg %p128
        %p310 = pneg %p125
        %p311 = pneg %p149
        %p312 = pneg %p146
        %p313 = pneg %p170
        %p314 = pneg %p167
        %p315 = pneg %p191
        %p316 = pneg %p188
        %p317 = pneg %p212
        %p318 = pneg %p209
        %p319 = pneg %p238
        %p320 = pneg %p235
        %s321 = sand.u32 %s225, 1
        %s322 = scalar_lea.sflag [#allocation6], %s321
        %s323 = sand.u32 %s225, 1
        %s324 = scalar_lea.vmem [#allocation5], %s323
        %p325 = scmp.lt.s32.totalorder %s23, 1
        %s326 = scalar_select %p325, %s23, 1
        %s327 = smul.addr %s326, 54
        %s328 = smul.addr %s327, 8
        %s329 = scalar_lea.vmem %s0, %s328
        %v330 = vld [vmem:[%s329] sm:$0xff]
        %v331 = vld [vmem:[%s329 + $0x8] sm:$0xff]
        %v332 = vld [vmem:[%s329 + $0x18] sm:$0xff]
        %v333 = vld [vmem:[%s329 + $0x20] sm:$0xff]
        %v334 = vld [vmem:[%s329 + $0x30] sm:$0xff]
        %v335 = vld [vmem:[%s329 + $0x38] sm:$0xff]
        %v336 = vld [vmem:[%s329 + $0x48] sm:$0xff]
        %v337 = vld [vmem:[%s329 + $0x50] sm:$0xff]
        %v338 = vld [vmem:[%s329 + $0x60] sm:$0xff]
        %v339 = vld [vmem:[%s329 + $0x68] sm:$0xff]
        %v340 = vld [vmem:[%s329 + $0x78] sm:$0xff]
        %v341 = vld [vmem:[%s329 + $0x80] sm:$0xff]
        %v342 = vld [vmem:[%s329 + $0x90] sm:$0xff]
        %v343 = vld [vmem:[%s329 + $0x98] sm:$0xff]
        %v344 = vld [vmem:[%s329 + $0xa8] sm:$0xff]
        %v345 = vld [vmem:[%s329 + $0xb0] sm:$0xff]
        %v346 = vld [vmem:[%s329 + $0xc0] sm:$0xff]
        %v347 = vld [vmem:[%s329 + $0xc8] sm:$0xff]
        %v348 = vld [vmem:[%s329 + $0xd8] sm:$0xff]
        %v349 = vld [vmem:[%s329 + $0xe0] sm:$0xff]
        %v350 = vld [vmem:[%s329 + $0xf0] sm:$0xff]
        %v351 = vld [vmem:[%s329 + $0xf8] sm:$0xff]
        %v352 = vld [vmem:[%s329 + $0x108] sm:$0xff]
        %v353 = vld [vmem:[%s329 + $0x110] sm:$0xff]
        %v354 = vld [vmem:[%s329 + $0x120] sm:$0xff]
        %v355 = vld [vmem:[%s329 + $0x128] sm:$0xff]
        %v356 = vld [vmem:[%s329 + $0x138] sm:$0xff]
        %v357 = vld [vmem:[%s329 + $0x140] sm:$0xff]
        %v358 = vld [vmem:[%s329 + $0x150] sm:$0xff]
        %v359 = vld [vmem:[%s329 + $0x158] sm:$0xff]
        %v360 = vld [vmem:[%s329 + $0x168] sm:$0xff]
        %v361 = vld [vmem:[%s329 + $0x170] sm:$0xff]
        %v362 = vld [vmem:[%s1] sm:$0x7]
        %v363 = vld [vmem:[%s329 + $0x1] sm:$0xff]
        %v364 = vld [vmem:[%s329 + $0x9] sm:$0xff]
        %v365 = vld [vmem:[%s329 + $0x19] sm:$0xff]
        %v366 = vld [vmem:[%s329 + $0x21] sm:$0xff]
        %v367 = vld [vmem:[%s329 + $0x31] sm:$0xff]
        %v368 = vld [vmem:[%s329 + $0x39] sm:$0xff]
        %v369 = vld [vmem:[%s329 + $0x49] sm:$0xff]
        %v370 = vld [vmem:[%s329 + $0x51] sm:$0xff]
        %v371 = vld [vmem:[%s329 + $0x61] sm:$0xff]
        %v372 = vld [vmem:[%s329 + $0x69] sm:$0xff]
        %v373 = vld [vmem:[%s329 + $0x79] sm:$0xff]
        %v374 = vld [vmem:[%s329 + $0x81] sm:$0xff]
        %v375 = vld [vmem:[%s329 + $0x91] sm:$0xff]
        %v376 = vld [vmem:[%s329 + $0x99] sm:$0xff]
        %v377 = vld [vmem:[%s329 + $0xa9] sm:$0xff]
        %v378 = vld [vmem:[%s329 + $0xb1] sm:$0xff]
        %v379 = vld [vmem:[%s329 + $0xc1] sm:$0xff]
        %v380 = vld [vmem:[%s329 + $0xc9] sm:$0xff]
        %v381 = vld [vmem:[%s329 + $0xd9] sm:$0xff]
        %v382 = vld [vmem:[%s329 + $0xe1] sm:$0xff]
        %v383 = vld [vmem:[%s329 + $0xf1] sm:$0xff]
        %v384 = vld [vmem:[%s329 + $0xf9] sm:$0xff]
        %v385 = vld [vmem:[%s329 + $0x109] sm:$0xff]
        %v386 = vld [vmem:[%s329 + $0x111] sm:$0xff]
        %v387 = vld [vmem:[%s329 + $0x121] sm:$0xff]
        %v388 = vld [vmem:[%s329 + $0x129] sm:$0xff]
        %v389 = vld [vmem:[%s329 + $0x139] sm:$0xff]
        %v390 = vld [vmem:[%s329 + $0x141] sm:$0xff]
        %v391 = vld [vmem:[%s329 + $0x151] sm:$0xff]
        %v392 = vld [vmem:[%s329 + $0x159] sm:$0xff]
        %v393 = vld [vmem:[%s329 + $0x169] sm:$0xff]
        %v394 = vld [vmem:[%s329 + $0x171] sm:$0xff]
        %s395 = scalar_lea.vmem %s1, 4
        %v396 = vld [vmem:[%s395] sm:$0x7]
        %vm397 = vcmask 23552
        %v399 = vsel %vm397, %v363, 0
        %v402 = vsel %vm397, %v364, 0
        %v405 = vsel %vm397, %v365, 0
        %v408 = vsel %vm397, %v366, 0
        %v411 = vsel %vm397, %v367, 0
        %v414 = vsel %vm397, %v368, 0
        %v417 = vsel %vm397, %v369, 0
        %v420 = vsel %vm397, %v370, 0
        %v423 = vsel %vm397, %v371, 0
        %v426 = vsel %vm397, %v372, 0
        %v429 = vsel %vm397, %v373, 0
        %v432 = vsel %vm397, %v374, 0
        %v435 = vsel %vm397, %v375, 0
        %v438 = vsel %vm397, %v376, 0
        %v441 = vsel %vm397, %v377, 0
        %v444 = vsel %vm397, %v378, 0
        %v447 = vsel %vm397, %v379, 0
        %v450 = vsel %vm397, %v380, 0
        %v453 = vsel %vm397, %v381, 0
        %v456 = vsel %vm397, %v382, 0
        %v459 = vsel %vm397, %v383, 0
        %v462 = vsel %vm397, %v384, 0
        %v465 = vsel %vm397, %v385, 0
        %v468 = vsel %vm397, %v386, 0
        %v471 = vsel %vm397, %v387, 0
        %v474 = vsel %vm397, %v388, 0
        %v477 = vsel %vm397, %v389, 0
        %v480 = vsel %vm397, %v390, 0
        %v483 = vsel %vm397, %v391, 0
        %v486 = vsel %vm397, %v392, 0
        %v489 = vsel %vm397, %v393, 0
        %v492 = vsel %vm397, %v394, 0
        %vm494 = vcmask 1042432
        %v496 = vsel %vm494, %v396, 0
        %498 = vmatpush.msra.mxu0 0.0
        %499 = vmatpush.msra.mxu0 0.0
        %500 = vmatpush.msra.mxu0 0.0
        %501 = vmatpush.msra.mxu0 0.0
        %502 = vmatpush.msra.mxu0 0.0
        %503 = vmatpush.msra.mxu0 0.0
        %504 = vmatpush.msra.mxu0 0.0
        %505 = vmatpush.msra.mxu0 0.0
        %506 = vmatpush.msra.mxu0 0.0
        %507 = vmatpush.msra.mxu0 0.0
        %508 = vmatpush.msra.mxu0 0.0
        %509 = vmatpush.msra.mxu0 0.0
        %510 = vmatpush.msra.mxu0 0.0
        %511 = vmatpush.msra.mxu0 0.0
        %512 = vmatpush.msra.mxu0 0.0
        %513 = vmatpush.msra.mxu0 %v496
        %514 = vmatmul.f32.gmra.mxu0 %v399
        %v515 = vpop.f32.mrf.mxu0
        %v516 = vadd.f32 0.0, %v515
        %517 = vmatmul.f32.gmra.mxu0 %v402
        %v518 = vpop.f32.mrf.mxu0
        %v519 = vadd.f32 0.0, %v518
        %520 = vmatmul.f32.gmra.mxu0 %v405
        %v521 = vpop.f32.mrf.mxu0
        %v522 = vadd.f32 0.0, %v521
        %523 = vmatmul.f32.gmra.mxu0 %v408
        %v524 = vpop.f32.mrf.mxu0
        %v525 = vadd.f32 0.0, %v524
        %526 = vmatmul.f32.gmra.mxu0 %v411
        %v527 = vpop.f32.mrf.mxu0
        %v528 = vadd.f32 0.0, %v527
        %529 = vmatmul.f32.gmra.mxu0 %v414
        %v530 = vpop.f32.mrf.mxu0
        %v531 = vadd.f32 0.0, %v530
        %532 = vmatmul.f32.gmra.mxu0 %v417
        %v533 = vpop.f32.mrf.mxu0
        %v534 = vadd.f32 0.0, %v533
        %535 = vmatmul.f32.gmra.mxu0 %v420
        %v536 = vpop.f32.mrf.mxu0
        %v537 = vadd.f32 0.0, %v536
        %538 = vmatmul.f32.gmra.mxu0 %v423
        %v539 = vpop.f32.mrf.mxu0
        %v540 = vadd.f32 0.0, %v539
        %541 = vmatmul.f32.gmra.mxu0 %v426
        %v542 = vpop.f32.mrf.mxu0
        %v543 = vadd.f32 0.0, %v542
        %544 = vmatmul.f32.gmra.mxu0 %v429
        %v545 = vpop.f32.mrf.mxu0
        %v546 = vadd.f32 0.0, %v545
        %547 = vmatmul.f32.gmra.mxu0 %v432
        %v548 = vpop.f32.mrf.mxu0
        %v549 = vadd.f32 0.0, %v548
        %550 = vmatmul.f32.gmra.mxu0 %v435
        %v551 = vpop.f32.mrf.mxu0
        %v552 = vadd.f32 0.0, %v551
        %553 = vmatmul.f32.gmra.mxu0 %v438
        %v554 = vpop.f32.mrf.mxu0
        %v555 = vadd.f32 0.0, %v554
        %556 = vmatmul.f32.gmra.mxu0 %v441
        %v557 = vpop.f32.mrf.mxu0
        %v558 = vadd.f32 0.0, %v557
        %559 = vmatmul.f32.gmra.mxu0 %v444
        %v560 = vpop.f32.mrf.mxu0
        %v561 = vadd.f32 0.0, %v560
        %562 = vmatmul.f32.gmra.mxu0 %v447
        %v563 = vpop.f32.mrf.mxu0
        %v564 = vadd.f32 0.0, %v563
        %565 = vmatmul.f32.gmra.mxu0 %v450
        %v566 = vpop.f32.mrf.mxu0
        %v567 = vadd.f32 0.0, %v566
        %568 = vmatmul.f32.gmra.mxu0 %v453
        %v569 = vpop.f32.mrf.mxu0
        %v570 = vadd.f32 0.0, %v569
        %571 = vmatmul.f32.gmra.mxu0 %v456
        %v572 = vpop.f32.mrf.mxu0
        %v573 = vadd.f32 0.0, %v572
        %574 = vmatmul.f32.gmra.mxu0 %v459
        %v575 = vpop.f32.mrf.mxu0
        %v576 = vadd.f32 0.0, %v575
        %577 = vmatmul.f32.gmra.mxu0 %v462
        %v578 = vpop.f32.mrf.mxu0
        %v579 = vadd.f32 0.0, %v578
        %580 = vmatmul.f32.gmra.mxu0 %v465
        %v581 = vpop.f32.mrf.mxu0
        %v582 = vadd.f32 0.0, %v581
        %583 = vmatmul.f32.gmra.mxu0 %v468
        %v584 = vpop.f32.mrf.mxu0
        %v585 = vadd.f32 0.0, %v584
        %586 = vmatmul.f32.gmra.mxu0 %v471
        %v587 = vpop.f32.mrf.mxu0
        %v588 = vadd.f32 0.0, %v587
        %589 = vmatmul.f32.gmra.mxu0 %v474
        %v590 = vpop.f32.mrf.mxu0
        %v591 = vadd.f32 0.0, %v590
        %592 = vmatmul.f32.gmra.mxu0 %v477
        %v593 = vpop.f32.mrf.mxu0
        %v594 = vadd.f32 0.0, %v593
        %595 = vmatmul.f32.gmra.mxu0 %v480
        %v596 = vpop.f32.mrf.mxu0
        %v597 = vadd.f32 0.0, %v596
        %598 = vmatmul.f32.gmra.mxu0 %v483
        %v599 = vpop.f32.mrf.mxu0
        %v600 = vadd.f32 0.0, %v599
        %601 = vmatmul.f32.gmra.mxu0 %v486
        %v602 = vpop.f32.mrf.mxu0
        %v603 = vadd.f32 0.0, %v602
        %604 = vmatmul.f32.gmra.mxu0 %v489
        %v605 = vpop.f32.mrf.mxu0
        %v606 = vadd.f32 0.0, %v605
        %607 = vmatmul.f32.gmra.mxu0 %v492
        %v608 = vpop.f32.mrf.mxu0
        %v609 = vadd.f32 0.0, %v608
        %610 = vdwg.mxu0
        %v612 = vsel %vm397, %v330, 0
        %v615 = vsel %vm397, %v331, 0
        %v618 = vsel %vm397, %v332, 0
        %v621 = vsel %vm397, %v333, 0
        %v624 = vsel %vm397, %v334, 0
        %v627 = vsel %vm397, %v335, 0
        %v630 = vsel %vm397, %v336, 0
        %v633 = vsel %vm397, %v337, 0
        %v636 = vsel %vm397, %v338, 0
        %v639 = vsel %vm397, %v339, 0
        %v642 = vsel %vm397, %v340, 0
        %v645 = vsel %vm397, %v341, 0
        %v648 = vsel %vm397, %v342, 0
        %v651 = vsel %vm397, %v343, 0
        %v654 = vsel %vm397, %v344, 0
        %v657 = vsel %vm397, %v345, 0
        %v660 = vsel %vm397, %v346, 0
        %v663 = vsel %vm397, %v347, 0
        %v666 = vsel %vm397, %v348, 0
        %v669 = vsel %vm397, %v349, 0
        %v672 = vsel %vm397, %v350, 0
        %v675 = vsel %vm397, %v351, 0
        %v678 = vsel %vm397, %v352, 0
        %v681 = vsel %vm397, %v353, 0
        %v684 = vsel %vm397, %v354, 0
        %v687 = vsel %vm397, %v355, 0
        %v690 = vsel %vm397, %v356, 0
        %v693 = vsel %vm397, %v357, 0
        %v696 = vsel %vm397, %v358, 0
        %v699 = vsel %vm397, %v359, 0
        %v702 = vsel %vm397, %v360, 0
        %v705 = vsel %vm397, %v361, 0
        %v708 = vsel %vm494, %v362, 0
        %710 = vmatpush.msra.mxu0 0.0
        %711 = vmatpush.msra.mxu0 0.0
        %712 = vmatpush.msra.mxu0 0.0
        %713 = vmatpush.msra.mxu0 0.0
        %714 = vmatpush.msra.mxu0 0.0
        %715 = vmatpush.msra.mxu0 0.0
        %716 = vmatpush.msra.mxu0 0.0
        %717 = vmatpush.msra.mxu0 0.0
        %718 = vmatpush.msra.mxu0 0.0
        %719 = vmatpush.msra.mxu0 0.0
        %720 = vmatpush.msra.mxu0 0.0
        %721 = vmatpush.msra.mxu0 0.0
        %722 = vmatpush.msra.mxu0 0.0
        %723 = vmatpush.msra.mxu0 0.0
        %724 = vmatpush.msra.mxu0 0.0
        %725 = vmatpush.msra.mxu0 %v708
        %726 = vmatmul.f32.gmra.mxu0 %v612
        %v727 = vpop.f32.mrf.mxu0
        %v728 = vadd.f32 %v516, %v727
        %729 = vmatmul.f32.gmra.mxu0 %v615
        %v730 = vpop.f32.mrf.mxu0
        %v731 = vadd.f32 %v519, %v730
        %732 = vmatmul.f32.gmra.mxu0 %v618
        %v733 = vpop.f32.mrf.mxu0
        %v734 = vadd.f32 %v522, %v733
        %735 = vmatmul.f32.gmra.mxu0 %v621
        %v736 = vpop.f32.mrf.mxu0
        %v737 = vadd.f32 %v525, %v736
        %738 = vmatmul.f32.gmra.mxu0 %v624
        %v739 = vpop.f32.mrf.mxu0
        %v740 = vadd.f32 %v528, %v739
        %741 = vmatmul.f32.gmra.mxu0 %v627
        %v742 = vpop.f32.mrf.mxu0
        %v743 = vadd.f32 %v531, %v742
        %744 = vmatmul.f32.gmra.mxu0 %v630
        %v745 = vpop.f32.mrf.mxu0
        %v746 = vadd.f32 %v534, %v745
        %747 = vmatmul.f32.gmra.mxu0 %v633
        %v748 = vpop.f32.mrf.mxu0
        %v749 = vadd.f32 %v537, %v748
        %750 = vmatmul.f32.gmra.mxu0 %v636
        %v751 = vpop.f32.mrf.mxu0
        %v752 = vadd.f32 %v540, %v751
        %753 = vmatmul.f32.gmra.mxu0 %v639
        %v754 = vpop.f32.mrf.mxu0
        %v755 = vadd.f32 %v543, %v754
        %756 = vmatmul.f32.gmra.mxu0 %v642
        %v757 = vpop.f32.mrf.mxu0
        %v758 = vadd.f32 %v546, %v757
        %759 = vmatmul.f32.gmra.mxu0 %v645
        %v760 = vpop.f32.mrf.mxu0
        %v761 = vadd.f32 %v549, %v760
        %762 = vmatmul.f32.gmra.mxu0 %v648
        %v763 = vpop.f32.mrf.mxu0
        %v764 = vadd.f32 %v552, %v763
        %765 = vmatmul.f32.gmra.mxu0 %v651
        %v766 = vpop.f32.mrf.mxu0
        %v767 = vadd.f32 %v555, %v766
        %768 = vmatmul.f32.gmra.mxu0 %v654
        %v769 = vpop.f32.mrf.mxu0
        %v770 = vadd.f32 %v558, %v769
        %771 = vmatmul.f32.gmra.mxu0 %v657
        %v772 = vpop.f32.mrf.mxu0
        %v773 = vadd.f32 %v561, %v772
        %774 = vmatmul.f32.gmra.mxu0 %v660
        %v775 = vpop.f32.mrf.mxu0
        %v776 = vadd.f32 %v564, %v775
        %777 = vmatmul.f32.gmra.mxu0 %v663
        %v778 = vpop.f32.mrf.mxu0
        %v779 = vadd.f32 %v567, %v778
        %780 = vmatmul.f32.gmra.mxu0 %v666
        %v781 = vpop.f32.mrf.mxu0
        %v782 = vadd.f32 %v570, %v781
        %783 = vmatmul.f32.gmra.mxu0 %v669
        %v784 = vpop.f32.mrf.mxu0
        %v785 = vadd.f32 %v573, %v784
        %786 = vmatmul.f32.gmra.mxu0 %v672
        %v787 = vpop.f32.mrf.mxu0
        %v788 = vadd.f32 %v576, %v787
        %789 = vmatmul.f32.gmra.mxu0 %v675
        %v790 = vpop.f32.mrf.mxu0
        %v791 = vadd.f32 %v579, %v790
        %792 = vmatmul.f32.gmra.mxu0 %v678
        %v793 = vpop.f32.mrf.mxu0
        %v794 = vadd.f32 %v582, %v793
        %795 = vmatmul.f32.gmra.mxu0 %v681
        %v796 = vpop.f32.mrf.mxu0
        %v797 = vadd.f32 %v585, %v796
        %798 = vmatmul.f32.gmra.mxu0 %v684
        %v799 = vpop.f32.mrf.mxu0
        %v800 = vadd.f32 %v588, %v799
        %801 = vmatmul.f32.gmra.mxu0 %v687
        %v802 = vpop.f32.mrf.mxu0
        %v803 = vadd.f32 %v591, %v802
        %804 = vmatmul.f32.gmra.mxu0 %v690
        %v805 = vpop.f32.mrf.mxu0
        %v806 = vadd.f32 %v594, %v805
        %807 = vmatmul.f32.gmra.mxu0 %v693
        %v808 = vpop.f32.mrf.mxu0
        %v809 = vadd.f32 %v597, %v808
        %810 = vmatmul.f32.gmra.mxu0 %v696
        %v811 = vpop.f32.mrf.mxu0
        %v812 = vadd.f32 %v600, %v811
        %813 = vmatmul.f32.gmra.mxu0 %v699
        %v814 = vpop.f32.mrf.mxu0
        %v815 = vadd.f32 %v603, %v814
        %816 = vmatmul.f32.gmra.mxu0 %v702
        %v817 = vpop.f32.mrf.mxu0
        %v818 = vadd.f32 %v606, %v817
        %819 = vmatmul.f32.gmra.mxu0 %v705
        %v820 = vpop.f32.mrf.mxu0
        %v821 = vadd.f32 %v609, %v820
        %822 = vdwg.mxu0
        %v823 = vld [vmem:[%s329 + $0x2] sm:$0xff]
        %v824 = vld [vmem:[%s329 + $0xa] sm:$0xff]
        %v825 = vld [vmem:[%s329 + $0x1a] sm:$0xff]
        %v826 = vld [vmem:[%s329 + $0x22] sm:$0xff]
        %v827 = vld [vmem:[%s329 + $0x32] sm:$0xff]
        %v828 = vld [vmem:[%s329 + $0x3a] sm:$0xff]
        %v829 = vld [vmem:[%s329 + $0x4a] sm:$0xff]
        %v830 = vld [vmem:[%s329 + $0x52] sm:$0xff]
        %v831 = vld [vmem:[%s329 + $0x62] sm:$0xff]
        %v832 = vld [vmem:[%s329 + $0x6a] sm:$0xff]
        %v833 = vld [vmem:[%s329 + $0x7a] sm:$0xff]
        %v834 = vld [vmem:[%s329 + $0x82] sm:$0xff]
        %v835 = vld [vmem:[%s329 + $0x92] sm:$0xff]
        %v836 = vld [vmem:[%s329 + $0x9a] sm:$0xff]
        %v837 = vld [vmem:[%s329 + $0xaa] sm:$0xff]
        %v838 = vld [vmem:[%s329 + $0xb2] sm:$0xff]
        %v839 = vld [vmem:[%s329 + $0xc2] sm:$0xff]
        %v840 = vld [vmem:[%s329 + $0xca] sm:$0xff]
        %v841 = vld [vmem:[%s329 + $0xda] sm:$0xff]
        %v842 = vld [vmem:[%s329 + $0xe2] sm:$0xff]
        %v843 = vld [vmem:[%s329 + $0xf2] sm:$0xff]
        %v844 = vld [vmem:[%s329 + $0xfa] sm:$0xff]
        %v845 = vld [vmem:[%s329 + $0x10a] sm:$0xff]
        %v846 = vld [vmem:[%s329 + $0x112] sm:$0xff]
        %v847 = vld [vmem:[%s329 + $0x122] sm:$0xff]
        %v848 = vld [vmem:[%s329 + $0x12a] sm:$0xff]
        %v849 = vld [vmem:[%s329 + $0x13a] sm:$0xff]
        %v850 = vld [vmem:[%s329 + $0x142] sm:$0xff]
        %v851 = vld [vmem:[%s329 + $0x152] sm:$0xff]
        %v852 = vld [vmem:[%s329 + $0x15a] sm:$0xff]
        %v853 = vld [vmem:[%s329 + $0x16a] sm:$0xff]
        %v854 = vld [vmem:[%s329 + $0x172] sm:$0xff]
        %s855 = scalar_lea.vmem %s1, 8
        %v856 = vld [vmem:[%s855] sm:$0x7]
        %v858 = vsel %vm397, %v823, 0
        %v861 = vsel %vm397, %v824, 0
        %v864 = vsel %vm397, %v825, 0
        %v867 = vsel %vm397, %v826, 0
        %v870 = vsel %vm397, %v827, 0
        %v873 = vsel %vm397, %v828, 0
        %v876 = vsel %vm397, %v829, 0
        %v879 = vsel %vm397, %v830, 0
        %v882 = vsel %vm397, %v831, 0
        %v885 = vsel %vm397, %v832, 0
        %v888 = vsel %vm397, %v833, 0
        %v891 = vsel %vm397, %v834, 0
        %v894 = vsel %vm397, %v835, 0
        %v897 = vsel %vm397, %v836, 0
        %v900 = vsel %vm397, %v837, 0
        %v903 = vsel %vm397, %v838, 0
        %v906 = vsel %vm397, %v839, 0
        %v909 = vsel %vm397, %v840, 0
        %v912 = vsel %vm397, %v841, 0
        %v915 = vsel %vm397, %v842, 0
        %v918 = vsel %vm397, %v843, 0
        %v921 = vsel %vm397, %v844, 0
        %v924 = vsel %vm397, %v845, 0
        %v927 = vsel %vm397, %v846, 0
        %v930 = vsel %vm397, %v847, 0
        %v933 = vsel %vm397, %v848, 0
        %v936 = vsel %vm397, %v849, 0
        %v939 = vsel %vm397, %v850, 0
        %v942 = vsel %vm397, %v851, 0
        %v945 = vsel %vm397, %v852, 0
        %v948 = vsel %vm397, %v853, 0
        %v951 = vsel %vm397, %v854, 0
        %v954 = vsel %vm494, %v856, 0
        %956 = vmatpush.msra.mxu0 0.0
        %957 = vmatpush.msra.mxu0 0.0
        %958 = vmatpush.msra.mxu0 0.0
        %959 = vmatpush.msra.mxu0 0.0
        %960 = vmatpush.msra.mxu0 0.0
        %961 = vmatpush.msra.mxu0 0.0
        %962 = vmatpush.msra.mxu0 0.0
        %963 = vmatpush.msra.mxu0 0.0
        %964 = vmatpush.msra.mxu0 0.0
        %965 = vmatpush.msra.mxu0 0.0
        %966 = vmatpush.msra.mxu0 0.0
        %967 = vmatpush.msra.mxu0 0.0
        %968 = vmatpush.msra.mxu0 0.0
        %969 = vmatpush.msra.mxu0 0.0
        %970 = vmatpush.msra.mxu0 0.0
        %971 = vmatpush.msra.mxu0 %v954
        %972 = vmatmul.f32.gmra.mxu0 %v858
        %v973 = vpop.f32.mrf.mxu0
        %v974 = vadd.f32 0.0, %v973
        %975 = vmatmul.f32.gmra.mxu0 %v861
        %v976 = vpop.f32.mrf.mxu0
        %v977 = vadd.f32 0.0, %v976
        %978 = vmatmul.f32.gmra.mxu0 %v864
        %v979 = vpop.f32.mrf.mxu0
        %v980 = vadd.f32 0.0, %v979
        %981 = vmatmul.f32.gmra.mxu0 %v867
        %v982 = vpop.f32.mrf.mxu0
        %v983 = vadd.f32 0.0, %v982
        %984 = vmatmul.f32.gmra.mxu0 %v870
        %v985 = vpop.f32.mrf.mxu0
        %v986 = vadd.f32 0.0, %v985
        %987 = vmatmul.f32.gmra.mxu0 %v873
        %v988 = vpop.f32.mrf.mxu0
        %v989 = vadd.f32 0.0, %v988
        %990 = vmatmul.f32.gmra.mxu0 %v876
        %v991 = vpop.f32.mrf.mxu0
        %v992 = vadd.f32 0.0, %v991
        %993 = vmatmul.f32.gmra.mxu0 %v879
        %v994 = vpop.f32.mrf.mxu0
        %v995 = vadd.f32 0.0, %v994
        %996 = vmatmul.f32.gmra.mxu0 %v882
        %v997 = vpop.f32.mrf.mxu0
        %v998 = vadd.f32 0.0, %v997
        %999 = vmatmul.f32.gmra.mxu0 %v885
        %v1000 = vpop.f32.mrf.mxu0
        %v1001 = vadd.f32 0.0, %v1000
        %1002 = vmatmul.f32.gmra.mxu0 %v888
        %v1003 = vpop.f32.mrf.mxu0
        %v1004 = vadd.f32 0.0, %v1003
        %1005 = vmatmul.f32.gmra.mxu0 %v891
        %v1006 = vpop.f32.mrf.mxu0
        %v1007 = vadd.f32 0.0, %v1006
        %1008 = vmatmul.f32.gmra.mxu0 %v894
        %v1009 = vpop.f32.mrf.mxu0
        %v1010 = vadd.f32 0.0, %v1009
        %1011 = vmatmul.f32.gmra.mxu0 %v897
        %v1012 = vpop.f32.mrf.mxu0
        %v1013 = vadd.f32 0.0, %v1012
        %1014 = vmatmul.f32.gmra.mxu0 %v900
        %v1015 = vpop.f32.mrf.mxu0
        %v1016 = vadd.f32 0.0, %v1015
        %1017 = vmatmul.f32.gmra.mxu0 %v903
        %v1018 = vpop.f32.mrf.mxu0
        %v1019 = vadd.f32 0.0, %v1018
        %1020 = vmatmul.f32.gmra.mxu0 %v906
        %v1021 = vpop.f32.mrf.mxu0
        %v1022 = vadd.f32 0.0, %v1021
        %1023 = vmatmul.f32.gmra.mxu0 %v909
        %v1024 = vpop.f32.mrf.mxu0
        %v1025 = vadd.f32 0.0, %v1024
        %1026 = vmatmul.f32.gmra.mxu0 %v912
        %v1027 = vpop.f32.mrf.mxu0
        %v1028 = vadd.f32 0.0, %v1027
        %1029 = vmatmul.f32.gmra.mxu0 %v915
        %v1030 = vpop.f32.mrf.mxu0
        %v1031 = vadd.f32 0.0, %v1030
        %1032 = vmatmul.f32.gmra.mxu0 %v918
        %v1033 = vpop.f32.mrf.mxu0
        %v1034 = vadd.f32 0.0, %v1033
        %1035 = vmatmul.f32.gmra.mxu0 %v921
        %v1036 = vpop.f32.mrf.mxu0
        %v1037 = vadd.f32 0.0, %v1036
        %1038 = vmatmul.f32.gmra.mxu0 %v924
        %v1039 = vpop.f32.mrf.mxu0
        %v1040 = vadd.f32 0.0, %v1039
        %1041 = vmatmul.f32.gmra.mxu0 %v927
        %v1042 = vpop.f32.mrf.mxu0
        %v1043 = vadd.f32 0.0, %v1042
        %1044 = vmatmul.f32.gmra.mxu0 %v930
        %v1045 = vpop.f32.mrf.mxu0
        %v1046 = vadd.f32 0.0, %v1045
        %1047 = vmatmul.f32.gmra.mxu0 %v933
        %v1048 = vpop.f32.mrf.mxu0
        %v1049 = vadd.f32 0.0, %v1048
        %1050 = vmatmul.f32.gmra.mxu0 %v936
        %v1051 = vpop.f32.mrf.mxu0
        %v1052 = vadd.f32 0.0, %v1051
        %1053 = vmatmul.f32.gmra.mxu0 %v939
        %v1054 = vpop.f32.mrf.mxu0
        %v1055 = vadd.f32 0.0, %v1054
        %1056 = vmatmul.f32.gmra.mxu0 %v942
        %v1057 = vpop.f32.mrf.mxu0
        %v1058 = vadd.f32 0.0, %v1057
        %1059 = vmatmul.f32.gmra.mxu0 %v945
        %v1060 = vpop.f32.mrf.mxu0
        %v1061 = vadd.f32 0.0, %v1060
        %1062 = vmatmul.f32.gmra.mxu0 %v948
        %v1063 = vpop.f32.mrf.mxu0
        %v1064 = vadd.f32 0.0, %v1063
        %1065 = vmatmul.f32.gmra.mxu0 %v951
        %v1066 = vpop.f32.mrf.mxu0
        %v1067 = vadd.f32 0.0, %v1066
        %1068 = vdwg.mxu0
        %v1069 = vadd.f32 %v728, %v974
        %v1070 = vadd.f32 %v731, %v977
        %v1071 = vadd.f32 %v734, %v980
        %v1072 = vadd.f32 %v737, %v983
        %v1073 = vadd.f32 %v740, %v986
        %v1074 = vadd.f32 %v743, %v989
        %v1075 = vadd.f32 %v746, %v992
        %v1076 = vadd.f32 %v749, %v995
        %v1077 = vadd.f32 %v752, %v998
        %v1078 = vadd.f32 %v755, %v1001
        %v1079 = vadd.f32 %v758, %v1004
        %v1080 = vadd.f32 %v761, %v1007
        %v1081 = vadd.f32 %v764, %v1010
        %v1082 = vadd.f32 %v767, %v1013
        %v1083 = vadd.f32 %v770, %v1016
        %v1084 = vadd.f32 %v773, %v1019
        %v1085 = vadd.f32 %v776, %v1022
        %v1086 = vadd.f32 %v779, %v1025
        %v1087 = vadd.f32 %v782, %v1028
        %v1088 = vadd.f32 %v785, %v1031
        %v1089 = vadd.f32 %v788, %v1034
        %v1090 = vadd.f32 %v791, %v1037
        %v1091 = vadd.f32 %v794, %v1040
        %v1092 = vadd.f32 %v797, %v1043
        %v1093 = vadd.f32 %v800, %v1046
        %v1094 = vadd.f32 %v803, %v1049
        %v1095 = vadd.f32 %v806, %v1052
        %v1096 = vadd.f32 %v809, %v1055
        %v1097 = vadd.f32 %v812, %v1058
        %v1098 = vadd.f32 %v815, %v1061
        %v1099 = vadd.f32 %v818, %v1064
        %v1100 = vadd.f32 %v821, %v1067
        %s1101 = scalar_lea.vmem %s329, 24
        %v1102 = vld [vmem:[%s1101] sm:$0xff]
        %v1103 = vld [vmem:[%s1101 + $0x8] sm:$0xff]
        %v1104 = vld [vmem:[%s1101 + $0x18] sm:$0xff]
        %v1105 = vld [vmem:[%s1101 + $0x20] sm:$0xff]
        %v1106 = vld [vmem:[%s1101 + $0x30] sm:$0xff]
        %v1107 = vld [vmem:[%s1101 + $0x38] sm:$0xff]
        %v1108 = vld [vmem:[%s1101 + $0x48] sm:$0xff]
        %v1109 = vld [vmem:[%s1101 + $0x50] sm:$0xff]
        %v1110 = vld [vmem:[%s1101 + $0x60] sm:$0xff]
        %v1111 = vld [vmem:[%s1101 + $0x68] sm:$0xff]
        %v1112 = vld [vmem:[%s1101 + $0x78] sm:$0xff]
        %v1113 = vld [vmem:[%s1101 + $0x80] sm:$0xff]
        %v1114 = vld [vmem:[%s1101 + $0x90] sm:$0xff]
        %v1115 = vld [vmem:[%s1101 + $0x98] sm:$0xff]
        %v1116 = vld [vmem:[%s1101 + $0xa8] sm:$0xff]
        %v1117 = vld [vmem:[%s1101 + $0xb0] sm:$0xff]
        %v1118 = vld [vmem:[%s1101 + $0xc0] sm:$0xff]
        %v1119 = vld [vmem:[%s1101 + $0xc8] sm:$0xff]
        %v1120 = vld [vmem:[%s1101 + $0xd8] sm:$0xff]
        %v1121 = vld [vmem:[%s1101 + $0xe0] sm:$0xff]
        %v1122 = vld [vmem:[%s1101 + $0xf0] sm:$0xff]
        %v1123 = vld [vmem:[%s1101 + $0xf8] sm:$0xff]
        %v1124 = vld [vmem:[%s1101 + $0x108] sm:$0xff]
        %v1125 = vld [vmem:[%s1101 + $0x110] sm:$0xff]
        %v1126 = vld [vmem:[%s1101 + $0x120] sm:$0xff]
        %v1127 = vld [vmem:[%s1101 + $0x128] sm:$0xff]
        %v1128 = vld [vmem:[%s1101 + $0x138] sm:$0xff]
        %v1129 = vld [vmem:[%s1101 + $0x140] sm:$0xff]
        %v1130 = vld [vmem:[%s1101 + $0x150] sm:$0xff]
        %v1131 = vld [vmem:[%s1101 + $0x158] sm:$0xff]
        %v1132 = vld [vmem:[%s1101 + $0x168] sm:$0xff]
        %v1133 = vld [vmem:[%s1101 + $0x170] sm:$0xff]
        %s1134 = scalar_lea.vmem %s1, 12
        %v1135 = vld [vmem:[%s1134] sm:$0x7]
        %v1137 = vsel %vm397, %v1102, 0
        %v1140 = vsel %vm397, %v1103, 0
        %v1143 = vsel %vm397, %v1104, 0
        %v1146 = vsel %vm397, %v1105, 0
        %v1149 = vsel %vm397, %v1106, 0
        %v1152 = vsel %vm397, %v1107, 0
        %v1155 = vsel %vm397, %v1108, 0
        %v1158 = vsel %vm397, %v1109, 0
        %v1161 = vsel %vm397, %v1110, 0
        %v1164 = vsel %vm397, %v1111, 0
        %v1167 = vsel %vm397, %v1112, 0
        %v1170 = vsel %vm397, %v1113, 0
        %v1173 = vsel %vm397, %v1114, 0
        %v1176 = vsel %vm397, %v1115, 0
        %v1179 = vsel %vm397, %v1116, 0
        %v1182 = vsel %vm397, %v1117, 0
        %v1185 = vsel %vm397, %v1118, 0
        %v1188 = vsel %vm397, %v1119, 0
        %v1191 = vsel %vm397, %v1120, 0
        %v1194 = vsel %vm397, %v1121, 0
        %v1197 = vsel %vm397, %v1122, 0
        %v1200 = vsel %vm397, %v1123, 0
        %v1203 = vsel %vm397, %v1124, 0
        %v1206 = vsel %vm397, %v1125, 0
        %v1209 = vsel %vm397, %v1126, 0
        %v1212 = vsel %vm397, %v1127, 0
        %v1215 = vsel %vm397, %v1128, 0
        %v1218 = vsel %vm397, %v1129, 0
        %v1221 = vsel %vm397, %v1130, 0
        %v1224 = vsel %vm397, %v1131, 0
        %v1227 = vsel %vm397, %v1132, 0
        %v1230 = vsel %vm397, %v1133, 0
        %v1233 = vsel %vm494, %v1135, 0
        %1235 = vmatpush.msra.mxu0 0.0
        %1236 = vmatpush.msra.mxu0 0.0
        %1237 = vmatpush.msra.mxu0 0.0
        %1238 = vmatpush.msra.mxu0 0.0
        %1239 = vmatpush.msra.mxu0 0.0
        %1240 = vmatpush.msra.mxu0 0.0
        %1241 = vmatpush.msra.mxu0 0.0
        %1242 = vmatpush.msra.mxu0 0.0
        %1243 = vmatpush.msra.mxu0 0.0
        %1244 = vmatpush.msra.mxu0 0.0
        %1245 = vmatpush.msra.mxu0 0.0
        %1246 = vmatpush.msra.mxu0 0.0
        %1247 = vmatpush.msra.mxu0 0.0
        %1248 = vmatpush.msra.mxu0 0.0
        %1249 = vmatpush.msra.mxu0 0.0
        %1250 = vmatpush.msra.mxu0 %v1233
        %1251 = vmatmul.f32.gmra.mxu0 %v1137
        %v1252 = vpop.f32.mrf.mxu0
        %v1253 = vadd.f32 0.0, %v1252
        %1254 = vmatmul.f32.gmra.mxu0 %v1140
        %v1255 = vpop.f32.mrf.mxu0
        %v1256 = vadd.f32 0.0, %v1255
        %1257 = vmatmul.f32.gmra.mxu0 %v1143
        %v1258 = vpop.f32.mrf.mxu0
        %v1259 = vadd.f32 0.0, %v1258
        %1260 = vmatmul.f32.gmra.mxu0 %v1146
        %v1261 = vpop.f32.mrf.mxu0
        %v1262 = vadd.f32 0.0, %v1261
        %1263 = vmatmul.f32.gmra.mxu0 %v1149
        %v1264 = vpop.f32.mrf.mxu0
        %v1265 = vadd.f32 0.0, %v1264
        %1266 = vmatmul.f32.gmra.mxu0 %v1152
        %v1267 = vpop.f32.mrf.mxu0
        %v1268 = vadd.f32 0.0, %v1267
        %1269 = vmatmul.f32.gmra.mxu0 %v1155
        %v1270 = vpop.f32.mrf.mxu0
        %v1271 = vadd.f32 0.0, %v1270
        %1272 = vmatmul.f32.gmra.mxu0 %v1158
        %v1273 = vpop.f32.mrf.mxu0
        %v1274 = vadd.f32 0.0, %v1273
        %1275 = vmatmul.f32.gmra.mxu0 %v1161
        %v1276 = vpop.f32.mrf.mxu0
        %v1277 = vadd.f32 0.0, %v1276
        %1278 = vmatmul.f32.gmra.mxu0 %v1164
        %v1279 = vpop.f32.mrf.mxu0
        %v1280 = vadd.f32 0.0, %v1279
        %1281 = vmatmul.f32.gmra.mxu0 %v1167
        %v1282 = vpop.f32.mrf.mxu0
        %v1283 = vadd.f32 0.0, %v1282
        %1284 = vmatmul.f32.gmra.mxu0 %v1170
        %v1285 = vpop.f32.mrf.mxu0
        %v1286 = vadd.f32 0.0, %v1285
        %1287 = vmatmul.f32.gmra.mxu0 %v1173
        %v1288 = vpop.f32.mrf.mxu0
        %v1289 = vadd.f32 0.0, %v1288
        %1290 = vmatmul.f32.gmra.mxu0 %v1176
        %v1291 = vpop.f32.mrf.mxu0
        %v1292 = vadd.f32 0.0, %v1291
        %1293 = vmatmul.f32.gmra.mxu0 %v1179
        %v1294 = vpop.f32.mrf.mxu0
        %v1295 = vadd.f32 0.0, %v1294
        %1296 = vmatmul.f32.gmra.mxu0 %v1182
        %v1297 = vpop.f32.mrf.mxu0
        %v1298 = vadd.f32 0.0, %v1297
        %1299 = vmatmul.f32.gmra.mxu0 %v1185
        %v1300 = vpop.f32.mrf.mxu0
        %v1301 = vadd.f32 0.0, %v1300
        %1302 = vmatmul.f32.gmra.mxu0 %v1188
        %v1303 = vpop.f32.mrf.mxu0
        %v1304 = vadd.f32 0.0, %v1303
        %1305 = vmatmul.f32.gmra.mxu0 %v1191
        %v1306 = vpop.f32.mrf.mxu0
        %v1307 = vadd.f32 0.0, %v1306
        %1308 = vmatmul.f32.gmra.mxu0 %v1194
        %v1309 = vpop.f32.mrf.mxu0
        %v1310 = vadd.f32 0.0, %v1309
        %1311 = vmatmul.f32.gmra.mxu0 %v1197
        %v1312 = vpop.f32.mrf.mxu0
        %v1313 = vadd.f32 0.0, %v1312
        %1314 = vmatmul.f32.gmra.mxu0 %v1200
        %v1315 = vpop.f32.mrf.mxu0
        %v1316 = vadd.f32 0.0, %v1315
        %1317 = vmatmul.f32.gmra.mxu0 %v1203
        %v1318 = vpop.f32.mrf.mxu0
        %v1319 = vadd.f32 0.0, %v1318
        %1320 = vmatmul.f32.gmra.mxu0 %v1206
        %v1321 = vpop.f32.mrf.mxu0
        %v1322 = vadd.f32 0.0, %v1321
        %1323 = vmatmul.f32.gmra.mxu0 %v1209
        %v1324 = vpop.f32.mrf.mxu0
        %v1325 = vadd.f32 0.0, %v1324
        %1326 = vmatmul.f32.gmra.mxu0 %v1212
        %v1327 = vpop.f32.mrf.mxu0
        %v1328 = vadd.f32 0.0, %v1327
        %1329 = vmatmul.f32.gmra.mxu0 %v1215
        %v1330 = vpop.f32.mrf.mxu0
        %v1331 = vadd.f32 0.0, %v1330
        %1332 = vmatmul.f32.gmra.mxu0 %v1218
        %v1333 = vpop.f32.mrf.mxu0
        %v1334 = vadd.f32 0.0, %v1333
        %1335 = vmatmul.f32.gmra.mxu0 %v1221
        %v1336 = vpop.f32.mrf.mxu0
        %v1337 = vadd.f32 0.0, %v1336
        %1338 = vmatmul.f32.gmra.mxu0 %v1224
        %v1339 = vpop.f32.mrf.mxu0
        %v1340 = vadd.f32 0.0, %v1339
        %1341 = vmatmul.f32.gmra.mxu0 %v1227
        %v1342 = vpop.f32.mrf.mxu0
        %v1343 = vadd.f32 0.0, %v1342
        %1344 = vmatmul.f32.gmra.mxu0 %v1230
        %v1345 = vpop.f32.mrf.mxu0
        %v1346 = vadd.f32 0.0, %v1345
        %1347 = vdwg.mxu0
        %v1348 = vadd.f32 %v1069, %v1253
        %v1349 = vadd.f32 %v1070, %v1256
        %v1350 = vadd.f32 %v1071, %v1259
        %v1351 = vadd.f32 %v1072, %v1262
        %v1352 = vadd.f32 %v1073, %v1265
        %v1353 = vadd.f32 %v1074, %v1268
        %v1354 = vadd.f32 %v1075, %v1271
        %v1355 = vadd.f32 %v1076, %v1274
        %v1356 = vadd.f32 %v1077, %v1277
        %v1357 = vadd.f32 %v1078, %v1280
        %v1358 = vadd.f32 %v1079, %v1283
        %v1359 = vadd.f32 %v1080, %v1286
        %v1360 = vadd.f32 %v1081, %v1289
        %v1361 = vadd.f32 %v1082, %v1292
        %v1362 = vadd.f32 %v1083, %v1295
        %v1363 = vadd.f32 %v1084, %v1298
        %v1364 = vadd.f32 %v1085, %v1301
        %v1365 = vadd.f32 %v1086, %v1304
        %v1366 = vadd.f32 %v1087, %v1307
        %v1367 = vadd.f32 %v1088, %v1310
        %v1368 = vadd.f32 %v1089, %v1313
        %v1369 = vadd.f32 %v1090, %v1316
        %v1370 = vadd.f32 %v1091, %v1319
        %v1371 = vadd.f32 %v1092, %v1322
        %v1372 = vadd.f32 %v1093, %v1325
        %v1373 = vadd.f32 %v1094, %v1328
        %v1374 = vadd.f32 %v1095, %v1331
        %v1375 = vadd.f32 %v1096, %v1334
        %v1376 = vadd.f32 %v1097, %v1337
        %v1377 = vadd.f32 %v1098, %v1340
        %v1378 = vadd.f32 %v1099, %v1343
        %v1379 = vadd.f32 %v1100, %v1346
        %v1380 = vld [vmem:[%s1101 + $0x1] sm:$0xff]
        %v1381 = vld [vmem:[%s1101 + $0x9] sm:$0xff]
        %v1382 = vld [vmem:[%s1101 + $0x19] sm:$0xff]
        %v1383 = vld [vmem:[%s1101 + $0x21] sm:$0xff]
        %v1384 = vld [vmem:[%s1101 + $0x31] sm:$0xff]
        %v1385 = vld [vmem:[%s1101 + $0x39] sm:$0xff]
        %v1386 = vld [vmem:[%s1101 + $0x49] sm:$0xff]
        %v1387 = vld [vmem:[%s1101 + $0x51] sm:$0xff]
        %v1388 = vld [vmem:[%s1101 + $0x61] sm:$0xff]
        %v1389 = vld [vmem:[%s1101 + $0x69] sm:$0xff]
        %v1390 = vld [vmem:[%s1101 + $0x79] sm:$0xff]
        %v1391 = vld [vmem:[%s1101 + $0x81] sm:$0xff]
        %v1392 = vld [vmem:[%s1101 + $0x91] sm:$0xff]
        %v1393 = vld [vmem:[%s1101 + $0x99] sm:$0xff]
        %v1394 = vld [vmem:[%s1101 + $0xa9] sm:$0xff]
        %v1395 = vld [vmem:[%s1101 + $0xb1] sm:$0xff]
        %v1396 = vld [vmem:[%s1101 + $0xc1] sm:$0xff]
        %v1397 = vld [vmem:[%s1101 + $0xc9] sm:$0xff]
        %v1398 = vld [vmem:[%s1101 + $0xd9] sm:$0xff]
        %v1399 = vld [vmem:[%s1101 + $0xe1] sm:$0xff]
        %v1400 = vld [vmem:[%s1101 + $0xf1] sm:$0xff]
        %v1401 = vld [vmem:[%s1101 + $0xf9] sm:$0xff]
        %v1402 = vld [vmem:[%s1101 + $0x109] sm:$0xff]
        %v1403 = vld [vmem:[%s1101 + $0x111] sm:$0xff]
        %v1404 = vld [vmem:[%s1101 + $0x121] sm:$0xff]
        %v1405 = vld [vmem:[%s1101 + $0x129] sm:$0xff]
        %v1406 = vld [vmem:[%s1101 + $0x139] sm:$0xff]
        %v1407 = vld [vmem:[%s1101 + $0x141] sm:$0xff]
        %v1408 = vld [vmem:[%s1101 + $0x151] sm:$0xff]
        %v1409 = vld [vmem:[%s1101 + $0x159] sm:$0xff]
        %v1410 = vld [vmem:[%s1101 + $0x169] sm:$0xff]
        %v1411 = vld [vmem:[%s1101 + $0x171] sm:$0xff]
        %s1412 = scalar_lea.vmem %s1, 16
        %v1413 = vld [vmem:[%s1412] sm:$0x7]
        %v1415 = vsel %vm397, %v1380, 0
        %v1418 = vsel %vm397, %v1381, 0
        %v1421 = vsel %vm397, %v1382, 0
        %v1424 = vsel %vm397, %v1383, 0
        %v1427 = vsel %vm397, %v1384, 0
        %v1430 = vsel %vm397, %v1385, 0
        %v1433 = vsel %vm397, %v1386, 0
        %v1436 = vsel %vm397, %v1387, 0
        %v1439 = vsel %vm397, %v1388, 0
        %v1442 = vsel %vm397, %v1389, 0
        %v1445 = vsel %vm397, %v1390, 0
        %v1448 = vsel %vm397, %v1391, 0
        %v1451 = vsel %vm397, %v1392, 0
        %v1454 = vsel %vm397, %v1393, 0
        %v1457 = vsel %vm397, %v1394, 0
        %v1460 = vsel %vm397, %v1395, 0
        %v1463 = vsel %vm397, %v1396, 0
        %v1466 = vsel %vm397, %v1397, 0
        %v1469 = vsel %vm397, %v1398, 0
        %v1472 = vsel %vm397, %v1399, 0
        %v1475 = vsel %vm397, %v1400, 0
        %v1478 = vsel %vm397, %v1401, 0
        %v1481 = vsel %vm397, %v1402, 0
        %v1484 = vsel %vm397, %v1403, 0
        %v1487 = vsel %vm397, %v1404, 0
        %v1490 = vsel %vm397, %v1405, 0
        %v1493 = vsel %vm397, %v1406, 0
        %v1496 = vsel %vm397, %v1407, 0
        %v1499 = vsel %vm397, %v1408, 0
        %v1502 = vsel %vm397, %v1409, 0
        %v1505 = vsel %vm397, %v1410, 0
        %v1508 = vsel %vm397, %v1411, 0
        %v1511 = vsel %vm494, %v1413, 0
        %1513 = vmatpush.msra.mxu0 0.0
        %1514 = vmatpush.msra.mxu0 0.0
        %1515 = vmatpush.msra.mxu0 0.0
        %1516 = vmatpush.msra.mxu0 0.0
        %1517 = vmatpush.msra.mxu0 0.0
        %1518 = vmatpush.msra.mxu0 0.0
        %1519 = vmatpush.msra.mxu0 0.0
        %1520 = vmatpush.msra.mxu0 0.0
        %1521 = vmatpush.msra.mxu0 0.0
        %1522 = vmatpush.msra.mxu0 0.0
        %1523 = vmatpush.msra.mxu0 0.0
        %1524 = vmatpush.msra.mxu0 0.0
        %1525 = vmatpush.msra.mxu0 0.0
        %1526 = vmatpush.msra.mxu0 0.0
        %1527 = vmatpush.msra.mxu0 0.0
        %1528 = vmatpush.msra.mxu0 %v1511
        %1529 = vmatmul.f32.gmra.mxu0 %v1415
        %v1530 = vpop.f32.mrf.mxu0
        %v1531 = vadd.f32 0.0, %v1530
        %1532 = vmatmul.f32.gmra.mxu0 %v1418
        %v1533 = vpop.f32.mrf.mxu0
        %v1534 = vadd.f32 0.0, %v1533
        %1535 = vmatmul.f32.gmra.mxu0 %v1421
        %v1536 = vpop.f32.mrf.mxu0
        %v1537 = vadd.f32 0.0, %v1536
        %1538 = vmatmul.f32.gmra.mxu0 %v1424
        %v1539 = vpop.f32.mrf.mxu0
        %v1540 = vadd.f32 0.0, %v1539
        %1541 = vmatmul.f32.gmra.mxu0 %v1427
        %v1542 = vpop.f32.mrf.mxu0
        %v1543 = vadd.f32 0.0, %v1542
        %1544 = vmatmul.f32.gmra.mxu0 %v1430
        %v1545 = vpop.f32.mrf.mxu0
        %v1546 = vadd.f32 0.0, %v1545
        %1547 = vmatmul.f32.gmra.mxu0 %v1433
        %v1548 = vpop.f32.mrf.mxu0
        %v1549 = vadd.f32 0.0, %v1548
        %1550 = vmatmul.f32.gmra.mxu0 %v1436
        %v1551 = vpop.f32.mrf.mxu0
        %v1552 = vadd.f32 0.0, %v1551
        %1553 = vmatmul.f32.gmra.mxu0 %v1439
        %v1554 = vpop.f32.mrf.mxu0
        %v1555 = vadd.f32 0.0, %v1554
        %1556 = vmatmul.f32.gmra.mxu0 %v1442
        %v1557 = vpop.f32.mrf.mxu0
        %v1558 = vadd.f32 0.0, %v1557
        %1559 = vmatmul.f32.gmra.mxu0 %v1445
        %v1560 = vpop.f32.mrf.mxu0
        %v1561 = vadd.f32 0.0, %v1560
        %1562 = vmatmul.f32.gmra.mxu0 %v1448
        %v1563 = vpop.f32.mrf.mxu0
        %v1564 = vadd.f32 0.0, %v1563
        %1565 = vmatmul.f32.gmra.mxu0 %v1451
        %v1566 = vpop.f32.mrf.mxu0
        %v1567 = vadd.f32 0.0, %v1566
        %1568 = vmatmul.f32.gmra.mxu0 %v1454
        %v1569 = vpop.f32.mrf.mxu0
        %v1570 = vadd.f32 0.0, %v1569
        %1571 = vmatmul.f32.gmra.mxu0 %v1457
        %v1572 = vpop.f32.mrf.mxu0
        %v1573 = vadd.f32 0.0, %v1572
        %1574 = vmatmul.f32.gmra.mxu0 %v1460
        %v1575 = vpop.f32.mrf.mxu0
        %v1576 = vadd.f32 0.0, %v1575
        %1577 = vmatmul.f32.gmra.mxu0 %v1463
        %v1578 = vpop.f32.mrf.mxu0
        %v1579 = vadd.f32 0.0, %v1578
        %1580 = vmatmul.f32.gmra.mxu0 %v1466
        %v1581 = vpop.f32.mrf.mxu0
        %v1582 = vadd.f32 0.0, %v1581
        %1583 = vmatmul.f32.gmra.mxu0 %v1469
        %v1584 = vpop.f32.mrf.mxu0
        %v1585 = vadd.f32 0.0, %v1584
        %1586 = vmatmul.f32.gmra.mxu0 %v1472
        %v1587 = vpop.f32.mrf.mxu0
        %v1588 = vadd.f32 0.0, %v1587
        %1589 = vmatmul.f32.gmra.mxu0 %v1475
        %v1590 = vpop.f32.mrf.mxu0
        %v1591 = vadd.f32 0.0, %v1590
        %1592 = vmatmul.f32.gmra.mxu0 %v1478
        %v1593 = vpop.f32.mrf.mxu0
        %v1594 = vadd.f32 0.0, %v1593
        %1595 = vmatmul.f32.gmra.mxu0 %v1481
        %v1596 = vpop.f32.mrf.mxu0
        %v1597 = vadd.f32 0.0, %v1596
        %1598 = vmatmul.f32.gmra.mxu0 %v1484
        %v1599 = vpop.f32.mrf.mxu0
        %v1600 = vadd.f32 0.0, %v1599
        %1601 = vmatmul.f32.gmra.mxu0 %v1487
        %v1602 = vpop.f32.mrf.mxu0
        %v1603 = vadd.f32 0.0, %v1602
        %1604 = vmatmul.f32.gmra.mxu0 %v1490
        %v1605 = vpop.f32.mrf.mxu0
        %v1606 = vadd.f32 0.0, %v1605
        %1607 = vmatmul.f32.gmra.mxu0 %v1493
        %v1608 = vpop.f32.mrf.mxu0
        %v1609 = vadd.f32 0.0, %v1608
        %1610 = vmatmul.f32.gmra.mxu0 %v1496
        %v1611 = vpop.f32.mrf.mxu0
        %v1612 = vadd.f32 0.0, %v1611
        %1613 = vmatmul.f32.gmra.mxu0 %v1499
        %v1614 = vpop.f32.mrf.mxu0
        %v1615 = vadd.f32 0.0, %v1614
        %1616 = vmatmul.f32.gmra.mxu0 %v1502
        %v1617 = vpop.f32.mrf.mxu0
        %v1618 = vadd.f32 0.0, %v1617
        %1619 = vmatmul.f32.gmra.mxu0 %v1505
        %v1620 = vpop.f32.mrf.mxu0
        %v1621 = vadd.f32 0.0, %v1620
        %1622 = vmatmul.f32.gmra.mxu0 %v1508
        %v1623 = vpop.f32.mrf.mxu0
        %v1624 = vadd.f32 0.0, %v1623
        %1625 = vdwg.mxu0
        %v1626 = vadd.f32 %v1348, %v1531
        %v1627 = vadd.f32 %v1349, %v1534
        %v1628 = vadd.f32 %v1350, %v1537
        %v1629 = vadd.f32 %v1351, %v1540
        %v1630 = vadd.f32 %v1352, %v1543
        %v1631 = vadd.f32 %v1353, %v1546
        %v1632 = vadd.f32 %v1354, %v1549
        %v1633 = vadd.f32 %v1355, %v1552
        %v1634 = vadd.f32 %v1356, %v1555
        %v1635 = vadd.f32 %v1357, %v1558
        %v1636 = vadd.f32 %v1358, %v1561
        %v1637 = vadd.f32 %v1359, %v1564
        %v1638 = vadd.f32 %v1360, %v1567
        %v1639 = vadd.f32 %v1361, %v1570
        %v1640 = vadd.f32 %v1362, %v1573
        %v1641 = vadd.f32 %v1363, %v1576
        %v1642 = vadd.f32 %v1364, %v1579
        %v1643 = vadd.f32 %v1365, %v1582
        %v1644 = vadd.f32 %v1366, %v1585
        %v1645 = vadd.f32 %v1367, %v1588
        %v1646 = vadd.f32 %v1368, %v1591
        %v1647 = vadd.f32 %v1369, %v1594
        %v1648 = vadd.f32 %v1370, %v1597
        %v1649 = vadd.f32 %v1371, %v1600
        %v1650 = vadd.f32 %v1372, %v1603
        %v1651 = vadd.f32 %v1373, %v1606
        %v1652 = vadd.f32 %v1374, %v1609
        %v1653 = vadd.f32 %v1375, %v1612
        %v1654 = vadd.f32 %v1376, %v1615
        %v1655 = vadd.f32 %v1377, %v1618
        %v1656 = vadd.f32 %v1378, %v1621
        %v1657 = vadd.f32 %v1379, %v1624
        %v1658 = vld [vmem:[%s1101 + $0x2] sm:$0xff]
        %v1659 = vld [vmem:[%s1101 + $0xa] sm:$0xff]
        %v1660 = vld [vmem:[%s1101 + $0x1a] sm:$0xff]
        %v1661 = vld [vmem:[%s1101 + $0x22] sm:$0xff]
        %v1662 = vld [vmem:[%s1101 + $0x32] sm:$0xff]
        %v1663 = vld [vmem:[%s1101 + $0x3a] sm:$0xff]
        %v1664 = vld [vmem:[%s1101 + $0x4a] sm:$0xff]
        %v1665 = vld [vmem:[%s1101 + $0x52] sm:$0xff]
        %v1666 = vld [vmem:[%s1101 + $0x62] sm:$0xff]
        %v1667 = vld [vmem:[%s1101 + $0x6a] sm:$0xff]
        %v1668 = vld [vmem:[%s1101 + $0x7a] sm:$0xff]
        %v1669 = vld [vmem:[%s1101 + $0x82] sm:$0xff]
        %v1670 = vld [vmem:[%s1101 + $0x92] sm:$0xff]
        %v1671 = vld [vmem:[%s1101 + $0x9a] sm:$0xff]
        %v1672 = vld [vmem:[%s1101 + $0xaa] sm:$0xff]
        %v1673 = vld [vmem:[%s1101 + $0xb2] sm:$0xff]
        %v1674 = vld [vmem:[%s1101 + $0xc2] sm:$0xff]
        %v1675 = vld [vmem:[%s1101 + $0xca] sm:$0xff]
        %v1676 = vld [vmem:[%s1101 + $0xda] sm:$0xff]
        %v1677 = vld [vmem:[%s1101 + $0xe2] sm:$0xff]
        %v1678 = vld [vmem:[%s1101 + $0xf2] sm:$0xff]
        %v1679 = vld [vmem:[%s1101 + $0xfa] sm:$0xff]
        %v1680 = vld [vmem:[%s1101 + $0x10a] sm:$0xff]
        %v1681 = vld [vmem:[%s1101 + $0x112] sm:$0xff]
        %v1682 = vld [vmem:[%s1101 + $0x122] sm:$0xff]
        %v1683 = vld [vmem:[%s1101 + $0x12a] sm:$0xff]
        %v1684 = vld [vmem:[%s1101 + $0x13a] sm:$0xff]
        %v1685 = vld [vmem:[%s1101 + $0x142] sm:$0xff]
        %v1686 = vld [vmem:[%s1101 + $0x152] sm:$0xff]
        %v1687 = vld [vmem:[%s1101 + $0x15a] sm:$0xff]
        %v1688 = vld [vmem:[%s1101 + $0x16a] sm:$0xff]
        %v1689 = vld [vmem:[%s1101 + $0x172] sm:$0xff]
        %s1690 = scalar_lea.vmem %s1, 20
        %v1691 = vld [vmem:[%s1690] sm:$0x7]
        %v1693 = vsel %vm397, %v1658, 0
        %v1696 = vsel %vm397, %v1659, 0
        %v1699 = vsel %vm397, %v1660, 0
        %v1702 = vsel %vm397, %v1661, 0
        %v1705 = vsel %vm397, %v1662, 0
        %v1708 = vsel %vm397, %v1663, 0
        %v1711 = vsel %vm397, %v1664, 0
        %v1714 = vsel %vm397, %v1665, 0
        %v1717 = vsel %vm397, %v1666, 0
        %v1720 = vsel %vm397, %v1667, 0
        %v1723 = vsel %vm397, %v1668, 0
        %v1726 = vsel %vm397, %v1669, 0
        %v1729 = vsel %vm397, %v1670, 0
        %v1732 = vsel %vm397, %v1671, 0
        %v1735 = vsel %vm397, %v1672, 0
        %v1738 = vsel %vm397, %v1673, 0
        %v1741 = vsel %vm397, %v1674, 0
        %v1744 = vsel %vm397, %v1675, 0
        %v1747 = vsel %vm397, %v1676, 0
        %v1750 = vsel %vm397, %v1677, 0
        %v1753 = vsel %vm397, %v1678, 0
        %v1756 = vsel %vm397, %v1679, 0
        %v1759 = vsel %vm397, %v1680, 0
        %v1762 = vsel %vm397, %v1681, 0
        %v1765 = vsel %vm397, %v1682, 0
        %v1768 = vsel %vm397, %v1683, 0
        %v1771 = vsel %vm397, %v1684, 0
        %v1774 = vsel %vm397, %v1685, 0
        %v1777 = vsel %vm397, %v1686, 0
        %v1780 = vsel %vm397, %v1687, 0
        %v1783 = vsel %vm397, %v1688, 0
        %v1786 = vsel %vm397, %v1689, 0
        %v1789 = vsel %vm494, %v1691, 0
        %1791 = vmatpush.msra.mxu0 0.0
        %1792 = vmatpush.msra.mxu0 0.0
        %1793 = vmatpush.msra.mxu0 0.0
        %1794 = vmatpush.msra.mxu0 0.0
        %1795 = vmatpush.msra.mxu0 0.0
        %1796 = vmatpush.msra.mxu0 0.0
        %1797 = vmatpush.msra.mxu0 0.0
        %1798 = vmatpush.msra.mxu0 0.0
        %1799 = vmatpush.msra.mxu0 0.0
        %1800 = vmatpush.msra.mxu0 0.0
        %1801 = vmatpush.msra.mxu0 0.0
        %1802 = vmatpush.msra.mxu0 0.0
        %1803 = vmatpush.msra.mxu0 0.0
        %1804 = vmatpush.msra.mxu0 0.0
        %1805 = vmatpush.msra.mxu0 0.0
        %1806 = vmatpush.msra.mxu0 %v1789
        %1807 = vmatmul.f32.gmra.mxu0 %v1693
        %v1808 = vpop.f32.mrf.mxu0
        %v1809 = vadd.f32 0.0, %v1808
        %1810 = vmatmul.f32.gmra.mxu0 %v1696
        %v1811 = vpop.f32.mrf.mxu0
        %v1812 = vadd.f32 0.0, %v1811
        %1813 = vmatmul.f32.gmra.mxu0 %v1699
        %v1814 = vpop.f32.mrf.mxu0
        %v1815 = vadd.f32 0.0, %v1814
        %1816 = vmatmul.f32.gmra.mxu0 %v1702
        %v1817 = vpop.f32.mrf.mxu0
        %v1818 = vadd.f32 0.0, %v1817
        %1819 = vmatmul.f32.gmra.mxu0 %v1705
        %v1820 = vpop.f32.mrf.mxu0
        %v1821 = vadd.f32 0.0, %v1820
        %1822 = vmatmul.f32.gmra.mxu0 %v1708
        %v1823 = vpop.f32.mrf.mxu0
        %v1824 = vadd.f32 0.0, %v1823
        %1825 = vmatmul.f32.gmra.mxu0 %v1711
        %v1826 = vpop.f32.mrf.mxu0
        %v1827 = vadd.f32 0.0, %v1826
        %1828 = vmatmul.f32.gmra.mxu0 %v1714
        %v1829 = vpop.f32.mrf.mxu0
        %v1830 = vadd.f32 0.0, %v1829
        %1831 = vmatmul.f32.gmra.mxu0 %v1717
        %v1832 = vpop.f32.mrf.mxu0
        %v1833 = vadd.f32 0.0, %v1832
        %1834 = vmatmul.f32.gmra.mxu0 %v1720
        %v1835 = vpop.f32.mrf.mxu0
        %v1836 = vadd.f32 0.0, %v1835
        %1837 = vmatmul.f32.gmra.mxu0 %v1723
        %v1838 = vpop.f32.mrf.mxu0
        %v1839 = vadd.f32 0.0, %v1838
        %1840 = vmatmul.f32.gmra.mxu0 %v1726
        %v1841 = vpop.f32.mrf.mxu0
        %v1842 = vadd.f32 0.0, %v1841
        %1843 = vmatmul.f32.gmra.mxu0 %v1729
        %v1844 = vpop.f32.mrf.mxu0
        %v1845 = vadd.f32 0.0, %v1844
        %1846 = vmatmul.f32.gmra.mxu0 %v1732
        %v1847 = vpop.f32.mrf.mxu0
        %v1848 = vadd.f32 0.0, %v1847
        %1849 = vmatmul.f32.gmra.mxu0 %v1735
        %v1850 = vpop.f32.mrf.mxu0
        %v1851 = vadd.f32 0.0, %v1850
        %1852 = vmatmul.f32.gmra.mxu0 %v1738
        %v1853 = vpop.f32.mrf.mxu0
        %v1854 = vadd.f32 0.0, %v1853
        %1855 = vmatmul.f32.gmra.mxu0 %v1741
        %v1856 = vpop.f32.mrf.mxu0
        %v1857 = vadd.f32 0.0, %v1856
        %1858 = vmatmul.f32.gmra.mxu0 %v1744
        %v1859 = vpop.f32.mrf.mxu0
        %v1860 = vadd.f32 0.0, %v1859
        %1861 = vmatmul.f32.gmra.mxu0 %v1747
        %v1862 = vpop.f32.mrf.mxu0
        %v1863 = vadd.f32 0.0, %v1862
        %1864 = vmatmul.f32.gmra.mxu0 %v1750
        %v1865 = vpop.f32.mrf.mxu0
        %v1866 = vadd.f32 0.0, %v1865
        %1867 = vmatmul.f32.gmra.mxu0 %v1753
        %v1868 = vpop.f32.mrf.mxu0
        %v1869 = vadd.f32 0.0, %v1868
        %1870 = vmatmul.f32.gmra.mxu0 %v1756
        %v1871 = vpop.f32.mrf.mxu0
        %v1872 = vadd.f32 0.0, %v1871
        %1873 = vmatmul.f32.gmra.mxu0 %v1759
        %v1874 = vpop.f32.mrf.mxu0
        %v1875 = vadd.f32 0.0, %v1874
        %1876 = vmatmul.f32.gmra.mxu0 %v1762
        %v1877 = vpop.f32.mrf.mxu0
        %v1878 = vadd.f32 0.0, %v1877
        %1879 = vmatmul.f32.gmra.mxu0 %v1765
        %v1880 = vpop.f32.mrf.mxu0
        %v1881 = vadd.f32 0.0, %v1880
        %1882 = vmatmul.f32.gmra.mxu0 %v1768
        %v1883 = vpop.f32.mrf.mxu0
        %v1884 = vadd.f32 0.0, %v1883
        %1885 = vmatmul.f32.gmra.mxu0 %v1771
        %v1886 = vpop.f32.mrf.mxu0
        %v1887 = vadd.f32 0.0, %v1886
        %1888 = vmatmul.f32.gmra.mxu0 %v1774
        %v1889 = vpop.f32.mrf.mxu0
        %v1890 = vadd.f32 0.0, %v1889
        %1891 = vmatmul.f32.gmra.mxu0 %v1777
        %v1892 = vpop.f32.mrf.mxu0
        %v1893 = vadd.f32 0.0, %v1892
        %1894 = vmatmul.f32.gmra.mxu0 %v1780
        %v1895 = vpop.f32.mrf.mxu0
        %v1896 = vadd.f32 0.0, %v1895
        %1897 = vmatmul.f32.gmra.mxu0 %v1783
        %v1898 = vpop.f32.mrf.mxu0
        %v1899 = vadd.f32 0.0, %v1898
        %1900 = vmatmul.f32.gmra.mxu0 %v1786
        %v1901 = vpop.f32.mrf.mxu0
        %v1902 = vadd.f32 0.0, %v1901
        %1903 = vdwg.mxu0
        %v1904 = vadd.f32 %v1626, %v1809
        %v1905 = vadd.f32 %v1627, %v1812
        %v1906 = vadd.f32 %v1628, %v1815
        %v1907 = vadd.f32 %v1629, %v1818
        %v1908 = vadd.f32 %v1630, %v1821
        %v1909 = vadd.f32 %v1631, %v1824
        %v1910 = vadd.f32 %v1632, %v1827
        %v1911 = vadd.f32 %v1633, %v1830
        %v1912 = vadd.f32 %v1634, %v1833
        %v1913 = vadd.f32 %v1635, %v1836
        %v1914 = vadd.f32 %v1636, %v1839
        %v1915 = vadd.f32 %v1637, %v1842
        %v1916 = vadd.f32 %v1638, %v1845
        %v1917 = vadd.f32 %v1639, %v1848
        %v1918 = vadd.f32 %v1640, %v1851
        %v1919 = vadd.f32 %v1641, %v1854
        %v1920 = vadd.f32 %v1642, %v1857
        %v1921 = vadd.f32 %v1643, %v1860
        %v1922 = vadd.f32 %v1644, %v1863
        %v1923 = vadd.f32 %v1645, %v1866
        %v1924 = vadd.f32 %v1646, %v1869
        %v1925 = vadd.f32 %v1647, %v1872
        %v1926 = vadd.f32 %v1648, %v1875
        %v1927 = vadd.f32 %v1649, %v1878
        %v1928 = vadd.f32 %v1650, %v1881
        %v1929 = vadd.f32 %v1651, %v1884
        %v1930 = vadd.f32 %v1652, %v1887
        %v1931 = vadd.f32 %v1653, %v1890
        %v1932 = vadd.f32 %v1654, %v1893
        %v1933 = vadd.f32 %v1655, %v1896
        %v1934 = vadd.f32 %v1656, %v1899
        %v1935 = vadd.f32 %v1657, %v1902
        %s1936 = scalar_lea.vmem %s329, 48
        %v1937 = vld [vmem:[%s1936] sm:$0xff]
        %v1938 = vld [vmem:[%s1936 + $0x8] sm:$0xff]
        %v1939 = vld [vmem:[%s1936 + $0x18] sm:$0xff]
        %v1940 = vld [vmem:[%s1936 + $0x20] sm:$0xff]
        %v1941 = vld [vmem:[%s1936 + $0x30] sm:$0xff]
        %v1942 = vld [vmem:[%s1936 + $0x38] sm:$0xff]
        %v1943 = vld [vmem:[%s1936 + $0x48] sm:$0xff]
        %v1944 = vld [vmem:[%s1936 + $0x50] sm:$0xff]
        %v1945 = vld [vmem:[%s1936 + $0x60] sm:$0xff]
        %v1946 = vld [vmem:[%s1936 + $0x68] sm:$0xff]
        %v1947 = vld [vmem:[%s1936 + $0x78] sm:$0xff]
        %v1948 = vld [vmem:[%s1936 + $0x80] sm:$0xff]
        %v1949 = vld [vmem:[%s1936 + $0x90] sm:$0xff]
        %v1950 = vld [vmem:[%s1936 + $0x98] sm:$0xff]
        %v1951 = vld [vmem:[%s1936 + $0xa8] sm:$0xff]
        %v1952 = vld [vmem:[%s1936 + $0xb0] sm:$0xff]
        %v1953 = vld [vmem:[%s1936 + $0xc0] sm:$0xff]
        %v1954 = vld [vmem:[%s1936 + $0xc8] sm:$0xff]
        %v1955 = vld [vmem:[%s1936 + $0xd8] sm:$0xff]
        %v1956 = vld [vmem:[%s1936 + $0xe0] sm:$0xff]
        %v1957 = vld [vmem:[%s1936 + $0xf0] sm:$0xff]
        %v1958 = vld [vmem:[%s1936 + $0xf8] sm:$0xff]
        %v1959 = vld [vmem:[%s1936 + $0x108] sm:$0xff]
        %v1960 = vld [vmem:[%s1936 + $0x110] sm:$0xff]
        %v1961 = vld [vmem:[%s1936 + $0x120] sm:$0xff]
        %v1962 = vld [vmem:[%s1936 + $0x128] sm:$0xff]
        %v1963 = vld [vmem:[%s1936 + $0x138] sm:$0xff]
        %v1964 = vld [vmem:[%s1936 + $0x140] sm:$0xff]
        %v1965 = vld [vmem:[%s1936 + $0x150] sm:$0xff]
        %v1966 = vld [vmem:[%s1936 + $0x158] sm:$0xff]
        %v1967 = vld [vmem:[%s1936 + $0x168] sm:$0xff]
        %v1968 = vld [vmem:[%s1936 + $0x170] sm:$0xff]
        %s1969 = scalar_lea.vmem %s1, 24
        %v1970 = vld [vmem:[%s1969] sm:$0x7]
        %v1972 = vsel %vm397, %v1937, 0
        %v1975 = vsel %vm397, %v1938, 0
        %v1978 = vsel %vm397, %v1939, 0
        %v1981 = vsel %vm397, %v1940, 0
        %v1984 = vsel %vm397, %v1941, 0
        %v1987 = vsel %vm397, %v1942, 0
        %v1990 = vsel %vm397, %v1943, 0
        %v1993 = vsel %vm397, %v1944, 0
        %v1996 = vsel %vm397, %v1945, 0
        %v1999 = vsel %vm397, %v1946, 0
        %v2002 = vsel %vm397, %v1947, 0
        %v2005 = vsel %vm397, %v1948, 0
        %v2008 = vsel %vm397, %v1949, 0
        %v2011 = vsel %vm397, %v1950, 0
        %v2014 = vsel %vm397, %v1951, 0
        %v2017 = vsel %vm397, %v1952, 0
        %v2020 = vsel %vm397, %v1953, 0
        %v2023 = vsel %vm397, %v1954, 0
        %v2026 = vsel %vm397, %v1955, 0
        %v2029 = vsel %vm397, %v1956, 0
        %v2032 = vsel %vm397, %v1957, 0
        %v2035 = vsel %vm397, %v1958, 0
        %v2038 = vsel %vm397, %v1959, 0
        %v2041 = vsel %vm397, %v1960, 0
        %v2044 = vsel %vm397, %v1961, 0
        %v2047 = vsel %vm397, %v1962, 0
        %v2050 = vsel %vm397, %v1963, 0
        %v2053 = vsel %vm397, %v1964, 0
        %v2056 = vsel %vm397, %v1965, 0
        %v2059 = vsel %vm397, %v1966, 0
        %v2062 = vsel %vm397, %v1967, 0
        %v2065 = vsel %vm397, %v1968, 0
        %v2068 = vsel %vm494, %v1970, 0
        %2070 = vmatpush.msra.mxu0 0.0
        %2071 = vmatpush.msra.mxu0 0.0
        %2072 = vmatpush.msra.mxu0 0.0
        %2073 = vmatpush.msra.mxu0 0.0
        %2074 = vmatpush.msra.mxu0 0.0
        %2075 = vmatpush.msra.mxu0 0.0
        %2076 = vmatpush.msra.mxu0 0.0
        %2077 = vmatpush.msra.mxu0 0.0
        %2078 = vmatpush.msra.mxu0 0.0
        %2079 = vmatpush.msra.mxu0 0.0
        %2080 = vmatpush.msra.mxu0 0.0
        %2081 = vmatpush.msra.mxu0 0.0
        %2082 = vmatpush.msra.mxu0 0.0
        %2083 = vmatpush.msra.mxu0 0.0
        %2084 = vmatpush.msra.mxu0 0.0
        %2085 = vmatpush.msra.mxu0 %v2068
        %2086 = vmatmul.f32.gmra.mxu0 %v1972
        %v2087 = vpop.f32.mrf.mxu0
        %v2088 = vadd.f32 0.0, %v2087
        %2089 = vmatmul.f32.gmra.mxu0 %v1975
        %v2090 = vpop.f32.mrf.mxu0
        %v2091 = vadd.f32 0.0, %v2090
        %2092 = vmatmul.f32.gmra.mxu0 %v1978
        %v2093 = vpop.f32.mrf.mxu0
        %v2094 = vadd.f32 0.0, %v2093
        %2095 = vmatmul.f32.gmra.mxu0 %v1981
        %v2096 = vpop.f32.mrf.mxu0
        %v2097 = vadd.f32 0.0, %v2096
        %2098 = vmatmul.f32.gmra.mxu0 %v1984
        %v2099 = vpop.f32.mrf.mxu0
        %v2100 = vadd.f32 0.0, %v2099
        %2101 = vmatmul.f32.gmra.mxu0 %v1987
        %v2102 = vpop.f32.mrf.mxu0
        %v2103 = vadd.f32 0.0, %v2102
        %2104 = vmatmul.f32.gmra.mxu0 %v1990
        %v2105 = vpop.f32.mrf.mxu0
        %v2106 = vadd.f32 0.0, %v2105
        %2107 = vmatmul.f32.gmra.mxu0 %v1993
        %v2108 = vpop.f32.mrf.mxu0
        %v2109 = vadd.f32 0.0, %v2108
        %2110 = vmatmul.f32.gmra.mxu0 %v1996
        %v2111 = vpop.f32.mrf.mxu0
        %v2112 = vadd.f32 0.0, %v2111
        %2113 = vmatmul.f32.gmra.mxu0 %v1999
        %v2114 = vpop.f32.mrf.mxu0
        %v2115 = vadd.f32 0.0, %v2114
        %2116 = vmatmul.f32.gmra.mxu0 %v2002
        %v2117 = vpop.f32.mrf.mxu0
        %v2118 = vadd.f32 0.0, %v2117
        %2119 = vmatmul.f32.gmra.mxu0 %v2005
        %v2120 = vpop.f32.mrf.mxu0
        %v2121 = vadd.f32 0.0, %v2120
        %2122 = vmatmul.f32.gmra.mxu0 %v2008
        %v2123 = vpop.f32.mrf.mxu0
        %v2124 = vadd.f32 0.0, %v2123
        %2125 = vmatmul.f32.gmra.mxu0 %v2011
        %v2126 = vpop.f32.mrf.mxu0
        %v2127 = vadd.f32 0.0, %v2126
        %2128 = vmatmul.f32.gmra.mxu0 %v2014
        %v2129 = vpop.f32.mrf.mxu0
        %v2130 = vadd.f32 0.0, %v2129
        %2131 = vmatmul.f32.gmra.mxu0 %v2017
        %v2132 = vpop.f32.mrf.mxu0
        %v2133 = vadd.f32 0.0, %v2132
        %2134 = vmatmul.f32.gmra.mxu0 %v2020
        %v2135 = vpop.f32.mrf.mxu0
        %v2136 = vadd.f32 0.0, %v2135
        %2137 = vmatmul.f32.gmra.mxu0 %v2023
        %v2138 = vpop.f32.mrf.mxu0
        %v2139 = vadd.f32 0.0, %v2138
        %2140 = vmatmul.f32.gmra.mxu0 %v2026
        %v2141 = vpop.f32.mrf.mxu0
        %v2142 = vadd.f32 0.0, %v2141
        %2143 = vmatmul.f32.gmra.mxu0 %v2029
        %v2144 = vpop.f32.mrf.mxu0
        %v2145 = vadd.f32 0.0, %v2144
        %2146 = vmatmul.f32.gmra.mxu0 %v2032
        %v2147 = vpop.f32.mrf.mxu0
        %v2148 = vadd.f32 0.0, %v2147
        %2149 = vmatmul.f32.gmra.mxu0 %v2035
        %v2150 = vpop.f32.mrf.mxu0
        %v2151 = vadd.f32 0.0, %v2150
        %2152 = vmatmul.f32.gmra.mxu0 %v2038
        %v2153 = vpop.f32.mrf.mxu0
        %v2154 = vadd.f32 0.0, %v2153
        %2155 = vmatmul.f32.gmra.mxu0 %v2041
        %v2156 = vpop.f32.mrf.mxu0
        %v2157 = vadd.f32 0.0, %v2156
        %2158 = vmatmul.f32.gmra.mxu0 %v2044
        %v2159 = vpop.f32.mrf.mxu0
        %v2160 = vadd.f32 0.0, %v2159
        %2161 = vmatmul.f32.gmra.mxu0 %v2047
        %v2162 = vpop.f32.mrf.mxu0
        %v2163 = vadd.f32 0.0, %v2162
        %2164 = vmatmul.f32.gmra.mxu0 %v2050
        %v2165 = vpop.f32.mrf.mxu0
        %v2166 = vadd.f32 0.0, %v2165
        %2167 = vmatmul.f32.gmra.mxu0 %v2053
        %v2168 = vpop.f32.mrf.mxu0
        %v2169 = vadd.f32 0.0, %v2168
        %2170 = vmatmul.f32.gmra.mxu0 %v2056
        %v2171 = vpop.f32.mrf.mxu0
        %v2172 = vadd.f32 0.0, %v2171
        %2173 = vmatmul.f32.gmra.mxu0 %v2059
        %v2174 = vpop.f32.mrf.mxu0
        %v2175 = vadd.f32 0.0, %v2174
        %2176 = vmatmul.f32.gmra.mxu0 %v2062
        %v2177 = vpop.f32.mrf.mxu0
        %v2178 = vadd.f32 0.0, %v2177
        %2179 = vmatmul.f32.gmra.mxu0 %v2065
        %v2180 = vpop.f32.mrf.mxu0
        %v2181 = vadd.f32 0.0, %v2180
        %2182 = vdwg.mxu0
        %v2183 = vadd.f32 %v1904, %v2088
        %v2184 = vadd.f32 %v1905, %v2091
        %v2185 = vadd.f32 %v1906, %v2094
        %v2186 = vadd.f32 %v1907, %v2097
        %v2187 = vadd.f32 %v1908, %v2100
        %v2188 = vadd.f32 %v1909, %v2103
        %v2189 = vadd.f32 %v1910, %v2106
        %v2190 = vadd.f32 %v1911, %v2109
        %v2191 = vadd.f32 %v1912, %v2112
        %v2192 = vadd.f32 %v1913, %v2115
        %v2193 = vadd.f32 %v1914, %v2118
        %v2194 = vadd.f32 %v1915, %v2121
        %v2195 = vadd.f32 %v1916, %v2124
        %v2196 = vadd.f32 %v1917, %v2127
        %v2197 = vadd.f32 %v1918, %v2130
        %v2198 = vadd.f32 %v1919, %v2133
        %v2199 = vadd.f32 %v1920, %v2136
        %v2200 = vadd.f32 %v1921, %v2139
        %v2201 = vadd.f32 %v1922, %v2142
        %v2202 = vadd.f32 %v1923, %v2145
        %v2203 = vadd.f32 %v1924, %v2148
        %v2204 = vadd.f32 %v1925, %v2151
        %v2205 = vadd.f32 %v1926, %v2154
        %v2206 = vadd.f32 %v1927, %v2157
        %v2207 = vadd.f32 %v1928, %v2160
        %v2208 = vadd.f32 %v1929, %v2163
        %v2209 = vadd.f32 %v1930, %v2166
        %v2210 = vadd.f32 %v1931, %v2169
        %v2211 = vadd.f32 %v1932, %v2172
        %v2212 = vadd.f32 %v1933, %v2175
        %v2213 = vadd.f32 %v1934, %v2178
        %v2214 = vadd.f32 %v1935, %v2181
        %v2215 = vld [vmem:[%s1936 + $0x1] sm:$0xff]
        %v2216 = vld [vmem:[%s1936 + $0x9] sm:$0xff]
        %v2217 = vld [vmem:[%s1936 + $0x19] sm:$0xff]
        %v2218 = vld [vmem:[%s1936 + $0x21] sm:$0xff]
        %v2219 = vld [vmem:[%s1936 + $0x31] sm:$0xff]
        %v2220 = vld [vmem:[%s1936 + $0x39] sm:$0xff]
        %v2221 = vld [vmem:[%s1936 + $0x49] sm:$0xff]
        %v2222 = vld [vmem:[%s1936 + $0x51] sm:$0xff]
        %v2223 = vld [vmem:[%s1936 + $0x61] sm:$0xff]
        %v2224 = vld [vmem:[%s1936 + $0x69] sm:$0xff]
        %v2225 = vld [vmem:[%s1936 + $0x79] sm:$0xff]
        %v2226 = vld [vmem:[%s1936 + $0x81] sm:$0xff]
        %v2227 = vld [vmem:[%s1936 + $0x91] sm:$0xff]
        %v2228 = vld [vmem:[%s1936 + $0x99] sm:$0xff]
        %v2229 = vld [vmem:[%s1936 + $0xa9] sm:$0xff]
        %v2230 = vld [vmem:[%s1936 + $0xb1] sm:$0xff]
        %v2231 = vld [vmem:[%s1936 + $0xc1] sm:$0xff]
        %v2232 = vld [vmem:[%s1936 + $0xc9] sm:$0xff]
        %v2233 = vld [vmem:[%s1936 + $0xd9] sm:$0xff]
        %v2234 = vld [vmem:[%s1936 + $0xe1] sm:$0xff]
        %v2235 = vld [vmem:[%s1936 + $0xf1] sm:$0xff]
        %v2236 = vld [vmem:[%s1936 + $0xf9] sm:$0xff]
        %v2237 = vld [vmem:[%s1936 + $0x109] sm:$0xff]
        %v2238 = vld [vmem:[%s1936 + $0x111] sm:$0xff]
        %v2239 = vld [vmem:[%s1936 + $0x121] sm:$0xff]
        %v2240 = vld [vmem:[%s1936 + $0x129] sm:$0xff]
        %v2241 = vld [vmem:[%s1936 + $0x139] sm:$0xff]
        %v2242 = vld [vmem:[%s1936 + $0x141] sm:$0xff]
        %v2243 = vld [vmem:[%s1936 + $0x151] sm:$0xff]
        %v2244 = vld [vmem:[%s1936 + $0x159] sm:$0xff]
        %v2245 = vld [vmem:[%s1936 + $0x169] sm:$0xff]
        %v2246 = vld [vmem:[%s1936 + $0x171] sm:$0xff]
        %s2247 = scalar_lea.vmem %s1, 28
        %v2248 = vld [vmem:[%s2247] sm:$0x7]
        %v2250 = vsel %vm397, %v2215, 0
        %v2253 = vsel %vm397, %v2216, 0
        %v2256 = vsel %vm397, %v2217, 0
        %v2259 = vsel %vm397, %v2218, 0
        %v2262 = vsel %vm397, %v2219, 0
        %v2265 = vsel %vm397, %v2220, 0
        %v2268 = vsel %vm397, %v2221, 0
        %v2271 = vsel %vm397, %v2222, 0
        %v2274 = vsel %vm397, %v2223, 0
        %v2277 = vsel %vm397, %v2224, 0
        %v2280 = vsel %vm397, %v2225, 0
        %v2283 = vsel %vm397, %v2226, 0
        %v2286 = vsel %vm397, %v2227, 0
        %v2289 = vsel %vm397, %v2228, 0
        %v2292 = vsel %vm397, %v2229, 0
        %v2295 = vsel %vm397, %v2230, 0
        %v2298 = vsel %vm397, %v2231, 0
        %v2301 = vsel %vm397, %v2232, 0
        %v2304 = vsel %vm397, %v2233, 0
        %v2307 = vsel %vm397, %v2234, 0
        %v2310 = vsel %vm397, %v2235, 0
        %v2313 = vsel %vm397, %v2236, 0
        %v2316 = vsel %vm397, %v2237, 0
        %v2319 = vsel %vm397, %v2238, 0
        %v2322 = vsel %vm397, %v2239, 0
        %v2325 = vsel %vm397, %v2240, 0
        %v2328 = vsel %vm397, %v2241, 0
        %v2331 = vsel %vm397, %v2242, 0
        %v2334 = vsel %vm397, %v2243, 0
        %v2337 = vsel %vm397, %v2244, 0
        %v2340 = vsel %vm397, %v2245, 0
        %v2343 = vsel %vm397, %v2246, 0
        %v2346 = vsel %vm494, %v2248, 0
        %2348 = vmatpush.msra.mxu0 0.0
        %2349 = vmatpush.msra.mxu0 0.0
        %2350 = vmatpush.msra.mxu0 0.0
        %2351 = vmatpush.msra.mxu0 0.0
        %2352 = vmatpush.msra.mxu0 0.0
        %2353 = vmatpush.msra.mxu0 0.0
        %2354 = vmatpush.msra.mxu0 0.0
        %2355 = vmatpush.msra.mxu0 0.0
        %2356 = vmatpush.msra.mxu0 0.0
        %2357 = vmatpush.msra.mxu0 0.0
        %2358 = vmatpush.msra.mxu0 0.0
        %2359 = vmatpush.msra.mxu0 0.0
        %2360 = vmatpush.msra.mxu0 0.0
        %2361 = vmatpush.msra.mxu0 0.0
        %2362 = vmatpush.msra.mxu0 0.0
        %2363 = vmatpush.msra.mxu0 %v2346
        %2364 = vmatmul.f32.gmra.mxu0 %v2250
        %v2365 = vpop.f32.mrf.mxu0
        %v2366 = vadd.f32 0.0, %v2365
        %2367 = vmatmul.f32.gmra.mxu0 %v2253
        %v2368 = vpop.f32.mrf.mxu0
        %v2369 = vadd.f32 0.0, %v2368
        %2370 = vmatmul.f32.gmra.mxu0 %v2256
        %v2371 = vpop.f32.mrf.mxu0
        %v2372 = vadd.f32 0.0, %v2371
        %2373 = vmatmul.f32.gmra.mxu0 %v2259
        %v2374 = vpop.f32.mrf.mxu0
        %v2375 = vadd.f32 0.0, %v2374
        %2376 = vmatmul.f32.gmra.mxu0 %v2262
        %v2377 = vpop.f32.mrf.mxu0
        %v2378 = vadd.f32 0.0, %v2377
        %2379 = vmatmul.f32.gmra.mxu0 %v2265
        %v2380 = vpop.f32.mrf.mxu0
        %v2381 = vadd.f32 0.0, %v2380
        %2382 = vmatmul.f32.gmra.mxu0 %v2268
        %v2383 = vpop.f32.mrf.mxu0
        %v2384 = vadd.f32 0.0, %v2383
        %2385 = vmatmul.f32.gmra.mxu0 %v2271
        %v2386 = vpop.f32.mrf.mxu0
        %v2387 = vadd.f32 0.0, %v2386
        %2388 = vmatmul.f32.gmra.mxu0 %v2274
        %v2389 = vpop.f32.mrf.mxu0
        %v2390 = vadd.f32 0.0, %v2389
        %2391 = vmatmul.f32.gmra.mxu0 %v2277
        %v2392 = vpop.f32.mrf.mxu0
        %v2393 = vadd.f32 0.0, %v2392
        %2394 = vmatmul.f32.gmra.mxu0 %v2280
        %v2395 = vpop.f32.mrf.mxu0
        %v2396 = vadd.f32 0.0, %v2395
        %2397 = vmatmul.f32.gmra.mxu0 %v2283
        %v2398 = vpop.f32.mrf.mxu0
        %v2399 = vadd.f32 0.0, %v2398
        %2400 = vmatmul.f32.gmra.mxu0 %v2286
        %v2401 = vpop.f32.mrf.mxu0
        %v2402 = vadd.f32 0.0, %v2401
        %2403 = vmatmul.f32.gmra.mxu0 %v2289
        %v2404 = vpop.f32.mrf.mxu0
        %v2405 = vadd.f32 0.0, %v2404
        %2406 = vmatmul.f32.gmra.mxu0 %v2292
        %v2407 = vpop.f32.mrf.mxu0
        %v2408 = vadd.f32 0.0, %v2407
        %2409 = vmatmul.f32.gmra.mxu0 %v2295
        %v2410 = vpop.f32.mrf.mxu0
        %v2411 = vadd.f32 0.0, %v2410
        %2412 = vmatmul.f32.gmra.mxu0 %v2298
        %v2413 = vpop.f32.mrf.mxu0
        %v2414 = vadd.f32 0.0, %v2413
        %2415 = vmatmul.f32.gmra.mxu0 %v2301
        %v2416 = vpop.f32.mrf.mxu0
        %v2417 = vadd.f32 0.0, %v2416
        %2418 = vmatmul.f32.gmra.mxu0 %v2304
        %v2419 = vpop.f32.mrf.mxu0
        %v2420 = vadd.f32 0.0, %v2419
        %2421 = vmatmul.f32.gmra.mxu0 %v2307
        %v2422 = vpop.f32.mrf.mxu0
        %v2423 = vadd.f32 0.0, %v2422
        %2424 = vmatmul.f32.gmra.mxu0 %v2310
        %v2425 = vpop.f32.mrf.mxu0
        %v2426 = vadd.f32 0.0, %v2425
        %2427 = vmatmul.f32.gmra.mxu0 %v2313
        %v2428 = vpop.f32.mrf.mxu0
        %v2429 = vadd.f32 0.0, %v2428
        %2430 = vmatmul.f32.gmra.mxu0 %v2316
        %v2431 = vpop.f32.mrf.mxu0
        %v2432 = vadd.f32 0.0, %v2431
        %2433 = vmatmul.f32.gmra.mxu0 %v2319
        %v2434 = vpop.f32.mrf.mxu0
        %v2435 = vadd.f32 0.0, %v2434
        %2436 = vmatmul.f32.gmra.mxu0 %v2322
        %v2437 = vpop.f32.mrf.mxu0
        %v2438 = vadd.f32 0.0, %v2437
        %2439 = vmatmul.f32.gmra.mxu0 %v2325
        %v2440 = vpop.f32.mrf.mxu0
        %v2441 = vadd.f32 0.0, %v2440
        %2442 = vmatmul.f32.gmra.mxu0 %v2328
        %v2443 = vpop.f32.mrf.mxu0
        %v2444 = vadd.f32 0.0, %v2443
        %2445 = vmatmul.f32.gmra.mxu0 %v2331
        %v2446 = vpop.f32.mrf.mxu0
        %v2447 = vadd.f32 0.0, %v2446
        %2448 = vmatmul.f32.gmra.mxu0 %v2334
        %v2449 = vpop.f32.mrf.mxu0
        %v2450 = vadd.f32 0.0, %v2449
        %2451 = vmatmul.f32.gmra.mxu0 %v2337
        %v2452 = vpop.f32.mrf.mxu0
        %v2453 = vadd.f32 0.0, %v2452
        %2454 = vmatmul.f32.gmra.mxu0 %v2340
        %v2455 = vpop.f32.mrf.mxu0
        %v2456 = vadd.f32 0.0, %v2455
        %2457 = vmatmul.f32.gmra.mxu0 %v2343
        %v2458 = vpop.f32.mrf.mxu0
        %v2459 = vadd.f32 0.0, %v2458
        %2460 = vdwg.mxu0
        %v2461 = vadd.f32 %v2183, %v2366
        %v2462 = vadd.f32 %v2184, %v2369
        %v2463 = vadd.f32 %v2185, %v2372
        %v2464 = vadd.f32 %v2186, %v2375
        %v2465 = vadd.f32 %v2187, %v2378
        %v2466 = vadd.f32 %v2188, %v2381
        %v2467 = vadd.f32 %v2189, %v2384
        %v2468 = vadd.f32 %v2190, %v2387
        %v2469 = vadd.f32 %v2191, %v2390
        %v2470 = vadd.f32 %v2192, %v2393
        %v2471 = vadd.f32 %v2193, %v2396
        %v2472 = vadd.f32 %v2194, %v2399
        %v2473 = vadd.f32 %v2195, %v2402
        %v2474 = vadd.f32 %v2196, %v2405
        %v2475 = vadd.f32 %v2197, %v2408
        %v2476 = vadd.f32 %v2198, %v2411
        %v2477 = vadd.f32 %v2199, %v2414
        %v2478 = vadd.f32 %v2200, %v2417
        %v2479 = vadd.f32 %v2201, %v2420
        %v2480 = vadd.f32 %v2202, %v2423
        %v2481 = vadd.f32 %v2203, %v2426
        %v2482 = vadd.f32 %v2204, %v2429
        %v2483 = vadd.f32 %v2205, %v2432
        %v2484 = vadd.f32 %v2206, %v2435
        %v2485 = vadd.f32 %v2207, %v2438
        %v2486 = vadd.f32 %v2208, %v2441
        %v2487 = vadd.f32 %v2209, %v2444
        %v2488 = vadd.f32 %v2210, %v2447
        %v2489 = vadd.f32 %v2211, %v2450
        %v2490 = vadd.f32 %v2212, %v2453
        %v2491 = vadd.f32 %v2213, %v2456
        %v2492 = vadd.f32 %v2214, %v2459
        %v2493 = vld [vmem:[%s1936 + $0x2] sm:$0xff]
        %v2494 = vld [vmem:[%s1936 + $0xa] sm:$0xff]
        %v2495 = vld [vmem:[%s1936 + $0x1a] sm:$0xff]
        %v2496 = vld [vmem:[%s1936 + $0x22] sm:$0xff]
        %v2497 = vld [vmem:[%s1936 + $0x32] sm:$0xff]
        %v2498 = vld [vmem:[%s1936 + $0x3a] sm:$0xff]
        %v2499 = vld [vmem:[%s1936 + $0x4a] sm:$0xff]
        %v2500 = vld [vmem:[%s1936 + $0x52] sm:$0xff]
        %v2501 = vld [vmem:[%s1936 + $0x62] sm:$0xff]
        %v2502 = vld [vmem:[%s1936 + $0x6a] sm:$0xff]
        %v2503 = vld [vmem:[%s1936 + $0x7a] sm:$0xff]
        %v2504 = vld [vmem:[%s1936 + $0x82] sm:$0xff]
        %v2505 = vld [vmem:[%s1936 + $0x92] sm:$0xff]
        %v2506 = vld [vmem:[%s1936 + $0x9a] sm:$0xff]
        %v2507 = vld [vmem:[%s1936 + $0xaa] sm:$0xff]
        %v2508 = vld [vmem:[%s1936 + $0xb2] sm:$0xff]
        %v2509 = vld [vmem:[%s1936 + $0xc2] sm:$0xff]
        %v2510 = vld [vmem:[%s1936 + $0xca] sm:$0xff]
        %v2511 = vld [vmem:[%s1936 + $0xda] sm:$0xff]
        %v2512 = vld [vmem:[%s1936 + $0xe2] sm:$0xff]
        %v2513 = vld [vmem:[%s1936 + $0xf2] sm:$0xff]
        %v2514 = vld [vmem:[%s1936 + $0xfa] sm:$0xff]
        %v2515 = vld [vmem:[%s1936 + $0x10a] sm:$0xff]
        %v2516 = vld [vmem:[%s1936 + $0x112] sm:$0xff]
        %v2517 = vld [vmem:[%s1936 + $0x122] sm:$0xff]
        %v2518 = vld [vmem:[%s1936 + $0x12a] sm:$0xff]
        %v2519 = vld [vmem:[%s1936 + $0x13a] sm:$0xff]
        %v2520 = vld [vmem:[%s1936 + $0x142] sm:$0xff]
        %v2521 = vld [vmem:[%s1936 + $0x152] sm:$0xff]
        %v2522 = vld [vmem:[%s1936 + $0x15a] sm:$0xff]
        %v2523 = vld [vmem:[%s1936 + $0x16a] sm:$0xff]
        %v2524 = vld [vmem:[%s1936 + $0x172] sm:$0xff]
        %s2525 = scalar_lea.vmem %s1, 32
        %v2526 = vld [vmem:[%s2525] sm:$0x7]
        %v2528 = vsel %vm397, %v2493, 0
        %v2531 = vsel %vm397, %v2494, 0
        %v2534 = vsel %vm397, %v2495, 0
        %v2537 = vsel %vm397, %v2496, 0
        %v2540 = vsel %vm397, %v2497, 0
        %v2543 = vsel %vm397, %v2498, 0
        %v2546 = vsel %vm397, %v2499, 0
        %v2549 = vsel %vm397, %v2500, 0
        %v2552 = vsel %vm397, %v2501, 0
        %v2555 = vsel %vm397, %v2502, 0
        %v2558 = vsel %vm397, %v2503, 0
        %v2561 = vsel %vm397, %v2504, 0
        %v2564 = vsel %vm397, %v2505, 0
        %v2567 = vsel %vm397, %v2506, 0
        %v2570 = vsel %vm397, %v2507, 0
        %v2573 = vsel %vm397, %v2508, 0
        %v2576 = vsel %vm397, %v2509, 0
        %v2579 = vsel %vm397, %v2510, 0
        %v2582 = vsel %vm397, %v2511, 0
        %v2585 = vsel %vm397, %v2512, 0
        %v2588 = vsel %vm397, %v2513, 0
        %v2591 = vsel %vm397, %v2514, 0
        %v2594 = vsel %vm397, %v2515, 0
        %v2597 = vsel %vm397, %v2516, 0
        %v2600 = vsel %vm397, %v2517, 0
        %v2603 = vsel %vm397, %v2518, 0
        %v2606 = vsel %vm397, %v2519, 0
        %v2609 = vsel %vm397, %v2520, 0
        %v2612 = vsel %vm397, %v2521, 0
        %v2615 = vsel %vm397, %v2522, 0
        %v2618 = vsel %vm397, %v2523, 0
        %v2621 = vsel %vm397, %v2524, 0
        %v2624 = vsel %vm494, %v2526, 0
        %2626 = vmatpush.msra.mxu0 0.0
        %2627 = vmatpush.msra.mxu0 0.0
        %2628 = vmatpush.msra.mxu0 0.0
        %2629 = vmatpush.msra.mxu0 0.0
        %2630 = vmatpush.msra.mxu0 0.0
        %2631 = vmatpush.msra.mxu0 0.0
        %2632 = vmatpush.msra.mxu0 0.0
        %2633 = vmatpush.msra.mxu0 0.0
        %2634 = vmatpush.msra.mxu0 0.0
        %2635 = vmatpush.msra.mxu0 0.0
        %2636 = vmatpush.msra.mxu0 0.0
        %2637 = vmatpush.msra.mxu0 0.0
        %2638 = vmatpush.msra.mxu0 0.0
        %2639 = vmatpush.msra.mxu0 0.0
        %2640 = vmatpush.msra.mxu0 0.0
        %2641 = vmatpush.msra.mxu0 %v2624
        %2642 = vmatmul.f32.gmra.mxu0 %v2528
        %v2643 = vpop.f32.mrf.mxu0
        %v2644 = vadd.f32 0.0, %v2643
        %2645 = vmatmul.f32.gmra.mxu0 %v2531
        %v2646 = vpop.f32.mrf.mxu0
        %v2647 = vadd.f32 0.0, %v2646
        %2648 = vmatmul.f32.gmra.mxu0 %v2534
        %v2649 = vpop.f32.mrf.mxu0
        %v2650 = vadd.f32 0.0, %v2649
        %2651 = vmatmul.f32.gmra.mxu0 %v2537
        %v2652 = vpop.f32.mrf.mxu0
        %v2653 = vadd.f32 0.0, %v2652
        %2654 = vmatmul.f32.gmra.mxu0 %v2540
        %v2655 = vpop.f32.mrf.mxu0
        %v2656 = vadd.f32 0.0, %v2655
        %2657 = vmatmul.f32.gmra.mxu0 %v2543
        %v2658 = vpop.f32.mrf.mxu0
        %v2659 = vadd.f32 0.0, %v2658
        %2660 = vmatmul.f32.gmra.mxu0 %v2546
        %v2661 = vpop.f32.mrf.mxu0
        %v2662 = vadd.f32 0.0, %v2661
        %2663 = vmatmul.f32.gmra.mxu0 %v2549
        %v2664 = vpop.f32.mrf.mxu0
        %v2665 = vadd.f32 0.0, %v2664
        %2666 = vmatmul.f32.gmra.mxu0 %v2552
        %v2667 = vpop.f32.mrf.mxu0
        %v2668 = vadd.f32 0.0, %v2667
        %2669 = vmatmul.f32.gmra.mxu0 %v2555
        %v2670 = vpop.f32.mrf.mxu0
        %v2671 = vadd.f32 0.0, %v2670
        %2672 = vmatmul.f32.gmra.mxu0 %v2558
        %v2673 = vpop.f32.mrf.mxu0
        %v2674 = vadd.f32 0.0, %v2673
        %2675 = vmatmul.f32.gmra.mxu0 %v2561
        %v2676 = vpop.f32.mrf.mxu0
        %v2677 = vadd.f32 0.0, %v2676
        %2678 = vmatmul.f32.gmra.mxu0 %v2564
        %v2679 = vpop.f32.mrf.mxu0
        %v2680 = vadd.f32 0.0, %v2679
        %2681 = vmatmul.f32.gmra.mxu0 %v2567
        %v2682 = vpop.f32.mrf.mxu0
        %v2683 = vadd.f32 0.0, %v2682
        %2684 = vmatmul.f32.gmra.mxu0 %v2570
        %v2685 = vpop.f32.mrf.mxu0
        %v2686 = vadd.f32 0.0, %v2685
        %2687 = vmatmul.f32.gmra.mxu0 %v2573
        %v2688 = vpop.f32.mrf.mxu0
        %v2689 = vadd.f32 0.0, %v2688
        %2690 = vmatmul.f32.gmra.mxu0 %v2576
        %v2691 = vpop.f32.mrf.mxu0
        %v2692 = vadd.f32 0.0, %v2691
        %2693 = vmatmul.f32.gmra.mxu0 %v2579
        %v2694 = vpop.f32.mrf.mxu0
        %v2695 = vadd.f32 0.0, %v2694
        %2696 = vmatmul.f32.gmra.mxu0 %v2582
        %v2697 = vpop.f32.mrf.mxu0
        %v2698 = vadd.f32 0.0, %v2697
        %2699 = vmatmul.f32.gmra.mxu0 %v2585
        %v2700 = vpop.f32.mrf.mxu0
        %v2701 = vadd.f32 0.0, %v2700
        %2702 = vmatmul.f32.gmra.mxu0 %v2588
        %v2703 = vpop.f32.mrf.mxu0
        %v2704 = vadd.f32 0.0, %v2703
        %2705 = vmatmul.f32.gmra.mxu0 %v2591
        %v2706 = vpop.f32.mrf.mxu0
        %v2707 = vadd.f32 0.0, %v2706
        %2708 = vmatmul.f32.gmra.mxu0 %v2594
        %v2709 = vpop.f32.mrf.mxu0
        %v2710 = vadd.f32 0.0, %v2709
        %2711 = vmatmul.f32.gmra.mxu0 %v2597
        %v2712 = vpop.f32.mrf.mxu0
        %v2713 = vadd.f32 0.0, %v2712
        %2714 = vmatmul.f32.gmra.mxu0 %v2600
        %v2715 = vpop.f32.mrf.mxu0
        %v2716 = vadd.f32 0.0, %v2715
        %2717 = vmatmul.f32.gmra.mxu0 %v2603
        %v2718 = vpop.f32.mrf.mxu0
        %v2719 = vadd.f32 0.0, %v2718
        %2720 = vmatmul.f32.gmra.mxu0 %v2606
        %v2721 = vpop.f32.mrf.mxu0
        %v2722 = vadd.f32 0.0, %v2721
        %2723 = vmatmul.f32.gmra.mxu0 %v2609
        %v2724 = vpop.f32.mrf.mxu0
        %v2725 = vadd.f32 0.0, %v2724
        %2726 = vmatmul.f32.gmra.mxu0 %v2612
        %v2727 = vpop.f32.mrf.mxu0
        %v2728 = vadd.f32 0.0, %v2727
        %2729 = vmatmul.f32.gmra.mxu0 %v2615
        %v2730 = vpop.f32.mrf.mxu0
        %v2731 = vadd.f32 0.0, %v2730
        %2732 = vmatmul.f32.gmra.mxu0 %v2618
        %v2733 = vpop.f32.mrf.mxu0
        %v2734 = vadd.f32 0.0, %v2733
        %2735 = vmatmul.f32.gmra.mxu0 %v2621
        %v2736 = vpop.f32.mrf.mxu0
        %v2737 = vadd.f32 0.0, %v2736
        %2738 = vdwg.mxu0
        %v2739 = vadd.f32 %v2461, %v2644
        %v2740 = vadd.f32 %v2462, %v2647
        %v2741 = vadd.f32 %v2463, %v2650
        %v2742 = vadd.f32 %v2464, %v2653
        %v2743 = vadd.f32 %v2465, %v2656
        %v2744 = vadd.f32 %v2466, %v2659
        %v2745 = vadd.f32 %v2467, %v2662
        %v2746 = vadd.f32 %v2468, %v2665
        %v2747 = vadd.f32 %v2469, %v2668
        %v2748 = vadd.f32 %v2470, %v2671
        %v2749 = vadd.f32 %v2471, %v2674
        %v2750 = vadd.f32 %v2472, %v2677
        %v2751 = vadd.f32 %v2473, %v2680
        %v2752 = vadd.f32 %v2474, %v2683
        %v2753 = vadd.f32 %v2475, %v2686
        %v2754 = vadd.f32 %v2476, %v2689
        %v2755 = vadd.f32 %v2477, %v2692
        %v2756 = vadd.f32 %v2478, %v2695
        %v2757 = vadd.f32 %v2479, %v2698
        %v2758 = vadd.f32 %v2480, %v2701
        %v2759 = vadd.f32 %v2481, %v2704
        %v2760 = vadd.f32 %v2482, %v2707
        %v2761 = vadd.f32 %v2483, %v2710
        %v2762 = vadd.f32 %v2484, %v2713
        %v2763 = vadd.f32 %v2485, %v2716
        %v2764 = vadd.f32 %v2486, %v2719
        %v2765 = vadd.f32 %v2487, %v2722
        %v2766 = vadd.f32 %v2488, %v2725
        %v2767 = vadd.f32 %v2489, %v2728
        %v2768 = vadd.f32 %v2490, %v2731
        %v2769 = vadd.f32 %v2491, %v2734
        %v2770 = vadd.f32 %v2492, %v2737
        %v2771 = vld [vmem:[%s2] sm:$0x1]
        %v2773 = vperm.slane %v2771, 0
        %v2775 = vadd.f32 %v2739, %v2773
        %v2776 = vadd.f32 %v2740, %v2773
        %v2777 = vadd.f32 %v2741, %v2773
        %v2778 = vadd.f32 %v2742, %v2773
        %v2779 = vadd.f32 %v2743, %v2773
        %v2780 = vadd.f32 %v2744, %v2773
        %v2781 = vadd.f32 %v2745, %v2773
        %v2782 = vadd.f32 %v2746, %v2773
        %v2783 = vadd.f32 %v2747, %v2773
        %v2784 = vadd.f32 %v2748, %v2773
        %v2785 = vadd.f32 %v2749, %v2773
        %v2786 = vadd.f32 %v2750, %v2773
        %v2787 = vadd.f32 %v2751, %v2773
        %v2788 = vadd.f32 %v2752, %v2773
        %v2789 = vadd.f32 %v2753, %v2773
        %v2790 = vadd.f32 %v2754, %v2773
        %v2791 = vadd.f32 %v2755, %v2773
        %v2792 = vadd.f32 %v2756, %v2773
        %v2793 = vadd.f32 %v2757, %v2773
        %v2794 = vadd.f32 %v2758, %v2773
        %v2795 = vadd.f32 %v2759, %v2773
        %v2796 = vadd.f32 %v2760, %v2773
        %v2797 = vadd.f32 %v2761, %v2773
        %v2798 = vadd.f32 %v2762, %v2773
        %v2799 = vadd.f32 %v2763, %v2773
        %v2800 = vadd.f32 %v2764, %v2773
        %v2801 = vadd.f32 %v2765, %v2773
        %v2802 = vadd.f32 %v2766, %v2773
        %v2803 = vadd.f32 %v2767, %v2773
        %v2804 = vadd.f32 %v2768, %v2773
        %v2805 = vadd.f32 %v2769, %v2773
        %v2806 = vadd.f32 %v2770, %v2773
        %v2807 = vmax.f32 %v2775, 0.0
        %v2808 = vmax.f32 %v2776, 0.0
        %v2809 = vmax.f32 %v2777, 0.0
        %v2810 = vmax.f32 %v2778, 0.0
        %v2811 = vmax.f32 %v2779, 0.0
        %v2812 = vmax.f32 %v2780, 0.0
        %v2813 = vmax.f32 %v2781, 0.0
        %v2814 = vmax.f32 %v2782, 0.0
        %v2815 = vmax.f32 %v2783, 0.0
        %v2816 = vmax.f32 %v2784, 0.0
        %v2817 = vmax.f32 %v2785, 0.0
        %v2818 = vmax.f32 %v2786, 0.0
        %v2819 = vmax.f32 %v2787, 0.0
        %v2820 = vmax.f32 %v2788, 0.0
        %v2821 = vmax.f32 %v2789, 0.0
        %v2822 = vmax.f32 %v2790, 0.0
        %v2823 = vmax.f32 %v2791, 0.0
        %v2824 = vmax.f32 %v2792, 0.0
        %v2825 = vmax.f32 %v2793, 0.0
        %v2826 = vmax.f32 %v2794, 0.0
        %v2827 = vmax.f32 %v2795, 0.0
        %v2828 = vmax.f32 %v2796, 0.0
        %v2829 = vmax.f32 %v2797, 0.0
        %v2830 = vmax.f32 %v2798, 0.0
        %v2831 = vmax.f32 %v2799, 0.0
        %v2832 = vmax.f32 %v2800, 0.0
        %v2833 = vmax.f32 %v2801, 0.0
        %v2834 = vmax.f32 %v2802, 0.0
        %v2835 = vmax.f32 %v2803, 0.0
        %v2836 = vmax.f32 %v2804, 0.0
        %v2837 = vmax.f32 %v2805, 0.0
        %v2838 = vmax.f32 %v2806, 0.0
        %vm2839 = vcmask 261120
        %2840 = vst.msk [vmem:[#allocation2] sm:$0xff] %vm2839, %v2807
        %2841 = vst.msk [vmem:[#allocation2 + $0x8] sm:$0xff] %vm2839, %v2808
        %2842 = vst.msk [vmem:[#allocation2 + $0x10] sm:$0xff] %vm2839, %v2809
        %2843 = vst.msk [vmem:[#allocation2 + $0x18] sm:$0xff] %vm2839, %v2810
        %2844 = vst.msk [vmem:[#allocation2 + $0x20] sm:$0xff] %vm2839, %v2811
        %2845 = vst.msk [vmem:[#allocation2 + $0x28] sm:$0xff] %vm2839, %v2812
        %2846 = vst.msk [vmem:[#allocation2 + $0x30] sm:$0xff] %vm2839, %v2813
        %2847 = vst.msk [vmem:[#allocation2 + $0x38] sm:$0xff] %vm2839, %v2814
        %2848 = vst.msk [vmem:[#allocation2 + $0x40] sm:$0xff] %vm2839, %v2815
        %2849 = vst.msk [vmem:[#allocation2 + $0x48] sm:$0xff] %vm2839, %v2816
        %2850 = vst.msk [vmem:[#allocation2 + $0x50] sm:$0xff] %vm2839, %v2817
        %2851 = vst.msk [vmem:[#allocation2 + $0x58] sm:$0xff] %vm2839, %v2818
        %2852 = vst.msk [vmem:[#allocation2 + $0x60] sm:$0xff] %vm2839, %v2819
        %2853 = vst.msk [vmem:[#allocation2 + $0x68] sm:$0xff] %vm2839, %v2820
        %2854 = vst.msk [vmem:[#allocation2 + $0x70] sm:$0xff] %vm2839, %v2821
        %2855 = vst.msk [vmem:[#allocation2 + $0x78] sm:$0xff] %vm2839, %v2822
        %2856 = vst.msk [vmem:[#allocation2 + $0x80] sm:$0xff] %vm2839, %v2823
        %2857 = vst.msk [vmem:[#allocation2 + $0x88] sm:$0xff] %vm2839, %v2824
        %2858 = vst.msk [vmem:[#allocation2 + $0x90] sm:$0xff] %vm2839, %v2825
        %2859 = vst.msk [vmem:[#allocation2 + $0x98] sm:$0xff] %vm2839, %v2826
        %2860 = vst.msk [vmem:[#allocation2 + $0xa0] sm:$0xff] %vm2839, %v2827
        %2861 = vst.msk [vmem:[#allocation2 + $0xa8] sm:$0xff] %vm2839, %v2828
        %2862 = vst.msk [vmem:[#allocation2 + $0xb0] sm:$0xff] %vm2839, %v2829
        %2863 = vst.msk [vmem:[#allocation2 + $0xb8] sm:$0xff] %vm2839, %v2830
        %2864 = vst.msk [vmem:[#allocation2 + $0xc0] sm:$0xff] %vm2839, %v2831
        %2865 = vst.msk [vmem:[#allocation2 + $0xc8] sm:$0xff] %vm2839, %v2832
        %2866 = vst.msk [vmem:[#allocation2 + $0xd0] sm:$0xff] %vm2839, %v2833
        %2867 = vst.msk [vmem:[#allocation2 + $0xd8] sm:$0xff] %vm2839, %v2834
        %2868 = vst.msk [vmem:[#allocation2 + $0xe0] sm:$0xff] %vm2839, %v2835
        %2869 = vst.msk [vmem:[#allocation2 + $0xe8] sm:$0xff] %vm2839, %v2836
        %2870 = vst.msk [vmem:[#allocation2 + $0xf0] sm:$0xff] %vm2839, %v2837
        %2871 = vst.msk [vmem:[#allocation2 + $0xf8] sm:$0xff] %vm2839, %v2838
        %v2872 = vld [vmem:[#allocation2] ss:$2 sm:$0xff]
        %s2873 = scalar_lea.vmem [#allocation2], 32
        %v2874 = vld [vmem:[%s2873] ss:$2 sm:$0xff]
        %s2875 = scalar_lea.vmem [#allocation2], 64
        %v2876 = vld [vmem:[%s2875] ss:$2 sm:$0xff]
        %s2877 = scalar_lea.vmem [#allocation2], 96
        %v2878 = vld [vmem:[%s2877] ss:$2 sm:$0xff]
        %s2879 = scalar_lea.vmem [#allocation2], 128
        %v2880 = vld [vmem:[%s2879] ss:$2 sm:$0xff]
        %s2881 = scalar_lea.vmem [#allocation2], 160
        %v2882 = vld [vmem:[%s2881] ss:$2 sm:$0xff]
        %s2883 = scalar_lea.vmem [#allocation2], 192
        %v2884 = vld [vmem:[%s2883] ss:$2 sm:$0xff]
        %s2885 = scalar_lea.vmem [#allocation2], 224
        %v2886 = vld [vmem:[%s2885] ss:$2 sm:$0xff]
        %s2887 = scalar_lea.vmem [#allocation2], 1
        %v2888 = vld [vmem:[%s2887] ss:$2 sm:$0xff]
        %s2889 = scalar_lea.vmem [#allocation2], 33
        %v2890 = vld [vmem:[%s2889] ss:$2 sm:$0xff]
        %s2891 = scalar_lea.vmem [#allocation2], 65
        %v2892 = vld [vmem:[%s2891] ss:$2 sm:$0xff]
        %s2893 = scalar_lea.vmem [#allocation2], 97
        %v2894 = vld [vmem:[%s2893] ss:$2 sm:$0xff]
        %s2895 = scalar_lea.vmem [#allocation2], 129
        %v2896 = vld [vmem:[%s2895] ss:$2 sm:$0xff]
        %s2897 = scalar_lea.vmem [#allocation2], 161
        %v2898 = vld [vmem:[%s2897] ss:$2 sm:$0xff]
        %s2899 = scalar_lea.vmem [#allocation2], 193
        %v2900 = vld [vmem:[%s2899] ss:$2 sm:$0xff]
        %s2901 = scalar_lea.vmem [#allocation2], 225
        %v2902 = vld [vmem:[%s2901] ss:$2 sm:$0xff]
        %s2903 = scalar_lea.vmem [#allocation2], 16
        %v2904 = vld [vmem:[%s2903] ss:$2 sm:$0xff]
        %s2905 = scalar_lea.vmem %s2903, 32 [#allocation2]
        %v2906 = vld [vmem:[%s2905] ss:$2 sm:$0xff]
        %s2907 = scalar_lea.vmem %s2903, 64 [#allocation2]
        %v2908 = vld [vmem:[%s2907] ss:$2 sm:$0xff]
        %s2909 = scalar_lea.vmem %s2903, 96 [#allocation2]
        %v2910 = vld [vmem:[%s2909] ss:$2 sm:$0xff]
        %s2911 = scalar_lea.vmem %s2903, 128 [#allocation2]
        %v2912 = vld [vmem:[%s2911] ss:$2 sm:$0xff]
        %s2913 = scalar_lea.vmem %s2903, 160 [#allocation2]
        %v2914 = vld [vmem:[%s2913] ss:$2 sm:$0xff]
        %s2915 = scalar_lea.vmem %s2903, 192 [#allocation2]
        %v2916 = vld [vmem:[%s2915] ss:$2 sm:$0xff]
        %s2917 = scalar_lea.vmem %s2903, 224 [#allocation2]
        %v2918 = vld [vmem:[%s2917] ss:$2 sm:$0xff]
        %s2919 = scalar_lea.vmem %s2903, 1 [#allocation2]
        %v2920 = vld [vmem:[%s2919] ss:$2 sm:$0xff]
        %s2921 = scalar_lea.vmem %s2903, 33 [#allocation2]
        %v2922 = vld [vmem:[%s2921] ss:$2 sm:$0xff]
        %s2923 = scalar_lea.vmem %s2903, 65 [#allocation2]
        %v2924 = vld [vmem:[%s2923] ss:$2 sm:$0xff]
        %s2925 = scalar_lea.vmem %s2903, 97 [#allocation2]
        %v2926 = vld [vmem:[%s2925] ss:$2 sm:$0xff]
        %s2927 = scalar_lea.vmem %s2903, 129 [#allocation2]
        %v2928 = vld [vmem:[%s2927] ss:$2 sm:$0xff]
        %s2929 = scalar_lea.vmem %s2903, 161 [#allocation2]
        %v2930 = vld [vmem:[%s2929] ss:$2 sm:$0xff]
        %s2931 = scalar_lea.vmem %s2903, 193 [#allocation2]
        %v2932 = vld [vmem:[%s2931] ss:$2 sm:$0xff]
        %s2933 = scalar_lea.vmem %s2903, 225 [#allocation2]
        %v2934 = vld [vmem:[%s2933] ss:$2 sm:$0xff]
        %v2935 = vmax.f32 %v2872, %v2888
        %v2936 = vmax.f32 %v2874, %v2890
        %v2937 = vmax.f32 %v2876, %v2892
        %v2938 = vmax.f32 %v2878, %v2894
        %v2939 = vmax.f32 %v2880, %v2896
        %v2940 = vmax.f32 %v2882, %v2898
        %v2941 = vmax.f32 %v2884, %v2900
        %v2942 = vmax.f32 %v2886, %v2902
        %v2943 = vmax.f32 %v2904, %v2920
        %v2944 = vmax.f32 %v2906, %v2922
        %v2945 = vmax.f32 %v2908, %v2924
        %v2946 = vmax.f32 %v2910, %v2926
        %v2947 = vmax.f32 %v2912, %v2928
        %v2948 = vmax.f32 %v2914, %v2930
        %v2949 = vmax.f32 %v2916, %v2932
        %v2950 = vmax.f32 %v2918, %v2934
        %v2951 = vmax.f32 %v2935, %v2943
        %v2952 = vmax.f32 %v2936, %v2944
        %v2953 = vmax.f32 %v2937, %v2945
        %v2954 = vmax.f32 %v2938, %v2946
        %v2955 = vmax.f32 %v2939, %v2947
        %v2956 = vmax.f32 %v2940, %v2948
        %v2957 = vmax.f32 %v2941, %v2949
        %v2958 = vmax.f32 %v2942, %v2950
        %2959 = vst.msk [vmem:[#allocation3] sm:$0xff] %vm2839, 0.0
        %vm2960 = vcmask 254976
        %2961 = vst.msk [vmem:[#allocation3 + $0x8] sm:$0x3] %vm2960, 0.0
        %2962 = vst.msk [vmem:[#allocation3 + $0x10] sm:$0xff] %vm2839, 0.0
        %2963 = vst.msk [vmem:[#allocation3 + $0x18] sm:$0x3] %vm2960, 0.0
        %2964 = vst.msk [vmem:[#allocation3 + $0x20] sm:$0xff] %vm2839, 0.0
        %2965 = vst.msk [vmem:[#allocation3 + $0x28] sm:$0x3] %vm2960, 0.0
        %2966 = vst.msk [vmem:[#allocation3 + $0x30] sm:$0xff] %vm2839, 0.0
        %2967 = vst.msk [vmem:[#allocation3 + $0x38] sm:$0x3] %vm2960, 0.0
        %2968 = vst.msk [vmem:[#allocation3 + $0x40] sm:$0xff] %vm2839, 0.0
        %2969 = vst.msk [vmem:[#allocation3 + $0x48] sm:$0x3] %vm2960, 0.0
        %2970 = vst.msk [vmem:[#allocation3 + $0x50] sm:$0xff] %vm2839, 0.0
        %2971 = vst.msk [vmem:[#allocation3 + $0x58] sm:$0x3] %vm2960, 0.0
        %2972 = vst.msk [vmem:[#allocation3 + $0x60] sm:$0xff] %vm2839, 0.0
        %2973 = vst.msk [vmem:[#allocation3 + $0x68] sm:$0x3] %vm2960, 0.0
        %2974 = vst.msk [vmem:[#allocation3 + $0x70] sm:$0xff] %vm2839, 0.0
        %2975 = vst.msk [vmem:[#allocation3 + $0x78] sm:$0x3] %vm2960, 0.0
        %2976 = vst.msk [vmem:[#allocation3 + $0x80] sm:$0xff] %vm2839, 0.0
        %2977 = vst.msk [vmem:[#allocation3 + $0x88] sm:$0x3] %vm2960, 0.0
        %2978 = vst.msk [vmem:[#allocation3 + $0x90] sm:$0xff] %vm2839, 0.0
        %2979 = vst.msk [vmem:[#allocation3 + $0x98] sm:$0x3] %vm2960, 0.0
        %s2980 = scalar_lea.vmem [#allocation3], 16
        %2981 = vst.msk [vmem:[%s2980 + $0x1] sm:$0xff] %vm2839, %v2951
        %2982 = vst.msk [vmem:[%s2980 + $0x11] sm:$0xff] %vm2839, %v2952
        %2983 = vst.msk [vmem:[%s2980 + $0x21] sm:$0xff] %vm2839, %v2953
        %2984 = vst.msk [vmem:[%s2980 + $0x31] sm:$0xff] %vm2839, %v2954
        %2985 = vst.msk [vmem:[%s2980 + $0x41] sm:$0xff] %vm2839, %v2955
        %2986 = vst.msk [vmem:[%s2980 + $0x51] sm:$0xff] %vm2839, %v2956
        %2987 = vst.msk [vmem:[%s2980 + $0x61] sm:$0xff] %vm2839, %v2957
        %2988 = vst.msk [vmem:[%s2980 + $0x71] sm:$0xff] %vm2839, %v2958
        %v2989 = vld [vmem:[#allocation3] sm:$0xff]
        %v2990 = vld [vmem:[#allocation3 + $0x10] sm:$0xff]
        %v2991 = vld [vmem:[#allocation3 + $0x20] sm:$0xff]
        %v2992 = vld [vmem:[#allocation3 + $0x30] sm:$0xff]
        %v2993 = vld [vmem:[#allocation3 + $0x40] sm:$0xff]
        %v2994 = vld [vmem:[#allocation3 + $0x50] sm:$0xff]
        %v2995 = vld [vmem:[#allocation3 + $0x60] sm:$0xff]
        %v2996 = vld [vmem:[#allocation3 + $0x70] sm:$0xff]
        %v2997 = vld [vmem:[%s3] sm:$0xff]
        %v2998 = vld [vmem:[%s3 + $0x8] sm:$0xff]
        %v2999 = vld [vmem:[%s3 + $0x10] sm:$0xff]
        %v3000 = vld [vmem:[%s3 + $0x18] sm:$0xff]
        %v3001 = vld [vmem:[#allocation3 + $0x1] sm:$0xff]
        %v3002 = vld [vmem:[#allocation3 + $0x11] sm:$0xff]
        %v3003 = vld [vmem:[#allocation3 + $0x21] sm:$0xff]
        %v3004 = vld [vmem:[#allocation3 + $0x31] sm:$0xff]
        %v3005 = vld [vmem:[#allocation3 + $0x41] sm:$0xff]
        %v3006 = vld [vmem:[#allocation3 + $0x51] sm:$0xff]
        %v3007 = vld [vmem:[#allocation3 + $0x61] sm:$0xff]
        %v3008 = vld [vmem:[#allocation3 + $0x71] sm:$0xff]
        %s3009 = scalar_lea.vmem %s3, 32
        %v3010 = vld [vmem:[%s3009] sm:$0xff]
        %v3011 = vld [vmem:[%s3009 + $0x8] sm:$0xff]
        %v3012 = vld [vmem:[%s3009 + $0x10] sm:$0xff]
        %v3013 = vld [vmem:[%s3009 + $0x18] sm:$0xff]
        %v3015 = vsel %vm2839, %v3001, 0
        %v3018 = vsel %vm2839, %v3002, 0
        %v3021 = vsel %vm2839, %v3003, 0
        %v3024 = vsel %vm2839, %v3004, 0
        %v3027 = vsel %vm2839, %v3005, 0
        %v3030 = vsel %vm2839, %v3006, 0
        %v3033 = vsel %vm2839, %v3007, 0
        %v3036 = vsel %vm2839, %v3008, 0
        %3038 = vmatpush.msra.mxu0 0.0
        %3039 = vmatpush.msra.mxu0 0.0
        %3040 = vmatpush.msra.mxu0 0.0
        %3041 = vmatpush.msra.mxu0 0.0
        %3042 = vmatpush.msra.mxu0 0.0
        %3043 = vmatpush.msra.mxu0 0.0
        %3044 = vmatpush.msra.mxu0 0.0
        %3045 = vmatpush.msra.mxu0 0.0
        %3046 = vmatpush.msra.mxu0 0.0
        %3047 = vmatpush.msra.mxu0 0.0
        %3048 = vmatpush.msra.mxu0 0.0
        %3049 = vmatpush.msra.mxu0 0.0
        %3050 = vmatpush.msra.mxu0 %v3013
        %3051 = vmatpush.msra.mxu0 %v3012
        %3052 = vmatpush.msra.mxu0 %v3011
        %3053 = vmatpush.msra.mxu0 %v3010
        %3054 = vmatmul.f32.gmra.mxu0 %v3015
        %v3055 = vpop.f32.mrf.mxu0
        %v3056 = vadd.f32 0.0, %v3055
        %3057 = vmatmul.f32.gmra.mxu0 %v3018
        %v3058 = vpop.f32.mrf.mxu0
        %v3059 = vadd.f32 0.0, %v3058
        %3060 = vmatmul.f32.gmra.mxu0 %v3021
        %v3061 = vpop.f32.mrf.mxu0
        %v3062 = vadd.f32 0.0, %v3061
        %3063 = vmatmul.f32.gmra.mxu0 %v3024
        %v3064 = vpop.f32.mrf.mxu0
        %v3065 = vadd.f32 0.0, %v3064
        %3066 = vmatmul.f32.gmra.mxu0 %v3027
        %v3067 = vpop.f32.mrf.mxu0
        %v3068 = vadd.f32 0.0, %v3067
        %3069 = vmatmul.f32.gmra.mxu0 %v3030
        %v3070 = vpop.f32.mrf.mxu0
        %v3071 = vadd.f32 0.0, %v3070
        %3072 = vmatmul.f32.gmra.mxu0 %v3033
        %v3073 = vpop.f32.mrf.mxu0
        %v3074 = vadd.f32 0.0, %v3073
        %3075 = vmatmul.f32.gmra.mxu0 %v3036
        %v3076 = vpop.f32.mrf.mxu0
        %v3077 = vadd.f32 0.0, %v3076
        %3078 = vdwg.mxu0
        %v3080 = vsel %vm2839, %v2989, 0
        %v3083 = vsel %vm2839, %v2990, 0
        %v3086 = vsel %vm2839, %v2991, 0
        %v3089 = vsel %vm2839, %v2992, 0
        %v3092 = vsel %vm2839, %v2993, 0
        %v3095 = vsel %vm2839, %v2994, 0
        %v3098 = vsel %vm2839, %v2995, 0
        %v3101 = vsel %vm2839, %v2996, 0
        %3103 = vmatpush.msra.mxu0 0.0
        %3104 = vmatpush.msra.mxu0 0.0
        %3105 = vmatpush.msra.mxu0 0.0
        %3106 = vmatpush.msra.mxu0 0.0
        %3107 = vmatpush.msra.mxu0 0.0
        %3108 = vmatpush.msra.mxu0 0.0
        %3109 = vmatpush.msra.mxu0 0.0
        %3110 = vmatpush.msra.mxu0 0.0
        %3111 = vmatpush.msra.mxu0 0.0
        %3112 = vmatpush.msra.mxu0 0.0
        %3113 = vmatpush.msra.mxu0 0.0
        %3114 = vmatpush.msra.mxu0 0.0
        %3115 = vmatpush.msra.mxu0 %v3000
        %3116 = vmatpush.msra.mxu0 %v2999
        %3117 = vmatpush.msra.mxu0 %v2998
        %3118 = vmatpush.msra.mxu0 %v2997
        %3119 = vmatmul.f32.gmra.mxu0 %v3080
        %v3120 = vpop.f32.mrf.mxu0
        %v3121 = vadd.f32 %v3056, %v3120
        %3122 = vmatmul.f32.gmra.mxu0 %v3083
        %v3123 = vpop.f32.mrf.mxu0
        %v3124 = vadd.f32 %v3059, %v3123
        %3125 = vmatmul.f32.gmra.mxu0 %v3086
        %v3126 = vpop.f32.mrf.mxu0
        %v3127 = vadd.f32 %v3062, %v3126
        %3128 = vmatmul.f32.gmra.mxu0 %v3089
        %v3129 = vpop.f32.mrf.mxu0
        %v3130 = vadd.f32 %v3065, %v3129
        %3131 = vmatmul.f32.gmra.mxu0 %v3092
        %v3132 = vpop.f32.mrf.mxu0
        %v3133 = vadd.f32 %v3068, %v3132
        %3134 = vmatmul.f32.gmra.mxu0 %v3095
        %v3135 = vpop.f32.mrf.mxu0
        %v3136 = vadd.f32 %v3071, %v3135
        %3137 = vmatmul.f32.gmra.mxu0 %v3098
        %v3138 = vpop.f32.mrf.mxu0
        %v3139 = vadd.f32 %v3074, %v3138
        %3140 = vmatmul.f32.gmra.mxu0 %v3101
        %v3141 = vpop.f32.mrf.mxu0
        %v3142 = vadd.f32 %v3077, %v3141
        %3143 = vdwg.mxu0
        %v3144 = vld [vmem:[#allocation3 + $0x2] sm:$0xff]
        %v3145 = vld [vmem:[#allocation3 + $0x12] sm:$0xff]
        %v3146 = vld [vmem:[#allocation3 + $0x22] sm:$0xff]
        %v3147 = vld [vmem:[#allocation3 + $0x32] sm:$0xff]
        %v3148 = vld [vmem:[#allocation3 + $0x42] sm:$0xff]
        %v3149 = vld [vmem:[#allocation3 + $0x52] sm:$0xff]
        %v3150 = vld [vmem:[#allocation3 + $0x62] sm:$0xff]
        %v3151 = vld [vmem:[#allocation3 + $0x72] sm:$0xff]
        %s3152 = scalar_lea.vmem %s3, 64
        %v3153 = vld [vmem:[%s3152] sm:$0xff]
        %v3154 = vld [vmem:[%s3152 + $0x8] sm:$0xff]
        %v3155 = vld [vmem:[%s3152 + $0x10] sm:$0xff]
        %v3156 = vld [vmem:[%s3152 + $0x18] sm:$0xff]
        %v3158 = vsel %vm2839, %v3144, 0
        %v3161 = vsel %vm2839, %v3145, 0
        %v3164 = vsel %vm2839, %v3146, 0
        %v3167 = vsel %vm2839, %v3147, 0
        %v3170 = vsel %vm2839, %v3148, 0
        %v3173 = vsel %vm2839, %v3149, 0
        %v3176 = vsel %vm2839, %v3150, 0
        %v3179 = vsel %vm2839, %v3151, 0
        %3181 = vmatpush.msra.mxu0 0.0
        %3182 = vmatpush.msra.mxu0 0.0
        %3183 = vmatpush.msra.mxu0 0.0
        %3184 = vmatpush.msra.mxu0 0.0
        %3185 = vmatpush.msra.mxu0 0.0
        %3186 = vmatpush.msra.mxu0 0.0
        %3187 = vmatpush.msra.mxu0 0.0
        %3188 = vmatpush.msra.mxu0 0.0
        %3189 = vmatpush.msra.mxu0 0.0
        %3190 = vmatpush.msra.mxu0 0.0
        %3191 = vmatpush.msra.mxu0 0.0
        %3192 = vmatpush.msra.mxu0 0.0
        %3193 = vmatpush.msra.mxu0 %v3156
        %3194 = vmatpush.msra.mxu0 %v3155
        %3195 = vmatpush.msra.mxu0 %v3154
        %3196 = vmatpush.msra.mxu0 %v3153
        %3197 = vmatmul.f32.gmra.mxu0 %v3158
        %v3198 = vpop.f32.mrf.mxu0
        %v3199 = vadd.f32 0.0, %v3198
        %3200 = vmatmul.f32.gmra.mxu0 %v3161
        %v3201 = vpop.f32.mrf.mxu0
        %v3202 = vadd.f32 0.0, %v3201
        %3203 = vmatmul.f32.gmra.mxu0 %v3164
        %v3204 = vpop.f32.mrf.mxu0
        %v3205 = vadd.f32 0.0, %v3204
        %3206 = vmatmul.f32.gmra.mxu0 %v3167
        %v3207 = vpop.f32.mrf.mxu0
        %v3208 = vadd.f32 0.0, %v3207
        %3209 = vmatmul.f32.gmra.mxu0 %v3170
        %v3210 = vpop.f32.mrf.mxu0
        %v3211 = vadd.f32 0.0, %v3210
        %3212 = vmatmul.f32.gmra.mxu0 %v3173
        %v3213 = vpop.f32.mrf.mxu0
        %v3214 = vadd.f32 0.0, %v3213
        %3215 = vmatmul.f32.gmra.mxu0 %v3176
        %v3216 = vpop.f32.mrf.mxu0
        %v3217 = vadd.f32 0.0, %v3216
        %3218 = vmatmul.f32.gmra.mxu0 %v3179
        %v3219 = vpop.f32.mrf.mxu0
        %v3220 = vadd.f32 0.0, %v3219
        %3221 = vdwg.mxu0
        %v3222 = vadd.f32 %v3121, %v3199
        %v3223 = vadd.f32 %v3124, %v3202
        %v3224 = vadd.f32 %v3127, %v3205
        %v3225 = vadd.f32 %v3130, %v3208
        %v3226 = vadd.f32 %v3133, %v3211
        %v3227 = vadd.f32 %v3136, %v3214
        %v3228 = vadd.f32 %v3139, %v3217
        %v3229 = vadd.f32 %v3142, %v3220
        %v3230 = vld [vmem:[%s2980] sm:$0xff]
        %v3231 = vld [vmem:[%s2980 + $0x10] sm:$0xff]
        %v3232 = vld [vmem:[%s2980 + $0x20] sm:$0xff]
        %v3233 = vld [vmem:[%s2980 + $0x30] sm:$0xff]
        %v3234 = vld [vmem:[%s2980 + $0x40] sm:$0xff]
        %v3235 = vld [vmem:[%s2980 + $0x50] sm:$0xff]
        %v3236 = vld [vmem:[%s2980 + $0x60] sm:$0xff]
        %v3237 = vld [vmem:[%s2980 + $0x70] sm:$0xff]
        %s3238 = scalar_lea.vmem %s3, 96
        %v3239 = vld [vmem:[%s3238] sm:$0xff]
        %v3240 = vld [vmem:[%s3238 + $0x8] sm:$0xff]
        %v3241 = vld [vmem:[%s3238 + $0x10] sm:$0xff]
        %v3242 = vld [vmem:[%s3238 + $0x18] sm:$0xff]
        %v3244 = vsel %vm2839, %v3230, 0
        %v3247 = vsel %vm2839, %v3231, 0
        %v3250 = vsel %vm2839, %v3232, 0
        %v3253 = vsel %vm2839, %v3233, 0
        %v3256 = vsel %vm2839, %v3234, 0
        %v3259 = vsel %vm2839, %v3235, 0
        %v3262 = vsel %vm2839, %v3236, 0
        %v3265 = vsel %vm2839, %v3237, 0
        %3267 = vmatpush.msra.mxu0 0.0
        %3268 = vmatpush.msra.mxu0 0.0
        %3269 = vmatpush.msra.mxu0 0.0
        %3270 = vmatpush.msra.mxu0 0.0
        %3271 = vmatpush.msra.mxu0 0.0
        %3272 = vmatpush.msra.mxu0 0.0
        %3273 = vmatpush.msra.mxu0 0.0
        %3274 = vmatpush.msra.mxu0 0.0
        %3275 = vmatpush.msra.mxu0 0.0
        %3276 = vmatpush.msra.mxu0 0.0
        %3277 = vmatpush.msra.mxu0 0.0
        %3278 = vmatpush.msra.mxu0 0.0
        %3279 = vmatpush.msra.mxu0 %v3242
        %3280 = vmatpush.msra.mxu0 %v3241
        %3281 = vmatpush.msra.mxu0 %v3240
        %3282 = vmatpush.msra.mxu0 %v3239
        %3283 = vmatmul.f32.gmra.mxu0 %v3244
        %v3284 = vpop.f32.mrf.mxu0
        %v3285 = vadd.f32 0.0, %v3284
        %3286 = vmatmul.f32.gmra.mxu0 %v3247
        %v3287 = vpop.f32.mrf.mxu0
        %v3288 = vadd.f32 0.0, %v3287
        %3289 = vmatmul.f32.gmra.mxu0 %v3250
        %v3290 = vpop.f32.mrf.mxu0
        %v3291 = vadd.f32 0.0, %v3290
        %3292 = vmatmul.f32.gmra.mxu0 %v3253
        %v3293 = vpop.f32.mrf.mxu0
        %v3294 = vadd.f32 0.0, %v3293
        %3295 = vmatmul.f32.gmra.mxu0 %v3256
        %v3296 = vpop.f32.mrf.mxu0
        %v3297 = vadd.f32 0.0, %v3296
        %3298 = vmatmul.f32.gmra.mxu0 %v3259
        %v3299 = vpop.f32.mrf.mxu0
        %v3300 = vadd.f32 0.0, %v3299
        %3301 = vmatmul.f32.gmra.mxu0 %v3262
        %v3302 = vpop.f32.mrf.mxu0
        %v3303 = vadd.f32 0.0, %v3302
        %3304 = vmatmul.f32.gmra.mxu0 %v3265
        %v3305 = vpop.f32.mrf.mxu0
        %v3306 = vadd.f32 0.0, %v3305
        %3307 = vdwg.mxu0
        %v3308 = vadd.f32 %v3222, %v3285
        %v3309 = vadd.f32 %v3223, %v3288
        %v3310 = vadd.f32 %v3224, %v3291
        %v3311 = vadd.f32 %v3225, %v3294
        %v3312 = vadd.f32 %v3226, %v3297
        %v3313 = vadd.f32 %v3227, %v3300
        %v3314 = vadd.f32 %v3228, %v3303
        %v3315 = vadd.f32 %v3229, %v3306
        %v3316 = vld [vmem:[%s2980 + $0x1] sm:$0xff]
        %v3317 = vld [vmem:[%s2980 + $0x11] sm:$0xff]
        %v3318 = vld [vmem:[%s2980 + $0x21] sm:$0xff]
        %v3319 = vld [vmem:[%s2980 + $0x31] sm:$0xff]
        %v3320 = vld [vmem:[%s2980 + $0x41] sm:$0xff]
        %v3321 = vld [vmem:[%s2980 + $0x51] sm:$0xff]
        %v3322 = vld [vmem:[%s2980 + $0x61] sm:$0xff]
        %v3323 = vld [vmem:[%s2980 + $0x71] sm:$0xff]
        %s3324 = scalar_lea.vmem %s3, 128
        %v3325 = vld [vmem:[%s3324] sm:$0xff]
        %v3326 = vld [vmem:[%s3324 + $0x8] sm:$0xff]
        %v3327 = vld [vmem:[%s3324 + $0x10] sm:$0xff]
        %v3328 = vld [vmem:[%s3324 + $0x18] sm:$0xff]
        %v3330 = vsel %vm2839, %v3316, 0
        %v3333 = vsel %vm2839, %v3317, 0
        %v3336 = vsel %vm2839, %v3318, 0
        %v3339 = vsel %vm2839, %v3319, 0
        %v3342 = vsel %vm2839, %v3320, 0
        %v3345 = vsel %vm2839, %v3321, 0
        %v3348 = vsel %vm2839, %v3322, 0
        %v3351 = vsel %vm2839, %v3323, 0
        %3353 = vmatpush.msra.mxu0 0.0
        %3354 = vmatpush.msra.mxu0 0.0
        %3355 = vmatpush.msra.mxu0 0.0
        %3356 = vmatpush.msra.mxu0 0.0
        %3357 = vmatpush.msra.mxu0 0.0
        %3358 = vmatpush.msra.mxu0 0.0
        %3359 = vmatpush.msra.mxu0 0.0
        %3360 = vmatpush.msra.mxu0 0.0
        %3361 = vmatpush.msra.mxu0 0.0
        %3362 = vmatpush.msra.mxu0 0.0
        %3363 = vmatpush.msra.mxu0 0.0
        %3364 = vmatpush.msra.mxu0 0.0
        %3365 = vmatpush.msra.mxu0 %v3328
        %3366 = vmatpush.msra.mxu0 %v3327
        %3367 = vmatpush.msra.mxu0 %v3326
        %3368 = vmatpush.msra.mxu0 %v3325
        %3369 = vmatmul.f32.gmra.mxu0 %v3330
        %v3370 = vpop.f32.mrf.mxu0
        %v3371 = vadd.f32 0.0, %v3370
        %3372 = vmatmul.f32.gmra.mxu0 %v3333
        %v3373 = vpop.f32.mrf.mxu0
        %v3374 = vadd.f32 0.0, %v3373
        %3375 = vmatmul.f32.gmra.mxu0 %v3336
        %v3376 = vpop.f32.mrf.mxu0
        %v3377 = vadd.f32 0.0, %v3376
        %3378 = vmatmul.f32.gmra.mxu0 %v3339
        %v3379 = vpop.f32.mrf.mxu0
        %v3380 = vadd.f32 0.0, %v3379
        %3381 = vmatmul.f32.gmra.mxu0 %v3342
        %v3382 = vpop.f32.mrf.mxu0
        %v3383 = vadd.f32 0.0, %v3382
        %3384 = vmatmul.f32.gmra.mxu0 %v3345
        %v3385 = vpop.f32.mrf.mxu0
        %v3386 = vadd.f32 0.0, %v3385
        %3387 = vmatmul.f32.gmra.mxu0 %v3348
        %v3388 = vpop.f32.mrf.mxu0
        %v3389 = vadd.f32 0.0, %v3388
        %3390 = vmatmul.f32.gmra.mxu0 %v3351
        %v3391 = vpop.f32.mrf.mxu0
        %v3392 = vadd.f32 0.0, %v3391
        %3393 = vdwg.mxu0
        %v3394 = vadd.f32 %v3308, %v3371
        %v3395 = vadd.f32 %v3309, %v3374
        %v3396 = vadd.f32 %v3310, %v3377
        %v3397 = vadd.f32 %v3311, %v3380
        %v3398 = vadd.f32 %v3312, %v3383
        %v3399 = vadd.f32 %v3313, %v3386
        %v3400 = vadd.f32 %v3314, %v3389
        %v3401 = vadd.f32 %v3315, %v3392
        %v3402 = vld [vmem:[%s2980 + $0x2] sm:$0xff]
        %v3403 = vld [vmem:[%s2980 + $0x12] sm:$0xff]
        %v3404 = vld [vmem:[%s2980 + $0x22] sm:$0xff]
        %v3405 = vld [vmem:[%s2980 + $0x32] sm:$0xff]
        %v3406 = vld [vmem:[%s2980 + $0x42] sm:$0xff]
        %v3407 = vld [vmem:[%s2980 + $0x52] sm:$0xff]
        %v3408 = vld [vmem:[%s2980 + $0x62] sm:$0xff]
        %v3409 = vld [vmem:[%s2980 + $0x72] sm:$0xff]
        %s3410 = scalar_lea.vmem %s3, 160
        %v3411 = vld [vmem:[%s3410] sm:$0xff]
        %v3412 = vld [vmem:[%s3410 + $0x8] sm:$0xff]
        %v3413 = vld [vmem:[%s3410 + $0x10] sm:$0xff]
        %v3414 = vld [vmem:[%s3410 + $0x18] sm:$0xff]
        %v3416 = vsel %vm2839, %v3402, 0
        %v3419 = vsel %vm2839, %v3403, 0
        %v3422 = vsel %vm2839, %v3404, 0
        %v3425 = vsel %vm2839, %v3405, 0
        %v3428 = vsel %vm2839, %v3406, 0
        %v3431 = vsel %vm2839, %v3407, 0
        %v3434 = vsel %vm2839, %v3408, 0
        %v3437 = vsel %vm2839, %v3409, 0
        %3439 = vmatpush.msra.mxu0 0.0
        %3440 = vmatpush.msra.mxu0 0.0
        %3441 = vmatpush.msra.mxu0 0.0
        %3442 = vmatpush.msra.mxu0 0.0
        %3443 = vmatpush.msra.mxu0 0.0
        %3444 = vmatpush.msra.mxu0 0.0
        %3445 = vmatpush.msra.mxu0 0.0
        %3446 = vmatpush.msra.mxu0 0.0
        %3447 = vmatpush.msra.mxu0 0.0
        %3448 = vmatpush.msra.mxu0 0.0
        %3449 = vmatpush.msra.mxu0 0.0
        %3450 = vmatpush.msra.mxu0 0.0
        %3451 = vmatpush.msra.mxu0 %v3414
        %3452 = vmatpush.msra.mxu0 %v3413
        %3453 = vmatpush.msra.mxu0 %v3412
        %3454 = vmatpush.msra.mxu0 %v3411
        %3455 = vmatmul.f32.gmra.mxu0 %v3416
        %v3456 = vpop.f32.mrf.mxu0
        %v3457 = vadd.f32 0.0, %v3456
        %3458 = vmatmul.f32.gmra.mxu0 %v3419
        %v3459 = vpop.f32.mrf.mxu0
        %v3460 = vadd.f32 0.0, %v3459
        %3461 = vmatmul.f32.gmra.mxu0 %v3422
        %v3462 = vpop.f32.mrf.mxu0
        %v3463 = vadd.f32 0.0, %v3462
        %3464 = vmatmul.f32.gmra.mxu0 %v3425
        %v3465 = vpop.f32.mrf.mxu0
        %v3466 = vadd.f32 0.0, %v3465
        %3467 = vmatmul.f32.gmra.mxu0 %v3428
        %v3468 = vpop.f32.mrf.mxu0
        %v3469 = vadd.f32 0.0, %v3468
        %3470 = vmatmul.f32.gmra.mxu0 %v3431
        %v3471 = vpop.f32.mrf.mxu0
        %v3472 = vadd.f32 0.0, %v3471
        %3473 = vmatmul.f32.gmra.mxu0 %v3434
        %v3474 = vpop.f32.mrf.mxu0
        %v3475 = vadd.f32 0.0, %v3474
        %3476 = vmatmul.f32.gmra.mxu0 %v3437
        %v3477 = vpop.f32.mrf.mxu0
        %v3478 = vadd.f32 0.0, %v3477
        %3479 = vdwg.mxu0
        %v3480 = vadd.f32 %v3394, %v3457
        %v3481 = vadd.f32 %v3395, %v3460
        %v3482 = vadd.f32 %v3396, %v3463
        %v3483 = vadd.f32 %v3397, %v3466
        %v3484 = vadd.f32 %v3398, %v3469
        %v3485 = vadd.f32 %v3399, %v3472
        %v3486 = vadd.f32 %v3400, %v3475
        %v3487 = vadd.f32 %v3401, %v3478
        %s3488 = scalar_lea.vmem [#allocation3], 32
        %v3489 = vld [vmem:[%s3488] sm:$0xff]
        %v3490 = vld [vmem:[%s3488 + $0x10] sm:$0xff]
        %v3491 = vld [vmem:[%s3488 + $0x20] sm:$0xff]
        %v3492 = vld [vmem:[%s3488 + $0x30] sm:$0xff]
        %v3493 = vld [vmem:[%s3488 + $0x40] sm:$0xff]
        %v3494 = vld [vmem:[%s3488 + $0x50] sm:$0xff]
        %v3495 = vld [vmem:[%s3488 + $0x60] sm:$0xff]
        %v3496 = vld [vmem:[%s3488 + $0x70] sm:$0xff]
        %s3497 = scalar_lea.vmem %s3, 192
        %v3498 = vld [vmem:[%s3497] sm:$0xff]
        %v3499 = vld [vmem:[%s3497 + $0x8] sm:$0xff]
        %v3500 = vld [vmem:[%s3497 + $0x10] sm:$0xff]
        %v3501 = vld [vmem:[%s3497 + $0x18] sm:$0xff]
        %v3503 = vsel %vm2839, %v3489, 0
        %v3506 = vsel %vm2839, %v3490, 0
        %v3509 = vsel %vm2839, %v3491, 0
        %v3512 = vsel %vm2839, %v3492, 0
        %v3515 = vsel %vm2839, %v3493, 0
        %v3518 = vsel %vm2839, %v3494, 0
        %v3521 = vsel %vm2839, %v3495, 0
        %v3524 = vsel %vm2839, %v3496, 0
        %3526 = vmatpush.msra.mxu0 0.0
        %3527 = vmatpush.msra.mxu0 0.0
        %3528 = vmatpush.msra.mxu0 0.0
        %3529 = vmatpush.msra.mxu0 0.0
        %3530 = vmatpush.msra.mxu0 0.0
        %3531 = vmatpush.msra.mxu0 0.0
        %3532 = vmatpush.msra.mxu0 0.0
        %3533 = vmatpush.msra.mxu0 0.0
        %3534 = vmatpush.msra.mxu0 0.0
        %3535 = vmatpush.msra.mxu0 0.0
        %3536 = vmatpush.msra.mxu0 0.0
        %3537 = vmatpush.msra.mxu0 0.0
        %3538 = vmatpush.msra.mxu0 %v3501
        %3539 = vmatpush.msra.mxu0 %v3500
        %3540 = vmatpush.msra.mxu0 %v3499
        %3541 = vmatpush.msra.mxu0 %v3498
        %3542 = vmatmul.f32.gmra.mxu0 %v3503
        %v3543 = vpop.f32.mrf.mxu0
        %v3544 = vadd.f32 0.0, %v3543
        %3545 = vmatmul.f32.gmra.mxu0 %v3506
        %v3546 = vpop.f32.mrf.mxu0
        %v3547 = vadd.f32 0.0, %v3546
        %3548 = vmatmul.f32.gmra.mxu0 %v3509
        %v3549 = vpop.f32.mrf.mxu0
        %v3550 = vadd.f32 0.0, %v3549
        %3551 = vmatmul.f32.gmra.mxu0 %v3512
        %v3552 = vpop.f32.mrf.mxu0
        %v3553 = vadd.f32 0.0, %v3552
        %3554 = vmatmul.f32.gmra.mxu0 %v3515
        %v3555 = vpop.f32.mrf.mxu0
        %v3556 = vadd.f32 0.0, %v3555
        %3557 = vmatmul.f32.gmra.mxu0 %v3518
        %v3558 = vpop.f32.mrf.mxu0
        %v3559 = vadd.f32 0.0, %v3558
        %3560 = vmatmul.f32.gmra.mxu0 %v3521
        %v3561 = vpop.f32.mrf.mxu0
        %v3562 = vadd.f32 0.0, %v3561
        %3563 = vmatmul.f32.gmra.mxu0 %v3524
        %v3564 = vpop.f32.mrf.mxu0
        %v3565 = vadd.f32 0.0, %v3564
        %3566 = vdwg.mxu0
        %v3567 = vadd.f32 %v3480, %v3544
        %v3568 = vadd.f32 %v3481, %v3547
        %v3569 = vadd.f32 %v3482, %v3550
        %v3570 = vadd.f32 %v3483, %v3553
        %v3571 = vadd.f32 %v3484, %v3556
        %v3572 = vadd.f32 %v3485, %v3559
        %v3573 = vadd.f32 %v3486, %v3562
        %v3574 = vadd.f32 %v3487, %v3565
        %v3575 = vld [vmem:[%s3488 + $0x1] sm:$0xff]
        %v3576 = vld [vmem:[%s3488 + $0x11] sm:$0xff]
        %v3577 = vld [vmem:[%s3488 + $0x21] sm:$0xff]
        %v3578 = vld [vmem:[%s3488 + $0x31] sm:$0xff]
        %v3579 = vld [vmem:[%s3488 + $0x41] sm:$0xff]
        %v3580 = vld [vmem:[%s3488 + $0x51] sm:$0xff]
        %v3581 = vld [vmem:[%s3488 + $0x61] sm:$0xff]
        %v3582 = vld [vmem:[%s3488 + $0x71] sm:$0xff]
        %s3583 = scalar_lea.vmem %s3, 224
        %v3584 = vld [vmem:[%s3583] sm:$0xff]
        %v3585 = vld [vmem:[%s3583 + $0x8] sm:$0xff]
        %v3586 = vld [vmem:[%s3583 + $0x10] sm:$0xff]
        %v3587 = vld [vmem:[%s3583 + $0x18] sm:$0xff]
        %v3589 = vsel %vm2839, %v3575, 0
        %v3592 = vsel %vm2839, %v3576, 0
        %v3595 = vsel %vm2839, %v3577, 0
        %v3598 = vsel %vm2839, %v3578, 0
        %v3601 = vsel %vm2839, %v3579, 0
        %v3604 = vsel %vm2839, %v3580, 0
        %v3607 = vsel %vm2839, %v3581, 0
        %v3610 = vsel %vm2839, %v3582, 0
        %3612 = vmatpush.msra.mxu0 0.0
        %3613 = vmatpush.msra.mxu0 0.0
        %3614 = vmatpush.msra.mxu0 0.0
        %3615 = vmatpush.msra.mxu0 0.0
        %3616 = vmatpush.msra.mxu0 0.0
        %3617 = vmatpush.msra.mxu0 0.0
        %3618 = vmatpush.msra.mxu0 0.0
        %3619 = vmatpush.msra.mxu0 0.0
        %3620 = vmatpush.msra.mxu0 0.0
        %3621 = vmatpush.msra.mxu0 0.0
        %3622 = vmatpush.msra.mxu0 0.0
        %3623 = vmatpush.msra.mxu0 0.0
        %3624 = vmatpush.msra.mxu0 %v3587
        %3625 = vmatpush.msra.mxu0 %v3586
        %3626 = vmatpush.msra.mxu0 %v3585
        %3627 = vmatpush.msra.mxu0 %v3584
        %3628 = vmatmul.f32.gmra.mxu0 %v3589
        %v3629 = vpop.f32.mrf.mxu0
        %v3630 = vadd.f32 0.0, %v3629
        %3631 = vmatmul.f32.gmra.mxu0 %v3592
        %v3632 = vpop.f32.mrf.mxu0
        %v3633 = vadd.f32 0.0, %v3632
        %3634 = vmatmul.f32.gmra.mxu0 %v3595
        %v3635 = vpop.f32.mrf.mxu0
        %v3636 = vadd.f32 0.0, %v3635
        %3637 = vmatmul.f32.gmra.mxu0 %v3598
        %v3638 = vpop.f32.mrf.mxu0
        %v3639 = vadd.f32 0.0, %v3638
        %3640 = vmatmul.f32.gmra.mxu0 %v3601
        %v3641 = vpop.f32.mrf.mxu0
        %v3642 = vadd.f32 0.0, %v3641
        %3643 = vmatmul.f32.gmra.mxu0 %v3604
        %v3644 = vpop.f32.mrf.mxu0
        %v3645 = vadd.f32 0.0, %v3644
        %3646 = vmatmul.f32.gmra.mxu0 %v3607
        %v3647 = vpop.f32.mrf.mxu0
        %v3648 = vadd.f32 0.0, %v3647
        %3649 = vmatmul.f32.gmra.mxu0 %v3610
        %v3650 = vpop.f32.mrf.mxu0
        %v3651 = vadd.f32 0.0, %v3650
        %3652 = vdwg.mxu0
        %v3653 = vadd.f32 %v3567, %v3630
        %v3654 = vadd.f32 %v3568, %v3633
        %v3655 = vadd.f32 %v3569, %v3636
        %v3656 = vadd.f32 %v3570, %v3639
        %v3657 = vadd.f32 %v3571, %v3642
        %v3658 = vadd.f32 %v3572, %v3645
        %v3659 = vadd.f32 %v3573, %v3648
        %v3660 = vadd.f32 %v3574, %v3651
        %v3661 = vld [vmem:[%s3488 + $0x2] sm:$0xff]
        %v3662 = vld [vmem:[%s3488 + $0x12] sm:$0xff]
        %v3663 = vld [vmem:[%s3488 + $0x22] sm:$0xff]
        %v3664 = vld [vmem:[%s3488 + $0x32] sm:$0xff]
        %v3665 = vld [vmem:[%s3488 + $0x42] sm:$0xff]
        %v3666 = vld [vmem:[%s3488 + $0x52] sm:$0xff]
        %v3667 = vld [vmem:[%s3488 + $0x62] sm:$0xff]
        %v3668 = vld [vmem:[%s3488 + $0x72] sm:$0xff]
        %s3669 = scalar_lea.vmem %s3, 256
        %v3670 = vld [vmem:[%s3669] sm:$0xff]
        %v3671 = vld [vmem:[%s3669 + $0x8] sm:$0xff]
        %v3672 = vld [vmem:[%s3669 + $0x10] sm:$0xff]
        %v3673 = vld [vmem:[%s3669 + $0x18] sm:$0xff]
        %v3675 = vsel %vm2839, %v3661, 0
        %v3678 = vsel %vm2839, %v3662, 0
        %v3681 = vsel %vm2839, %v3663, 0
        %v3684 = vsel %vm2839, %v3664, 0
        %v3687 = vsel %vm2839, %v3665, 0
        %v3690 = vsel %vm2839, %v3666, 0
        %v3693 = vsel %vm2839, %v3667, 0
        %v3696 = vsel %vm2839, %v3668, 0
        %3698 = vmatpush.msra.mxu0 0.0
        %3699 = vmatpush.msra.mxu0 0.0
        %3700 = vmatpush.msra.mxu0 0.0
        %3701 = vmatpush.msra.mxu0 0.0
        %3702 = vmatpush.msra.mxu0 0.0
        %3703 = vmatpush.msra.mxu0 0.0
        %3704 = vmatpush.msra.mxu0 0.0
        %3705 = vmatpush.msra.mxu0 0.0
        %3706 = vmatpush.msra.mxu0 0.0
        %3707 = vmatpush.msra.mxu0 0.0
        %3708 = vmatpush.msra.mxu0 0.0
        %3709 = vmatpush.msra.mxu0 0.0
        %3710 = vmatpush.msra.mxu0 %v3673
        %3711 = vmatpush.msra.mxu0 %v3672
        %3712 = vmatpush.msra.mxu0 %v3671
        %3713 = vmatpush.msra.mxu0 %v3670
        %3714 = vmatmul.f32.gmra.mxu0 %v3675
        %v3715 = vpop.f32.mrf.mxu0
        %v3716 = vadd.f32 0.0, %v3715
        %3717 = vmatmul.f32.gmra.mxu0 %v3678
        %v3718 = vpop.f32.mrf.mxu0
        %v3719 = vadd.f32 0.0, %v3718
        %3720 = vmatmul.f32.gmra.mxu0 %v3681
        %v3721 = vpop.f32.mrf.mxu0
        %v3722 = vadd.f32 0.0, %v3721
        %3723 = vmatmul.f32.gmra.mxu0 %v3684
        %v3724 = vpop.f32.mrf.mxu0
        %v3725 = vadd.f32 0.0, %v3724
        %3726 = vmatmul.f32.gmra.mxu0 %v3687
        %v3727 = vpop.f32.mrf.mxu0
        %v3728 = vadd.f32 0.0, %v3727
        %3729 = vmatmul.f32.gmra.mxu0 %v3690
        %v3730 = vpop.f32.mrf.mxu0
        %v3731 = vadd.f32 0.0, %v3730
        %3732 = vmatmul.f32.gmra.mxu0 %v3693
        %v3733 = vpop.f32.mrf.mxu0
        %v3734 = vadd.f32 0.0, %v3733
        %3735 = vmatmul.f32.gmra.mxu0 %v3696
        %v3736 = vpop.f32.mrf.mxu0
        %v3737 = vadd.f32 0.0, %v3736
        %3738 = vdwg.mxu0
        %v3739 = vadd.f32 %v3653, %v3716
        %v3740 = vadd.f32 %v3654, %v3719
        %v3741 = vadd.f32 %v3655, %v3722
        %v3742 = vadd.f32 %v3656, %v3725
        %v3743 = vadd.f32 %v3657, %v3728
        %v3744 = vadd.f32 %v3658, %v3731
        %v3745 = vadd.f32 %v3659, %v3734
        %v3746 = vadd.f32 %v3660, %v3737
        %v3747 = vld [vmem:[%s4] sm:$0x1]
        %v3749 = vperm.slane %v3747, 0
        %v3751 = vadd.f32 %v3739, %v3749
        %v3752 = vadd.f32 %v3740, %v3749
        %v3753 = vadd.f32 %v3741, %v3749
        %v3754 = vadd.f32 %v3742, %v3749
        %v3755 = vadd.f32 %v3743, %v3749
        %v3756 = vadd.f32 %v3744, %v3749
        %v3757 = vadd.f32 %v3745, %v3749
        %v3758 = vadd.f32 %v3746, %v3749
        %v3759 = vmax.f32 %v3751, 0.0
        %v3760 = vmax.f32 %v3752, 0.0
        %v3761 = vmax.f32 %v3753, 0.0
        %v3762 = vmax.f32 %v3754, 0.0
        %v3763 = vmax.f32 %v3755, 0.0
        %v3764 = vmax.f32 %v3756, 0.0
        %v3765 = vmax.f32 %v3757, 0.0
        %v3766 = vmax.f32 %v3758, 0.0
        %vm3767 = vcmask 523264
        %3768 = vst.msk [vmem:[#allocation4] sm:$0xff] %vm3767, %v3759
        %3769 = vst.msk [vmem:[#allocation4 + $0x8] sm:$0xff] %vm3767, %v3760
        %3770 = vst.msk [vmem:[#allocation4 + $0x10] sm:$0xff] %vm3767, %v3761
        %3771 = vst.msk [vmem:[#allocation4 + $0x18] sm:$0xff] %vm3767, %v3762
        %3772 = vst.msk [vmem:[#allocation4 + $0x20] sm:$0xff] %vm3767, %v3763
        %3773 = vst.msk [vmem:[#allocation4 + $0x28] sm:$0xff] %vm3767, %v3764
        %3774 = vst.msk [vmem:[#allocation4 + $0x30] sm:$0xff] %vm3767, %v3765
        %3775 = vst.msk [vmem:[#allocation4 + $0x38] sm:$0xff] %vm3767, %v3766
        %v3776 = vld [vmem:[#allocation4] sm:$0x1]
        %v3777 = vld [vmem:[#allocation4 + $0x1] sm:$0x1]
        %v3778 = vmax.f32 %v3776, %v3777
        %s3779 = scalar_lea.vmem [#allocation4], 8
        %v3780 = vld [vmem:[%s3779] sm:$0x1]
        %v3781 = vld [vmem:[%s3779 + $0x1] sm:$0x1]
        %v3782 = vmax.f32 %v3780, %v3781
        %v3783 = vmax.f32 %v3778, %v3782
        %v3784 = vadd.f32 %v3783, 0.0
        %v3785 = vld [vmem:[%s5] sm:$0xff]
        %v3786 = vld [vmem:[%s5 + $0x8] sm:$0xff]
        %v3787 = vld [vmem:[%s5 + $0x10] sm:$0xff]
        %v3788 = vld [vmem:[%s5 + $0x18] sm:$0xff]
        %v3789 = vld [vmem:[%s5 + $0x20] sm:$0xff]
        %v3790 = vld [vmem:[%s5 + $0x28] sm:$0xff]
        %v3791 = vld [vmem:[%s5 + $0x30] sm:$0xff]
        %v3792 = vld [vmem:[%s5 + $0x38] sm:$0xff]
        %v3793 = vld [vmem:[#allocation4 + $0x2] sm:$0x1]
        %v3794 = vld [vmem:[#allocation4 + $0x3] sm:$0x1]
        %v3795 = vmax.f32 %v3793, %v3794
        %v3796 = vld [vmem:[%s3779 + $0x2] sm:$0x1]
        %v3797 = vld [vmem:[%s3779 + $0x3] sm:$0x1]
        %v3798 = vmax.f32 %v3796, %v3797
        %v3799 = vmax.f32 %v3795, %v3798
        %v3800 = vadd.f32 %v3799, 0.0
        %s3801 = scalar_lea.vmem %s5, 64
        %v3802 = vld [vmem:[%s3801] sm:$0xff]
        %v3803 = vld [vmem:[%s3801 + $0x8] sm:$0xff]
        %v3804 = vld [vmem:[%s3801 + $0x10] sm:$0xff]
        %v3805 = vld [vmem:[%s3801 + $0x18] sm:$0xff]
        %v3806 = vld [vmem:[%s3801 + $0x20] sm:$0xff]
        %v3807 = vld [vmem:[%s3801 + $0x28] sm:$0xff]
        %v3808 = vld [vmem:[%s3801 + $0x30] sm:$0xff]
        %v3809 = vld [vmem:[%s3801 + $0x38] sm:$0xff]
        %v3811 = vsel %vm3767, %v3800, 0
        %3813 = vmatpush.msra.mxu0 0.0
        %3814 = vmatpush.msra.mxu0 0.0
        %3815 = vmatpush.msra.mxu0 0.0
        %3816 = vmatpush.msra.mxu0 0.0
        %3817 = vmatpush.msra.mxu0 0.0
        %3818 = vmatpush.msra.mxu0 0.0
        %3819 = vmatpush.msra.mxu0 0.0
        %3820 = vmatpush.msra.mxu0 0.0
        %3821 = vmatpush.msra.mxu0 %v3809
        %3822 = vmatpush.msra.mxu0 %v3808
        %3823 = vmatpush.msra.mxu0 %v3807
        %3824 = vmatpush.msra.mxu0 %v3806
        %3825 = vmatpush.msra.mxu0 %v3805
        %3826 = vmatpush.msra.mxu0 %v3804
        %3827 = vmatpush.msra.mxu0 %v3803
        %3828 = vmatpush.msra.mxu0 %v3802
        %3829 = vmatmul.f32.gmra.mxu0 %v3811
        %v3830 = vpop.f32.mrf.mxu0
        %v3831 = vadd.f32 0.0, %v3830
        %3832 = vdwg.mxu0
        %v3834 = vsel %vm3767, %v3784, 0
        %3836 = vmatpush.msra.mxu0 0.0
        %3837 = vmatpush.msra.mxu0 0.0
        %3838 = vmatpush.msra.mxu0 0.0
        %3839 = vmatpush.msra.mxu0 0.0
        %3840 = vmatpush.msra.mxu0 0.0
        %3841 = vmatpush.msra.mxu0 0.0
        %3842 = vmatpush.msra.mxu0 0.0
        %3843 = vmatpush.msra.mxu0 0.0
        %3844 = vmatpush.msra.mxu0 %v3792
        %3845 = vmatpush.msra.mxu0 %v3791
        %3846 = vmatpush.msra.mxu0 %v3790
        %3847 = vmatpush.msra.mxu0 %v3789
        %3848 = vmatpush.msra.mxu0 %v3788
        %3849 = vmatpush.msra.mxu0 %v3787
        %3850 = vmatpush.msra.mxu0 %v3786
        %3851 = vmatpush.msra.mxu0 %v3785
        %3852 = vmatmul.f32.gmra.mxu0 %v3834
        %v3853 = vpop.f32.mrf.mxu0
        %v3854 = vadd.f32 %v3831, %v3853
        %3855 = vdwg.mxu0
        %v3856 = vld [vmem:[#allocation4 + $0x4] sm:$0x1]
        %v3857 = vld [vmem:[#allocation4 + $0x5] sm:$0x1]
        %v3858 = vmax.f32 %v3856, %v3857
        %v3859 = vld [vmem:[%s3779 + $0x4] sm:$0x1]
        %v3860 = vld [vmem:[%s3779 + $0x5] sm:$0x1]
        %v3861 = vmax.f32 %v3859, %v3860
        %v3862 = vmax.f32 %v3858, %v3861
        %v3863 = vadd.f32 %v3862, 0.0
        %s3864 = scalar_lea.vmem %s5, 128
        %v3865 = vld [vmem:[%s3864] sm:$0xff]
        %v3866 = vld [vmem:[%s3864 + $0x8] sm:$0xff]
        %v3867 = vld [vmem:[%s3864 + $0x10] sm:$0xff]
        %v3868 = vld [vmem:[%s3864 + $0x18] sm:$0xff]
        %v3869 = vld [vmem:[%s3864 + $0x20] sm:$0xff]
        %v3870 = vld [vmem:[%s3864 + $0x28] sm:$0xff]
        %v3871 = vld [vmem:[%s3864 + $0x30] sm:$0xff]
        %v3872 = vld [vmem:[%s3864 + $0x38] sm:$0xff]
        %v3874 = vsel %vm3767, %v3863, 0
        %3876 = vmatpush.msra.mxu0 0.0
        %3877 = vmatpush.msra.mxu0 0.0
        %3878 = vmatpush.msra.mxu0 0.0
        %3879 = vmatpush.msra.mxu0 0.0
        %3880 = vmatpush.msra.mxu0 0.0
        %3881 = vmatpush.msra.mxu0 0.0
        %3882 = vmatpush.msra.mxu0 0.0
        %3883 = vmatpush.msra.mxu0 0.0
        %3884 = vmatpush.msra.mxu0 %v3872
        %3885 = vmatpush.msra.mxu0 %v3871
        %3886 = vmatpush.msra.mxu0 %v3870
        %3887 = vmatpush.msra.mxu0 %v3869
        %3888 = vmatpush.msra.mxu0 %v3868
        %3889 = vmatpush.msra.mxu0 %v3867
        %3890 = vmatpush.msra.mxu0 %v3866
        %3891 = vmatpush.msra.mxu0 %v3865
        %3892 = vmatmul.f32.gmra.mxu0 %v3874
        %v3893 = vpop.f32.mrf.mxu0
        %v3894 = vadd.f32 0.0, %v3893
        %3895 = vdwg.mxu0
        %v3896 = vadd.f32 %v3854, %v3894
        %v3897 = vld [vmem:[#allocation4 + $0x6] sm:$0x1]
        %v3898 = vld [vmem:[#allocation4 + $0x7] sm:$0x1]
        %v3899 = vmax.f32 %v3897, %v3898
        %v3900 = vld [vmem:[%s3779 + $0x6] sm:$0x1]
        %v3901 = vld [vmem:[%s3779 + $0x7] sm:$0x1]
        %v3902 = vmax.f32 %v3900, %v3901
        %v3903 = vmax.f32 %v3899, %v3902
        %v3904 = vadd.f32 %v3903, 0.0
        %s3905 = scalar_lea.vmem %s5, 192
        %v3906 = vld [vmem:[%s3905] sm:$0xff]
        %v3907 = vld [vmem:[%s3905 + $0x8] sm:$0xff]
        %v3908 = vld [vmem:[%s3905 + $0x10] sm:$0xff]
        %v3909 = vld [vmem:[%s3905 + $0x18] sm:$0xff]
        %v3910 = vld [vmem:[%s3905 + $0x20] sm:$0xff]
        %v3911 = vld [vmem:[%s3905 + $0x28] sm:$0xff]
        %v3912 = vld [vmem:[%s3905 + $0x30] sm:$0xff]
        %v3913 = vld [vmem:[%s3905 + $0x38] sm:$0xff]
        %v3915 = vsel %vm3767, %v3904, 0
        %3917 = vmatpush.msra.mxu0 0.0
        %3918 = vmatpush.msra.mxu0 0.0
        %3919 = vmatpush.msra.mxu0 0.0
        %3920 = vmatpush.msra.mxu0 0.0
        %3921 = vmatpush.msra.mxu0 0.0
        %3922 = vmatpush.msra.mxu0 0.0
        %3923 = vmatpush.msra.mxu0 0.0
        %3924 = vmatpush.msra.mxu0 0.0
        %3925 = vmatpush.msra.mxu0 %v3913
        %3926 = vmatpush.msra.mxu0 %v3912
        %3927 = vmatpush.msra.mxu0 %v3911
        %3928 = vmatpush.msra.mxu0 %v3910
        %3929 = vmatpush.msra.mxu0 %v3909
        %3930 = vmatpush.msra.mxu0 %v3908
        %3931 = vmatpush.msra.mxu0 %v3907
        %3932 = vmatpush.msra.mxu0 %v3906
        %3933 = vmatmul.f32.gmra.mxu0 %v3915
        %v3934 = vpop.f32.mrf.mxu0
        %v3935 = vadd.f32 0.0, %v3934
        %3936 = vdwg.mxu0
        %v3937 = vadd.f32 %v3896, %v3935
        %s3938 = scalar_lea.vmem [#allocation4], 16
        %v3939 = vld [vmem:[%s3938] sm:$0x1]
        %v3940 = vld [vmem:[%s3938 + $0x1] sm:$0x1]
        %v3941 = vmax.f32 %v3939, %v3940
        %s3942 = scalar_lea.vmem [#allocation4], 24
        %v3943 = vld [vmem:[%s3942] sm:$0x1]
        %v3944 = vld [vmem:[%s3942 + $0x1] sm:$0x1]
        %v3945 = vmax.f32 %v3943, %v3944
        %v3946 = vmax.f32 %v3941, %v3945
        %v3947 = vadd.f32 %v3946, 0.0
        %s3948 = scalar_lea.vmem %s5, 256
        %v3949 = vld [vmem:[%s3948] sm:$0xff]
        %v3950 = vld [vmem:[%s3948 + $0x8] sm:$0xff]
        %v3951 = vld [vmem:[%s3948 + $0x10] sm:$0xff]
        %v3952 = vld [vmem:[%s3948 + $0x18] sm:$0xff]
        %v3953 = vld [vmem:[%s3948 + $0x20] sm:$0xff]
        %v3954 = vld [vmem:[%s3948 + $0x28] sm:$0xff]
        %v3955 = vld [vmem:[%s3948 + $0x30] sm:$0xff]
        %v3956 = vld [vmem:[%s3948 + $0x38] sm:$0xff]
        %v3958 = vsel %vm3767, %v3947, 0
        %3960 = vmatpush.msra.mxu0 0.0
        %3961 = vmatpush.msra.mxu0 0.0
        %3962 = vmatpush.msra.mxu0 0.0
        %3963 = vmatpush.msra.mxu0 0.0
        %3964 = vmatpush.msra.mxu0 0.0
        %3965 = vmatpush.msra.mxu0 0.0
        %3966 = vmatpush.msra.mxu0 0.0
        %3967 = vmatpush.msra.mxu0 0.0
        %3968 = vmatpush.msra.mxu0 %v3956
        %3969 = vmatpush.msra.mxu0 %v3955
        %3970 = vmatpush.msra.mxu0 %v3954
        %3971 = vmatpush.msra.mxu0 %v3953
        %3972 = vmatpush.msra.mxu0 %v3952
        %3973 = vmatpush.msra.mxu0 %v3951
        %3974 = vmatpush.msra.mxu0 %v3950
        %3975 = vmatpush.msra.mxu0 %v3949
        %3976 = vmatmul.f32.gmra.mxu0 %v3958
        %v3977 = vpop.f32.mrf.mxu0
        %v3978 = vadd.f32 0.0, %v3977
        %3979 = vdwg.mxu0
        %v3980 = vadd.f32 %v3937, %v3978
        %v3981 = vld [vmem:[%s3938 + $0x2] sm:$0x1]
        %v3982 = vld [vmem:[%s3938 + $0x3] sm:$0x1]
        %v3983 = vmax.f32 %v3981, %v3982
        %v3984 = vld [vmem:[%s3942 + $0x2] sm:$0x1]
        %v3985 = vld [vmem:[%s3942 + $0x3] sm:$0x1]
        %v3986 = vmax.f32 %v3984, %v3985
        %v3987 = vmax.f32 %v3983, %v3986
        %v3988 = vadd.f32 %v3987, 0.0
        %s3989 = scalar_lea.vmem %s5, 320
        %v3990 = vld [vmem:[%s3989] sm:$0xff]
        %v3991 = vld [vmem:[%s3989 + $0x8] sm:$0xff]
        %v3992 = vld [vmem:[%s3989 + $0x10] sm:$0xff]
        %v3993 = vld [vmem:[%s3989 + $0x18] sm:$0xff]
        %v3994 = vld [vmem:[%s3989 + $0x20] sm:$0xff]
        %v3995 = vld [vmem:[%s3989 + $0x28] sm:$0xff]
        %v3996 = vld [vmem:[%s3989 + $0x30] sm:$0xff]
        %v3997 = vld [vmem:[%s3989 + $0x38] sm:$0xff]
        %v3999 = vsel %vm3767, %v3988, 0
        %4001 = vmatpush.msra.mxu0 0.0
        %4002 = vmatpush.msra.mxu0 0.0
        %4003 = vmatpush.msra.mxu0 0.0
        %4004 = vmatpush.msra.mxu0 0.0
        %4005 = vmatpush.msra.mxu0 0.0
        %4006 = vmatpush.msra.mxu0 0.0
        %4007 = vmatpush.msra.mxu0 0.0
        %4008 = vmatpush.msra.mxu0 0.0
        %4009 = vmatpush.msra.mxu0 %v3997
        %4010 = vmatpush.msra.mxu0 %v3996
        %4011 = vmatpush.msra.mxu0 %v3995
        %4012 = vmatpush.msra.mxu0 %v3994
        %4013 = vmatpush.msra.mxu0 %v3993
        %4014 = vmatpush.msra.mxu0 %v3992
        %4015 = vmatpush.msra.mxu0 %v3991
        %4016 = vmatpush.msra.mxu0 %v3990
        %4017 = vmatmul.f32.gmra.mxu0 %v3999
        %v4018 = vpop.f32.mrf.mxu0
        %v4019 = vadd.f32 0.0, %v4018
        %4020 = vdwg.mxu0
        %v4021 = vadd.f32 %v3980, %v4019
        %v4022 = vld [vmem:[%s3938 + $0x4] sm:$0x1]
        %v4023 = vld [vmem:[%s3938 + $0x5] sm:$0x1]
        %v4024 = vmax.f32 %v4022, %v4023
        %v4025 = vld [vmem:[%s3942 + $0x4] sm:$0x1]
        %v4026 = vld [vmem:[%s3942 + $0x5] sm:$0x1]
        %v4027 = vmax.f32 %v4025, %v4026
        %v4028 = vmax.f32 %v4024, %v4027
        %v4029 = vadd.f32 %v4028, 0.0
        %s4030 = scalar_lea.vmem %s5, 384
        %v4031 = vld [vmem:[%s4030] sm:$0xff]
        %v4032 = vld [vmem:[%s4030 + $0x8] sm:$0xff]
        %v4033 = vld [vmem:[%s4030 + $0x10] sm:$0xff]
        %v4034 = vld [vmem:[%s4030 + $0x18] sm:$0xff]
        %v4035 = vld [vmem:[%s4030 + $0x20] sm:$0xff]
        %v4036 = vld [vmem:[%s4030 + $0x28] sm:$0xff]
        %v4037 = vld [vmem:[%s4030 + $0x30] sm:$0xff]
        %v4038 = vld [vmem:[%s4030 + $0x38] sm:$0xff]
        %v4040 = vsel %vm3767, %v4029, 0
        %4042 = vmatpush.msra.mxu0 0.0
        %4043 = vmatpush.msra.mxu0 0.0
        %4044 = vmatpush.msra.mxu0 0.0
        %4045 = vmatpush.msra.mxu0 0.0
        %4046 = vmatpush.msra.mxu0 0.0
        %4047 = vmatpush.msra.mxu0 0.0
        %4048 = vmatpush.msra.mxu0 0.0
        %4049 = vmatpush.msra.mxu0 0.0
        %4050 = vmatpush.msra.mxu0 %v4038
        %4051 = vmatpush.msra.mxu0 %v4037
        %4052 = vmatpush.msra.mxu0 %v4036
        %4053 = vmatpush.msra.mxu0 %v4035
        %4054 = vmatpush.msra.mxu0 %v4034
        %4055 = vmatpush.msra.mxu0 %v4033
        %4056 = vmatpush.msra.mxu0 %v4032
        %4057 = vmatpush.msra.mxu0 %v4031
        %4058 = vmatmul.f32.gmra.mxu0 %v4040
        %v4059 = vpop.f32.mrf.mxu0
        %v4060 = vadd.f32 0.0, %v4059
        %4061 = vdwg.mxu0
        %v4062 = vadd.f32 %v4021, %v4060
        %v4063 = vld [vmem:[%s3938 + $0x6] sm:$0x1]
        %v4064 = vld [vmem:[%s3938 + $0x7] sm:$0x1]
        %v4065 = vmax.f32 %v4063, %v4064
        %v4066 = vld [vmem:[%s3942 + $0x6] sm:$0x1]
        %v4067 = vld [vmem:[%s3942 + $0x7] sm:$0x1]
        %v4068 = vmax.f32 %v4066, %v4067
        %v4069 = vmax.f32 %v4065, %v4068
        %v4070 = vadd.f32 %v4069, 0.0
        %s4071 = scalar_lea.vmem %s5, 448
        %v4072 = vld [vmem:[%s4071] sm:$0xff]
        %v4073 = vld [vmem:[%s4071 + $0x8] sm:$0xff]
        %v4074 = vld [vmem:[%s4071 + $0x10] sm:$0xff]
        %v4075 = vld [vmem:[%s4071 + $0x18] sm:$0xff]
        %v4076 = vld [vmem:[%s4071 + $0x20] sm:$0xff]
        %v4077 = vld [vmem:[%s4071 + $0x28] sm:$0xff]
        %v4078 = vld [vmem:[%s4071 + $0x30] sm:$0xff]
        %v4079 = vld [vmem:[%s4071 + $0x38] sm:$0xff]
        %v4081 = vsel %vm3767, %v4070, 0
        %4083 = vmatpush.msra.mxu0 0.0
        %4084 = vmatpush.msra.mxu0 0.0
        %4085 = vmatpush.msra.mxu0 0.0
        %4086 = vmatpush.msra.mxu0 0.0
        %4087 = vmatpush.msra.mxu0 0.0
        %4088 = vmatpush.msra.mxu0 0.0
        %4089 = vmatpush.msra.mxu0 0.0
        %4090 = vmatpush.msra.mxu0 0.0
        %4091 = vmatpush.msra.mxu0 %v4079
        %4092 = vmatpush.msra.mxu0 %v4078
        %4093 = vmatpush.msra.mxu0 %v4077
        %4094 = vmatpush.msra.mxu0 %v4076
        %4095 = vmatpush.msra.mxu0 %v4075
        %4096 = vmatpush.msra.mxu0 %v4074
        %4097 = vmatpush.msra.mxu0 %v4073
        %4098 = vmatpush.msra.mxu0 %v4072
        %4099 = vmatmul.f32.gmra.mxu0 %v4081
        %v4100 = vpop.f32.mrf.mxu0
        %v4101 = vadd.f32 0.0, %v4100
        %4102 = vdwg.mxu0
        %v4103 = vadd.f32 %v4062, %v4101
        %s4104 = scalar_lea.vmem [#allocation4], 32
        %v4105 = vld [vmem:[%s4104] sm:$0x1]
        %v4106 = vld [vmem:[%s4104 + $0x1] sm:$0x1]
        %v4107 = vmax.f32 %v4105, %v4106
        %s4108 = scalar_lea.vmem [#allocation4], 40
        %v4109 = vld [vmem:[%s4108] sm:$0x1]
        %v4110 = vld [vmem:[%s4108 + $0x1] sm:$0x1]
        %v4111 = vmax.f32 %v4109, %v4110
        %v4112 = vmax.f32 %v4107, %v4111
        %v4113 = vadd.f32 %v4112, 0.0
        %s4114 = scalar_lea.vmem %s5, 512
        %v4115 = vld [vmem:[%s4114] sm:$0xff]
        %v4116 = vld [vmem:[%s4114 + $0x8] sm:$0xff]
        %v4117 = vld [vmem:[%s4114 + $0x10] sm:$0xff]
        %v4118 = vld [vmem:[%s4114 + $0x18] sm:$0xff]
        %v4119 = vld [vmem:[%s4114 + $0x20] sm:$0xff]
        %v4120 = vld [vmem:[%s4114 + $0x28] sm:$0xff]
        %v4121 = vld [vmem:[%s4114 + $0x30] sm:$0xff]
        %v4122 = vld [vmem:[%s4114 + $0x38] sm:$0xff]
        %v4124 = vsel %vm3767, %v4113, 0
        %4126 = vmatpush.msra.mxu0 0.0
        %4127 = vmatpush.msra.mxu0 0.0
        %4128 = vmatpush.msra.mxu0 0.0
        %4129 = vmatpush.msra.mxu0 0.0
        %4130 = vmatpush.msra.mxu0 0.0
        %4131 = vmatpush.msra.mxu0 0.0
        %4132 = vmatpush.msra.mxu0 0.0
        %4133 = vmatpush.msra.mxu0 0.0
        %4134 = vmatpush.msra.mxu0 %v4122
        %4135 = vmatpush.msra.mxu0 %v4121
        %4136 = vmatpush.msra.mxu0 %v4120
        %4137 = vmatpush.msra.mxu0 %v4119
        %4138 = vmatpush.msra.mxu0 %v4118
        %4139 = vmatpush.msra.mxu0 %v4117
        %4140 = vmatpush.msra.mxu0 %v4116
        %4141 = vmatpush.msra.mxu0 %v4115
        %4142 = vmatmul.f32.gmra.mxu0 %v4124
        %v4143 = vpop.f32.mrf.mxu0
        %v4144 = vadd.f32 0.0, %v4143
        %4145 = vdwg.mxu0
        %v4146 = vadd.f32 %v4103, %v4144
        %v4147 = vld [vmem:[%s4104 + $0x2] sm:$0x1]
        %v4148 = vld [vmem:[%s4104 + $0x3] sm:$0x1]
        %v4149 = vmax.f32 %v4147, %v4148
        %v4150 = vld [vmem:[%s4108 + $0x2] sm:$0x1]
        %v4151 = vld [vmem:[%s4108 + $0x3] sm:$0x1]
        %v4152 = vmax.f32 %v4150, %v4151
        %v4153 = vmax.f32 %v4149, %v4152
        %v4154 = vadd.f32 %v4153, 0.0
        %s4155 = scalar_lea.vmem %s5, 576
        %v4156 = vld [vmem:[%s4155] sm:$0xff]
        %v4157 = vld [vmem:[%s4155 + $0x8] sm:$0xff]
        %v4158 = vld [vmem:[%s4155 + $0x10] sm:$0xff]
        %v4159 = vld [vmem:[%s4155 + $0x18] sm:$0xff]
        %v4160 = vld [vmem:[%s4155 + $0x20] sm:$0xff]
        %v4161 = vld [vmem:[%s4155 + $0x28] sm:$0xff]
        %v4162 = vld [vmem:[%s4155 + $0x30] sm:$0xff]
        %v4163 = vld [vmem:[%s4155 + $0x38] sm:$0xff]
        %v4165 = vsel %vm3767, %v4154, 0
        %4167 = vmatpush.msra.mxu0 0.0
        %4168 = vmatpush.msra.mxu0 0.0
        %4169 = vmatpush.msra.mxu0 0.0
        %4170 = vmatpush.msra.mxu0 0.0
        %4171 = vmatpush.msra.mxu0 0.0
        %4172 = vmatpush.msra.mxu0 0.0
        %4173 = vmatpush.msra.mxu0 0.0
        %4174 = vmatpush.msra.mxu0 0.0
        %4175 = vmatpush.msra.mxu0 %v4163
        %4176 = vmatpush.msra.mxu0 %v4162
        %4177 = vmatpush.msra.mxu0 %v4161
        %4178 = vmatpush.msra.mxu0 %v4160
        %4179 = vmatpush.msra.mxu0 %v4159
        %4180 = vmatpush.msra.mxu0 %v4158
        %4181 = vmatpush.msra.mxu0 %v4157
        %4182 = vmatpush.msra.mxu0 %v4156
        %4183 = vmatmul.f32.gmra.mxu0 %v4165
        %v4184 = vpop.f32.mrf.mxu0
        %v4185 = vadd.f32 0.0, %v4184
        %4186 = vdwg.mxu0
        %v4187 = vadd.f32 %v4146, %v4185
        %v4188 = vld [vmem:[%s4104 + $0x4] sm:$0x1]
        %v4189 = vld [vmem:[%s4104 + $0x5] sm:$0x1]
        %v4190 = vmax.f32 %v4188, %v4189
        %v4191 = vld [vmem:[%s4108 + $0x4] sm:$0x1]
        %v4192 = vld [vmem:[%s4108 + $0x5] sm:$0x1]
        %v4193 = vmax.f32 %v4191, %v4192
        %v4194 = vmax.f32 %v4190, %v4193
        %v4195 = vadd.f32 %v4194, 0.0
        %s4196 = scalar_lea.vmem %s5, 640
        %v4197 = vld [vmem:[%s4196] sm:$0xff]
        %v4198 = vld [vmem:[%s4196 + $0x8] sm:$0xff]
        %v4199 = vld [vmem:[%s4196 + $0x10] sm:$0xff]
        %v4200 = vld [vmem:[%s4196 + $0x18] sm:$0xff]
        %v4201 = vld [vmem:[%s4196 + $0x20] sm:$0xff]
        %v4202 = vld [vmem:[%s4196 + $0x28] sm:$0xff]
        %v4203 = vld [vmem:[%s4196 + $0x30] sm:$0xff]
        %v4204 = vld [vmem:[%s4196 + $0x38] sm:$0xff]
        %v4206 = vsel %vm3767, %v4195, 0
        %4208 = vmatpush.msra.mxu0 0.0
        %4209 = vmatpush.msra.mxu0 0.0
        %4210 = vmatpush.msra.mxu0 0.0
        %4211 = vmatpush.msra.mxu0 0.0
        %4212 = vmatpush.msra.mxu0 0.0
        %4213 = vmatpush.msra.mxu0 0.0
        %4214 = vmatpush.msra.mxu0 0.0
        %4215 = vmatpush.msra.mxu0 0.0
        %4216 = vmatpush.msra.mxu0 %v4204
        %4217 = vmatpush.msra.mxu0 %v4203
        %4218 = vmatpush.msra.mxu0 %v4202
        %4219 = vmatpush.msra.mxu0 %v4201
        %4220 = vmatpush.msra.mxu0 %v4200
        %4221 = vmatpush.msra.mxu0 %v4199
        %4222 = vmatpush.msra.mxu0 %v4198
        %4223 = vmatpush.msra.mxu0 %v4197
        %4224 = vmatmul.f32.gmra.mxu0 %v4206
        %v4225 = vpop.f32.mrf.mxu0
        %v4226 = vadd.f32 0.0, %v4225
        %4227 = vdwg.mxu0
        %v4228 = vadd.f32 %v4187, %v4226
        %v4229 = vld [vmem:[%s4104 + $0x6] sm:$0x1]
        %v4230 = vld [vmem:[%s4104 + $0x7] sm:$0x1]
        %v4231 = vmax.f32 %v4229, %v4230
        %v4232 = vld [vmem:[%s4108 + $0x6] sm:$0x1]
        %v4233 = vld [vmem:[%s4108 + $0x7] sm:$0x1]
        %v4234 = vmax.f32 %v4232, %v4233
        %v4235 = vmax.f32 %v4231, %v4234
        %v4236 = vadd.f32 %v4235, 0.0
        %s4237 = scalar_lea.vmem %s5, 704
        %v4238 = vld [vmem:[%s4237] sm:$0xff]
        %v4239 = vld [vmem:[%s4237 + $0x8] sm:$0xff]
        %v4240 = vld [vmem:[%s4237 + $0x10] sm:$0xff]
        %v4241 = vld [vmem:[%s4237 + $0x18] sm:$0xff]
        %v4242 = vld [vmem:[%s4237 + $0x20] sm:$0xff]
        %v4243 = vld [vmem:[%s4237 + $0x28] sm:$0xff]
        %v4244 = vld [vmem:[%s4237 + $0x30] sm:$0xff]
        %v4245 = vld [vmem:[%s4237 + $0x38] sm:$0xff]
        %v4247 = vsel %vm3767, %v4236, 0
        %4249 = vmatpush.msra.mxu0 0.0
        %4250 = vmatpush.msra.mxu0 0.0
        %4251 = vmatpush.msra.mxu0 0.0
        %4252 = vmatpush.msra.mxu0 0.0
        %4253 = vmatpush.msra.mxu0 0.0
        %4254 = vmatpush.msra.mxu0 0.0
        %4255 = vmatpush.msra.mxu0 0.0
        %4256 = vmatpush.msra.mxu0 0.0
        %4257 = vmatpush.msra.mxu0 %v4245
        %4258 = vmatpush.msra.mxu0 %v4244
        %4259 = vmatpush.msra.mxu0 %v4243
        %4260 = vmatpush.msra.mxu0 %v4242
        %4261 = vmatpush.msra.mxu0 %v4241
        %4262 = vmatpush.msra.mxu0 %v4240
        %4263 = vmatpush.msra.mxu0 %v4239
        %4264 = vmatpush.msra.mxu0 %v4238
        %4265 = vmatmul.f32.gmra.mxu0 %v4247
        %v4266 = vpop.f32.mrf.mxu0
        %v4267 = vadd.f32 0.0, %v4266
        %4268 = vdwg.mxu0
        %v4269 = vadd.f32 %v4228, %v4267
        %s4270 = scalar_lea.vmem [#allocation4], 48
        %v4271 = vld [vmem:[%s4270] sm:$0x1]
        %v4272 = vld [vmem:[%s4270 + $0x1] sm:$0x1]
        %v4273 = vmax.f32 %v4271, %v4272
        %s4274 = scalar_lea.vmem [#allocation4], 56
        %v4275 = vld [vmem:[%s4274] sm:$0x1]
        %v4276 = vld [vmem:[%s4274 + $0x1] sm:$0x1]
        %v4277 = vmax.f32 %v4275, %v4276
        %v4278 = vmax.f32 %v4273, %v4277
        %v4279 = vadd.f32 %v4278, 0.0
        %s4280 = scalar_lea.vmem %s5, 768
        %v4281 = vld [vmem:[%s4280] sm:$0xff]
        %v4282 = vld [vmem:[%s4280 + $0x8] sm:$0xff]
        %v4283 = vld [vmem:[%s4280 + $0x10] sm:$0xff]
        %v4284 = vld [vmem:[%s4280 + $0x18] sm:$0xff]
        %v4285 = vld [vmem:[%s4280 + $0x20] sm:$0xff]
        %v4286 = vld [vmem:[%s4280 + $0x28] sm:$0xff]
        %v4287 = vld [vmem:[%s4280 + $0x30] sm:$0xff]
        %v4288 = vld [vmem:[%s4280 + $0x38] sm:$0xff]
        %v4290 = vsel %vm3767, %v4279, 0
        %4292 = vmatpush.msra.mxu0 0.0
        %4293 = vmatpush.msra.mxu0 0.0
        %4294 = vmatpush.msra.mxu0 0.0
        %4295 = vmatpush.msra.mxu0 0.0
        %4296 = vmatpush.msra.mxu0 0.0
        %4297 = vmatpush.msra.mxu0 0.0
        %4298 = vmatpush.msra.mxu0 0.0
        %4299 = vmatpush.msra.mxu0 0.0
        %4300 = vmatpush.msra.mxu0 %v4288
        %4301 = vmatpush.msra.mxu0 %v4287
        %4302 = vmatpush.msra.mxu0 %v4286
        %4303 = vmatpush.msra.mxu0 %v4285
        %4304 = vmatpush.msra.mxu0 %v4284
        %4305 = vmatpush.msra.mxu0 %v4283
        %4306 = vmatpush.msra.mxu0 %v4282
        %4307 = vmatpush.msra.mxu0 %v4281
        %4308 = vmatmul.f32.gmra.mxu0 %v4290
        %v4309 = vpop.f32.mrf.mxu0
        %v4310 = vadd.f32 0.0, %v4309
        %4311 = vdwg.mxu0
        %v4312 = vadd.f32 %v4269, %v4310
        %v4313 = vld [vmem:[%s4270 + $0x2] sm:$0x1]
        %v4314 = vld [vmem:[%s4270 + $0x3] sm:$0x1]
        %v4315 = vmax.f32 %v4313, %v4314
        %v4316 = vld [vmem:[%s4274 + $0x2] sm:$0x1]
        %v4317 = vld [vmem:[%s4274 + $0x3] sm:$0x1]
        %v4318 = vmax.f32 %v4316, %v4317
        %v4319 = vmax.f32 %v4315, %v4318
        %v4320 = vadd.f32 %v4319, 0.0
        %s4321 = scalar_lea.vmem %s5, 832
        %v4322 = vld [vmem:[%s4321] sm:$0xff]
        %v4323 = vld [vmem:[%s4321 + $0x8] sm:$0xff]
        %v4324 = vld [vmem:[%s4321 + $0x10] sm:$0xff]
        %v4325 = vld [vmem:[%s4321 + $0x18] sm:$0xff]
        %v4326 = vld [vmem:[%s4321 + $0x20] sm:$0xff]
        %v4327 = vld [vmem:[%s4321 + $0x28] sm:$0xff]
        %v4328 = vld [vmem:[%s4321 + $0x30] sm:$0xff]
        %v4329 = vld [vmem:[%s4321 + $0x38] sm:$0xff]
        %v4331 = vsel %vm3767, %v4320, 0
        %4333 = vmatpush.msra.mxu0 0.0
        %4334 = vmatpush.msra.mxu0 0.0
        %4335 = vmatpush.msra.mxu0 0.0
        %4336 = vmatpush.msra.mxu0 0.0
        %4337 = vmatpush.msra.mxu0 0.0
        %4338 = vmatpush.msra.mxu0 0.0
        %4339 = vmatpush.msra.mxu0 0.0
        %4340 = vmatpush.msra.mxu0 0.0
        %4341 = vmatpush.msra.mxu0 %v4329
        %4342 = vmatpush.msra.mxu0 %v4328
        %4343 = vmatpush.msra.mxu0 %v4327
        %4344 = vmatpush.msra.mxu0 %v4326
        %4345 = vmatpush.msra.mxu0 %v4325
        %4346 = vmatpush.msra.mxu0 %v4324
        %4347 = vmatpush.msra.mxu0 %v4323
        %4348 = vmatpush.msra.mxu0 %v4322
        %4349 = vmatmul.f32.gmra.mxu0 %v4331
        %v4350 = vpop.f32.mrf.mxu0
        %v4351 = vadd.f32 0.0, %v4350
        %4352 = vdwg.mxu0
        %v4353 = vadd.f32 %v4312, %v4351
        %v4354 = vld [vmem:[%s4270 + $0x4] sm:$0x1]
        %v4355 = vld [vmem:[%s4270 + $0x5] sm:$0x1]
        %v4356 = vmax.f32 %v4354, %v4355
        %v4357 = vld [vmem:[%s4274 + $0x4] sm:$0x1]
        %v4358 = vld [vmem:[%s4274 + $0x5] sm:$0x1]
        %v4359 = vmax.f32 %v4357, %v4358
        %v4360 = vmax.f32 %v4356, %v4359
        %v4361 = vadd.f32 %v4360, 0.0
        %s4362 = scalar_lea.vmem %s5, 896
        %v4363 = vld [vmem:[%s4362] sm:$0xff]
        %v4364 = vld [vmem:[%s4362 + $0x8] sm:$0xff]
        %v4365 = vld [vmem:[%s4362 + $0x10] sm:$0xff]
        %v4366 = vld [vmem:[%s4362 + $0x18] sm:$0xff]
        %v4367 = vld [vmem:[%s4362 + $0x20] sm:$0xff]
        %v4368 = vld [vmem:[%s4362 + $0x28] sm:$0xff]
        %v4369 = vld [vmem:[%s4362 + $0x30] sm:$0xff]
        %v4370 = vld [vmem:[%s4362 + $0x38] sm:$0xff]
        %v4372 = vsel %vm3767, %v4361, 0
        %4374 = vmatpush.msra.mxu0 0.0
        %4375 = vmatpush.msra.mxu0 0.0
        %4376 = vmatpush.msra.mxu0 0.0
        %4377 = vmatpush.msra.mxu0 0.0
        %4378 = vmatpush.msra.mxu0 0.0
        %4379 = vmatpush.msra.mxu0 0.0
        %4380 = vmatpush.msra.mxu0 0.0
        %4381 = vmatpush.msra.mxu0 0.0
        %4382 = vmatpush.msra.mxu0 %v4370
        %4383 = vmatpush.msra.mxu0 %v4369
        %4384 = vmatpush.msra.mxu0 %v4368
        %4385 = vmatpush.msra.mxu0 %v4367
        %4386 = vmatpush.msra.mxu0 %v4366
        %4387 = vmatpush.msra.mxu0 %v4365
        %4388 = vmatpush.msra.mxu0 %v4364
        %4389 = vmatpush.msra.mxu0 %v4363
        %4390 = vmatmul.f32.gmra.mxu0 %v4372
        %v4391 = vpop.f32.mrf.mxu0
        %v4392 = vadd.f32 0.0, %v4391
        %4393 = vdwg.mxu0
        %v4394 = vadd.f32 %v4353, %v4392
        %v4395 = vld [vmem:[%s4270 + $0x6] sm:$0x1]
        %v4396 = vld [vmem:[%s4270 + $0x7] sm:$0x1]
        %v4397 = vmax.f32 %v4395, %v4396
        %v4398 = vld [vmem:[%s4274 + $0x6] sm:$0x1]
        %v4399 = vld [vmem:[%s4274 + $0x7] sm:$0x1]
        %v4400 = vmax.f32 %v4398, %v4399
        %v4401 = vmax.f32 %v4397, %v4400
        %v4402 = vadd.f32 %v4401, 0.0
        %s4403 = scalar_lea.vmem %s5, 960
        %v4404 = vld [vmem:[%s4403] sm:$0xff]
        %v4405 = vld [vmem:[%s4403 + $0x8] sm:$0xff]
        %v4406 = vld [vmem:[%s4403 + $0x10] sm:$0xff]
        %v4407 = vld [vmem:[%s4403 + $0x18] sm:$0xff]
        %v4408 = vld [vmem:[%s4403 + $0x20] sm:$0xff]
        %v4409 = vld [vmem:[%s4403 + $0x28] sm:$0xff]
        %v4410 = vld [vmem:[%s4403 + $0x30] sm:$0xff]
        %v4411 = vld [vmem:[%s4403 + $0x38] sm:$0xff]
        %v4413 = vsel %vm3767, %v4402, 0
        %4415 = vmatpush.msra.mxu0 0.0
        %4416 = vmatpush.msra.mxu0 0.0
        %4417 = vmatpush.msra.mxu0 0.0
        %4418 = vmatpush.msra.mxu0 0.0
        %4419 = vmatpush.msra.mxu0 0.0
        %4420 = vmatpush.msra.mxu0 0.0
        %4421 = vmatpush.msra.mxu0 0.0
        %4422 = vmatpush.msra.mxu0 0.0
        %4423 = vmatpush.msra.mxu0 %v4411
        %4424 = vmatpush.msra.mxu0 %v4410
        %4425 = vmatpush.msra.mxu0 %v4409
        %4426 = vmatpush.msra.mxu0 %v4408
        %4427 = vmatpush.msra.mxu0 %v4407
        %4428 = vmatpush.msra.mxu0 %v4406
        %4429 = vmatpush.msra.mxu0 %v4405
        %4430 = vmatpush.msra.mxu0 %v4404
        %4431 = vmatmul.f32.gmra.mxu0 %v4413
        %v4432 = vpop.f32.mrf.mxu0
        %v4433 = vadd.f32 0.0, %v4432
        %4434 = vdwg.mxu0
        %v4435 = vadd.f32 %v4394, %v4433
        %v4436 = vld [vmem:[%s6] sm:$0x1]
        %v4437 = vadd.f32 %v4435, %v4436
        %v4438 = vmax.f32 %v4437, 0.0
        %v4439 = vld [vmem:[%s7] sm:$0xff]
        %v4440 = vld [vmem:[%s7 + $0x8] sm:$0xff]
        %v4441 = vld [vmem:[%s7 + $0x10] sm:$0xff]
        %v4442 = vld [vmem:[%s7 + $0x18] sm:$0xff]
        %v4443 = vld [vmem:[%s7 + $0x20] sm:$0xff]
        %v4444 = vld [vmem:[%s7 + $0x28] sm:$0xff]
        %v4445 = vld [vmem:[%s7 + $0x30] sm:$0xff]
        %v4446 = vld [vmem:[%s7 + $0x38] sm:$0xff]
        %v4447 = vld [vmem:[%s7 + $0x40] sm:$0xff]
        %v4448 = vld [vmem:[%s7 + $0x48] sm:$0xff]
        %v4449 = vld [vmem:[%s7 + $0x50] sm:$0xff]
        %v4450 = vld [vmem:[%s7 + $0x58] sm:$0xff]
        %v4451 = vld [vmem:[%s7 + $0x60] sm:$0xff]
        %v4452 = vld [vmem:[%s7 + $0x68] sm:$0xff]
        %v4453 = vld [vmem:[%s7 + $0x70] sm:$0xff]
        %v4454 = vld [vmem:[%s7 + $0x78] sm:$0xff]
        %v4455 = vld [vmem:[%s8] sm:$0x1]
        %4456 = vmatpush.msra.mxu0 %v4454
        %4457 = vmatpush.msra.mxu0 %v4453
        %4458 = vmatpush.msra.mxu0 %v4452
        %4459 = vmatpush.msra.mxu0 %v4451
        %4460 = vmatpush.msra.mxu0 %v4450
        %4461 = vmatpush.msra.mxu0 %v4449
        %4462 = vmatpush.msra.mxu0 %v4448
        %4463 = vmatpush.msra.mxu0 %v4447
        %4464 = vmatpush.msra.mxu0 %v4446
        %4465 = vmatpush.msra.mxu0 %v4445
        %4466 = vmatpush.msra.mxu0 %v4444
        %4467 = vmatpush.msra.mxu0 %v4443
        %4468 = vmatpush.msra.mxu0 %v4442
        %4469 = vmatpush.msra.mxu0 %v4441
        %4470 = vmatpush.msra.mxu0 %v4440
        %4471 = vmatpush.msra.mxu0 %v4439
        %4472 = vmatmul.f32.gmra.mxu0 %v4438
        %v4473 = vpop.f32.mrf.mxu0
        %v4474 = vadd.f32 %v4455, %v4473
        %4475 = vdwg.mxu0
        %4476 = vst [vmem:[%s324] sm:$0x1] %v4474
        %s4477 = sand.u32 %s225, 1
        %s4478 = scalar_lea.sflag [#allocation6], %s4477
        %s4479 = sand.u32 %s225, 1
        %s4480 = scalar_lea.vmem [#allocation5], %s4479
        // Predicated region
        $region57: #{simple_net_forward.1} parent=55 // pred_check
          %p4481 = pneg %p235
        $region58: #{simple_net_forward.1} parent=55 // pred_check_branch
          %4483 = sbr.rel (%p4481) target = $region60
        $region59: #{simple_net_forward.1} parent=55 // pred_region
          %4485 = vsyncadd %s4478, 0
          %s4486 = scalar_lea.hbm %s9, %s23
          %s4488 = sshll.u32 %s4480, 4
          %s4489 = int_to_ptr.vmem [resolvable:$true] %s4488
          %s4490 = sshll.u32 %s4486, 4
          %s4491 = int_to_ptr.hbm [resolvable:$true] %s4490
          %4493 = dma.vmem_to_hbm [thread:$0]  %s4489, 16, %s4491, %s4478
        $region60: #{simple_net_forward.1} parent=55 // pred_fallthru
          _
      $region56: #{simple_net_forward.1} parent=5 // pred_fallthru
        _
      %p4494 = scmp.le.s32.totalorder 2, %s18
      // Predicated region
      $region61: #{simple_net_forward.1} parent=5 // pred_check
        %p4495 = pneg %p4494
      $region62: #{simple_net_forward.1} parent=5 // pred_check_branch
        %4497 = sbr.rel (%p4495) target = $region64
      $region63: #{simple_net_forward.1} parent=5 // pred_region
        %s4498 = ssub.s32 %s18, 2
        // Predicated region
        $region65: #{simple_net_forward.1} parent=63 // pred_check
          %p4499 = pneg %p241
        $region66: #{simple_net_forward.1} parent=63 // pred_check_branch
          %4501 = sbr.rel (%p4499) target = $region68
        $region67: #{simple_net_forward.1} parent=63 // pred_region
          %s4502 = sand.u32 %s226, 1
          %s4503 = scalar_lea.sflag [#allocation6], %s4502
          %s4504 = sand.u32 %s226, 1
          %s4505 = scalar_lea.vmem [#allocation5], %s4504
          %4507 = dma.done %s4503, 16
        $region68: #{simple_net_forward.1} parent=63 // pred_fallthru
          _
      $region64: #{simple_net_forward.1} parent=5 // pred_fallthru
        _
    $region6: #{simple_net_forward.1} parent=1 // loop_footer
      %s22 = sadd.s32 1, %s18
    $region7: #{simple_net_forward.1} parent=1 // loop_footer_branch
      %17 = sbr.rel target = $region3
    $region8: #{simple_net_forward.1} parent=1 // loop_exit
      _
    %4508 = vsyncpa [#allocation6], 1
    %s4509 = scalar_lea.sflag [#allocation6], 1
    %4510 = vsyncpa %s4509, 1

</llo_original>
